<compile_context>
chip_gen: v7x
topology: tpu7x:2x2x1
jax: 0.10.0
libtpu: 0.0.40
codegen_flags: <defaults>
</compile_context>

<pallas_src>
import jax
import jax.numpy as jnp
from jax.experimental import pallas as pl
from jax.experimental.pallas import tpu as pltpu


def _round_up(x, m):
    return (x + m - 1) // m * m


# ----------------------------------------------------------------------------
# Parameter helpers: weight_norm reparameterization + weight packing.
# ----------------------------------------------------------------------------
def weight_norm_effective_oihw(v, g):
    """weight_norm(dim=0): w = g * v / ||v|| (norm per output channel). OIHW.
    (No epsilon, matching PyTorch weight_norm semantics.)"""
    norm = jnp.sqrt(jnp.sum(v * v, axis=(1, 2, 3), keepdims=True))
    return g.reshape(-1, 1, 1, 1) * v / norm


def pack_weight_for_slab(w_oihw, source_channels, source_channels_padded):
    """OIHW conv weight -> (Cout, Kpad) matrix.  K rows are ordered
    [source][tap (ky*3+kx)][channel, zero-padded to a multiple of 8], matching
    the in-kernel (K, HW) im2col slab row layout."""
    cout = w_oihw.shape[0]
    pieces = []
    off = 0
    for cs, csp in zip(source_channels, source_channels_padded):
        p = w_oihw[:, off:off + cs, :, :]                    # (Cout, cs, 3, 3)
        if csp != cs:
            p = jnp.pad(p, ((0, 0), (0, csp - cs), (0, 0), (0, 0)))
        p = jnp.transpose(p, (2, 3, 1, 0))                   # (3, 3, csp, Cout)
        pieces.append(p.reshape(9 * csp, cout))              # row=(ky*3+kx)*csp+c
        off += cs
    return jnp.transpose(jnp.concatenate(pieces, axis=0))    # (Cout, Kpad)


def make_tap_masks(H, W, dtype=jnp.float32):
    """(9, H*W) 0/1 masks, one per 3x3 tap: zero where the shifted source
    position falls outside the image ('same' zero padding)."""
    hh, ww = jnp.meshgrid(jnp.arange(H), jnp.arange(W), indexing="ij")
    hh = hh.reshape(-1)
    ww = ww.reshape(-1)
    rows = []
    for ky in range(3):
        for kx in range(3):
            dy, dx = ky - 1, kx - 1
            valid = ((hh + dy >= 0) & (hh + dy < H) &
                     (ww + dx >= 0) & (ww + dx < W))
            rows.append(valid)
    return jnp.stack(rows, axis=0).astype(dtype)              # (9, HW)


# ----------------------------------------------------------------------------
# Fused kernel.
# ----------------------------------------------------------------------------
def _make_fused_rdb_kernel(H, W, nc, gc):
    HW = H * W
    srcs = (nc, gc, gc, gc, gc)                     # dense-block input sources
    srcs_pad = tuple(_round_up(c, 8) for c in srcs)  # sublane-aligned groups
    bases = [9 * sum(srcs_pad[:i]) for i in range(5)]
    ks = [9 * sum(srcs_pad[:i + 1]) for i in range(5)]   # K per conv (mult of 8)

    def kernel(x_ref, masks_ref,
               w1, w2, w3, w4, w5, b1, b2, b3, b4, b5,
               out_ref, slab):
        masks = masks_ref[...]                      # (9, HW) f32, loaded once

        def put_taps(a_f32, cs, cs_pad, base):
            # Append the 9 shifted/masked views of one activation into the
            # bf16 (K, HW) im2col slab.  The kx/ky shift is a lane roll of the
            # flattened HW axis (XLU); the boundary mask reproduces zero
            # padding exactly.  One f32->bf16 cast per tap at the store.
            if cs_pad != cs:
                a_f32 = jnp.concatenate(
                    [a_f32, jnp.zeros((cs_pad - cs, HW), jnp.float32)], axis=0)
            for ky in range(3):
                for kx in range(3):
                    dy, dx = ky - 1, kx - 1
                    shift = dy * W + dx
                    tap = ky * 3 + kx
                    if shift == 0:
                        v = a_f32
                    else:
                        v = pltpu.roll(a_f32, (-shift) % HW, 1)
                        v = v * masks[tap:tap + 1, :]
                    r0 = base + tap * cs_pad
                    slab[r0:r0 + cs_pad, :] = v.astype(jnp.bfloat16)

        def conv(k, w_ref, b_ref, leaky):
            # One bf16 MXU matmul per conv: (Cout, k) @ (k, HW), f32 accumulate.
            acc = jnp.dot(w_ref[...], slab[:k, :],
                          preferred_element_type=jnp.float32)
            acc = acc + b_ref[...]                  # bias (Cout, 1), f32 VPU
            if leaky:
                acc = jnp.maximum(acc, 0.2 * acc)   # LeakyReLU(0.2)
            return acc                              # (Cout, HW) f32

        x = x_ref[0]                                # (nc, HW) f32
        put_taps(x, nc, srcs_pad[0], bases[0])

        a1 = conv(ks[0], w1, b1, True)
        put_taps(a1, gc, srcs_pad[1], bases[1])

        a2 = conv(ks[1], w2, b2, True)
        put_taps(a2, gc, srcs_pad[2], bases[2])

        a3 = conv(ks[2], w3, b3, True)
        put_taps(a3, gc, srcs_pad[3], bases[3])

        a4 = conv(ks[3], w4, b4, True)
        put_taps(a4, gc, srcs_pad[4], bases[4])

        a5 = conv(ks[4], w5, b5, False)             # 0.2 already folded in
        out_ref[0] = (a5 + x).astype(out_ref.dtype)

    return kernel, ks, srcs, srcs_pad


@jax.jit
def residual_dense_block(x_nchw, params):
    """Forward pass matching the PyTorch ResidualDenseBlock (NCHW in/out)."""
    N, nc, H, W = x_nchw.shape
    gc = params[0]["v"].shape[0]
    HW = H * W

    kernel, ks, srcs, srcs_pad = _make_fused_rdb_kernel(H, W, nc, gc)

    # Resolve weight_norm, fold the 0.2 residual scale into conv5, and pack
    # each conv's weight as (Cout, Kpad) to match the slab row layout.
    w_mats, biases = [], []
    for j, p in enumerate(params):
        w_oihw = weight_norm_effective_oihw(p["v"], p["g"])
        b = p["b"].astype(jnp.float32)
        if j == 4:                                   # x5.mul(0.2) folded here
            w_oihw = w_oihw * 0.2
            b = b * 0.2
        w_mats.append(
            pack_weight_for_slab(w_oihw, srcs[:j + 1], srcs_pad[:j + 1])
            .astype(jnp.bfloat16))
        biases.append(b.reshape(-1, 1))

    masks = make_tap_masks(H, W, jnp.float32)        # (9, HW)

    # Free metadata reshape (data stays NCHW-contiguous); HW becomes the lane
    # axis inside the kernel.
    x_flat = x_nchw.reshape(N, nc, HW)

    in_specs = [pl.BlockSpec((1, nc, HW), lambda n: (n, 0, 0)),
                pl.BlockSpec((9, HW), lambda n: (0, 0))]
    in_specs += [pl.BlockSpec(w.shape, lambda n: (0, 0)) for w in w_mats]
    in_specs += [pl.BlockSpec(b.shape, lambda n: (0, 0)) for b in biases]

    out_flat = pl.pallas_call(
        kernel,
        out_shape=jax.ShapeDtypeStruct((N, nc, HW), jnp.float32),
        grid=(N,),
        in_specs=in_specs,
        out_specs=pl.BlockSpec((1, nc, HW), lambda n: (n, 0, 0)),
        scratch_shapes=[
            pltpu.VMEM((ks[-1], HW), jnp.bfloat16),   # bf16 im2col slab (K, HW)
        ],
        compiler_params=pltpu.CompilerParams(
            dimension_semantics=("parallel",),
            vmem_limit_bytes=32 * 1024 * 1024),
    )(x_flat, masks, *w_mats, *biases)

    return out_flat.reshape(N, nc, H, W)


# ----------------------------------------------------------------------------
# Deterministic init + pure-XLA f32 reference (mirrors the PyTorch module).
# ----------------------------------------------------------------------------
def init_rdb_params(key, nc, gc):
    layer_io = [(nc, gc), (nc + gc, gc), (nc + 2 * gc, gc),
                (nc + 3 * gc, gc), (nc + 4 * gc, nc)]
    params = []
    for cin, cout in layer_io:
        kv, kg, kb, key = jax.random.split(key, 4)
        v = 0.1 * jax.random.normal(kv, (cout, cin, 3, 3), jnp.float32)
        g = 1.0 + 0.1 * jax.random.normal(kg, (cout,), jnp.float32)
        b = 0.05 * jax.random.normal(kb, (cout,), jnp.float32)
        params.append({"v": v, "g": g, "b": b})
    return params


def _reference_conv(x_nhwc, w_oihw, b, leaky):
    w_hwio = jnp.transpose(w_oihw, (2, 3, 1, 0))
    y = jax.lax.conv_general_dilated(
        x_nhwc, w_hwio, window_strides=(1, 1), padding="SAME",
        dimension_numbers=("NHWC", "HWIO", "NHWC"))
    y = y + b.reshape(1, 1, 1, -1)
    if leaky:
        y = jnp.where(y >= 0, y, 0.2 * y)
    return y


def rdb_reference(x_nchw, params):
    x = jnp.transpose(x_nchw, (0, 2, 3, 1))
    ws = [weight_norm_effective_oihw(p["v"], p["g"]) for p in params]
    bs = [p["b"] for p in params]
    x1 = _reference_conv(x, ws[0], bs[0], True)
    x2 = _reference_conv(jnp.concatenate([x, x1], -1), ws[1], bs[1], True)
    x3 = _reference_conv(jnp.concatenate([x, x1, x2], -1), ws[2], bs[2], True)
    x4 = _reference_conv(jnp.concatenate([x, x1, x2, x3], -1), ws[3], bs[3], True)
    x5 = _reference_conv(jnp.concatenate([x, x1, x2, x3, x4], -1), ws[4], bs[4], False)
    out = x5 * 0.2 + x
    return jnp.transpose(out, (0, 3, 1, 2))


if __name__ == "__main__":
    nc, gc = 4, 32
    N, H, W = 2, 16, 16

    key = jax.random.PRNGKey(0)
    kx, kp = jax.random.split(key)
    x = jax.random.normal(kx, (N, nc, H, W), jnp.float32)   # NCHW, like PyTorch
    params = init_rdb_params(kp, nc, gc)

    y = jax.block_until_ready(residual_dense_block(x, params))
    assert y.shape == (N, nc, H, W), y.shape
    assert bool(jnp.all(jnp.isfinite(y)))

    # Loose tolerance: kernel feeds the MXU bf16 through five chained convs,
    # reference is f32 XLA convs.
    y_ref = jax.block_until_ready(rdb_reference(x, params))
    err = float(jnp.max(jnp.abs(y - y_ref)))
    assert err < 1e-1, f"max abs err vs reference: {err}"

    print("KERNEL_OK")
</pallas_src>

<mosaic_0001>
module attributes {stable_mosaic.version = 11 : i64} {
  func.func @kernel(%arg0: i32, %arg1: memref<1x4x256xf32, #tpu.memory_space<vmem>>, %arg2: memref<9x256xf32, #tpu.memory_space<vmem>>, %arg3: memref<32x72xbf16, #tpu.memory_space<vmem>>, %arg4: memref<32x360xbf16, #tpu.memory_space<vmem>>, %arg5: memref<32x648xbf16, #tpu.memory_space<vmem>>, %arg6: memref<32x936xbf16, #tpu.memory_space<vmem>>, %arg7: memref<4x1224xbf16, #tpu.memory_space<vmem>>, %arg8: memref<32x1xf32, #tpu.memory_space<vmem>>, %arg9: memref<32x1xf32, #tpu.memory_space<vmem>>, %arg10: memref<32x1xf32, #tpu.memory_space<vmem>>, %arg11: memref<32x1xf32, #tpu.memory_space<vmem>>, %arg12: memref<4x1xf32, #tpu.memory_space<vmem>>, %arg13: memref<1x4x256xf32, #tpu.memory_space<vmem>>, %arg14: memref<1224x256xbf16, #tpu.memory_space<vmem>>) attributes {dimension_semantics = [#tpu.dimension_semantics<parallel>], iteration_bounds = array<i64: 2>, scalar_prefetch = 0 : i64, scratch_operands = 1 : i64, tpu.core_type = #tpu.core_type<tc>, window_params = [{transform_indices = @transform_0, window_bounds = array<i64: 1, 4, 256>}, {pipeline_mode = #tpu.pipeline_mode<synchronous>, transform_indices = @transform_1, window_bounds = array<i64: 9, 256>}, {pipeline_mode = #tpu.pipeline_mode<synchronous>, transform_indices = @transform_2, window_bounds = array<i64: 32, 72>}, {pipeline_mode = #tpu.pipeline_mode<synchronous>, transform_indices = @transform_3, window_bounds = array<i64: 32, 360>}, {pipeline_mode = #tpu.pipeline_mode<synchronous>, transform_indices = @transform_4, window_bounds = array<i64: 32, 648>}, {pipeline_mode = #tpu.pipeline_mode<synchronous>, transform_indices = @transform_5, window_bounds = array<i64: 32, 936>}, {pipeline_mode = #tpu.pipeline_mode<synchronous>, transform_indices = @transform_6, window_bounds = array<i64: 4, 1224>}, {pipeline_mode = #tpu.pipeline_mode<synchronous>, transform_indices = @transform_7, window_bounds = array<i64: 32, 1>}, {pipeline_mode = #tpu.pipeline_mode<synchronous>, transform_indices = @transform_8, window_bounds = array<i64: 32, 1>}, {pipeline_mode = #tpu.pipeline_mode<synchronous>, transform_indices = @transform_9, window_bounds = array<i64: 32, 1>}, {pipeline_mode = #tpu.pipeline_mode<synchronous>, transform_indices = @transform_10, window_bounds = array<i64: 32, 1>}, {pipeline_mode = #tpu.pipeline_mode<synchronous>, transform_indices = @transform_11, window_bounds = array<i64: 4, 1>}, {transform_indices = @transform_12, window_bounds = array<i64: 1, 4, 256>}]} {
    %c0 = arith.constant 0 : index
    %c0_0 = arith.constant 0 : index
    %0 = vector.load %arg2[%c0, %c0_0] : memref<9x256xf32, #tpu.memory_space<vmem>>, vector<9x256xf32>
    %c0_1 = arith.constant 0 : index
    %c0_2 = arith.constant 0 : index
    %c0_3 = arith.constant 0 : index
    %1 = vector.load %arg1[%c0_1, %c0_2, %c0_3] : memref<1x4x256xf32, #tpu.memory_space<vmem>>, vector<1x4x256xf32>
    %2 = vector.shape_cast %1 : vector<1x4x256xf32> to vector<4x256xf32>
    %cst = arith.constant 0.000000e+00 : f32
    %3 = vector.broadcast %cst : f32 to vector<4x256xf32>
    %4 = tpu.concatenate %2, %3 in 0 : vector<4x256xf32>, vector<4x256xf32> -> vector<8x256xf32>
    %c17_i32 = arith.constant 17 : i32
    %5 = tpu.dynamic_rotate %4 by %c17_i32 dim 1 : vector<8x256xf32>, i32 -> vector<8x256xf32>
    %6 = vector.extract_strided_slice %0 {offsets = [0, 0], sizes = [1, 256], strides = [1, 1]} : vector<9x256xf32> to vector<1x256xf32>
    %7 = vector.broadcast %6 : vector<1x256xf32> to vector<8x256xf32>
    %8 = arith.mulf %5, %7 : vector<8x256xf32>
    %9 = arith.truncf %8 : vector<8x256xf32> to vector<8x256xbf16>
    %c0_4 = arith.constant 0 : index
    %c0_5 = arith.constant 0 : index
    %10 = vector.load %arg14[%c0_4, %c0_5] : memref<1224x256xbf16, #tpu.memory_space<vmem>>, vector<8x256xbf16>
    tpu.vector_store %arg14[%c0_4, %c0_5], %9 {strides = array<i32>} : memref<1224x256xbf16, #tpu.memory_space<vmem>>, vector<8x256xbf16>,
    %c16_i32 = arith.constant 16 : i32
    %11 = tpu.dynamic_rotate %4 by %c16_i32 dim 1 : vector<8x256xf32>, i32 -> vector<8x256xf32>
    %12 = vector.extract_strided_slice %0 {offsets = [1, 0], sizes = [1, 256], strides = [1, 1]} : vector<9x256xf32> to vector<1x256xf32>
    %13 = vector.broadcast %12 : vector<1x256xf32> to vector<8x256xf32>
    %14 = arith.mulf %11, %13 : vector<8x256xf32>
    %15 = arith.truncf %14 : vector<8x256xf32> to vector<8x256xbf16>
    %c8 = arith.constant 8 : index
    %c0_6 = arith.constant 0 : index
    %16 = vector.load %arg14[%c8, %c0_6] : memref<1224x256xbf16, #tpu.memory_space<vmem>>, vector<8x256xbf16>
    tpu.vector_store %arg14[%c8, %c0_6], %15 {strides = array<i32>} : memref<1224x256xbf16, #tpu.memory_space<vmem>>, vector<8x256xbf16>,
    %c15_i32 = arith.constant 15 : i32
    %17 = tpu.dynamic_rotate %4 by %c15_i32 dim 1 : vector<8x256xf32>, i32 -> vector<8x256xf32>
    %18 = vector.extract_strided_slice %0 {offsets = [2, 0], sizes = [1, 256], strides = [1, 1]} : vector<9x256xf32> to vector<1x256xf32>
    %19 = vector.broadcast %18 : vector<1x256xf32> to vector<8x256xf32>
    %20 = arith.mulf %17, %19 : vector<8x256xf32>
    %21 = arith.truncf %20 : vector<8x256xf32> to vector<8x256xbf16>
    %c16 = arith.constant 16 : index
    %c0_7 = arith.constant 0 : index
    %22 = vector.load %arg14[%c16, %c0_7] : memref<1224x256xbf16, #tpu.memory_space<vmem>>, vector<8x256xbf16>
    tpu.vector_store %arg14[%c16, %c0_7], %21 {strides = array<i32>} : memref<1224x256xbf16, #tpu.memory_space<vmem>>, vector<8x256xbf16>,
    %c1_i32 = arith.constant 1 : i32
    %23 = tpu.dynamic_rotate %4 by %c1_i32 dim 1 : vector<8x256xf32>, i32 -> vector<8x256xf32>
    %24 = vector.extract_strided_slice %0 {offsets = [3, 0], sizes = [1, 256], strides = [1, 1]} : vector<9x256xf32> to vector<1x256xf32>
    %25 = vector.broadcast %24 : vector<1x256xf32> to vector<8x256xf32>
    %26 = arith.mulf %23, %25 : vector<8x256xf32>
    %27 = arith.truncf %26 : vector<8x256xf32> to vector<8x256xbf16>
    %c24 = arith.constant 24 : index
    %c0_8 = arith.constant 0 : index
    %28 = vector.load %arg14[%c24, %c0_8] : memref<1224x256xbf16, #tpu.memory_space<vmem>>, vector<8x256xbf16>
    tpu.vector_store %arg14[%c24, %c0_8], %27 {strides = array<i32>} : memref<1224x256xbf16, #tpu.memory_space<vmem>>, vector<8x256xbf16>,
    %29 = arith.truncf %4 : vector<8x256xf32> to vector<8x256xbf16>
    %c32 = arith.constant 32 : index
    %c0_9 = arith.constant 0 : index
    %30 = vector.load %arg14[%c32, %c0_9] : memref<1224x256xbf16, #tpu.memory_space<vmem>>, vector<8x256xbf16>
    tpu.vector_store %arg14[%c32, %c0_9], %29 {strides = array<i32>} : memref<1224x256xbf16, #tpu.memory_space<vmem>>, vector<8x256xbf16>,
    %c255_i32 = arith.constant 255 : i32
    %31 = tpu.dynamic_rotate %4 by %c255_i32 dim 1 : vector<8x256xf32>, i32 -> vector<8x256xf32>
    %32 = vector.extract_strided_slice %0 {offsets = [5, 0], sizes = [1, 256], strides = [1, 1]} : vector<9x256xf32> to vector<1x256xf32>
    %33 = vector.broadcast %32 : vector<1x256xf32> to vector<8x256xf32>
    %34 = arith.mulf %31, %33 : vector<8x256xf32>
    %35 = arith.truncf %34 : vector<8x256xf32> to vector<8x256xbf16>
    %c40 = arith.constant 40 : index
    %c0_10 = arith.constant 0 : index
    %36 = vector.load %arg14[%c40, %c0_10] : memref<1224x256xbf16, #tpu.memory_space<vmem>>, vector<8x256xbf16>
    tpu.vector_store %arg14[%c40, %c0_10], %35 {strides = array<i32>} : memref<1224x256xbf16, #tpu.memory_space<vmem>>, vector<8x256xbf16>,
    %c241_i32 = arith.constant 241 : i32
    %37 = tpu.dynamic_rotate %4 by %c241_i32 dim 1 : vector<8x256xf32>, i32 -> vector<8x256xf32>
    %38 = vector.extract_strided_slice %0 {offsets = [6, 0], sizes = [1, 256], strides = [1, 1]} : vector<9x256xf32> to vector<1x256xf32>
    %39 = vector.broadcast %38 : vector<1x256xf32> to vector<8x256xf32>
    %40 = arith.mulf %37, %39 : vector<8x256xf32>
    %41 = arith.truncf %40 : vector<8x256xf32> to vector<8x256xbf16>
    %c48 = arith.constant 48 : index
    %c0_11 = arith.constant 0 : index
    %42 = vector.load %arg14[%c48, %c0_11] : memref<1224x256xbf16, #tpu.memory_space<vmem>>, vector<8x256xbf16>
    tpu.vector_store %arg14[%c48, %c0_11], %41 {strides = array<i32>} : memref<1224x256xbf16, #tpu.memory_space<vmem>>, vector<8x256xbf16>,
    %c240_i32 = arith.constant 240 : i32
    %43 = tpu.dynamic_rotate %4 by %c240_i32 dim 1 : vector<8x256xf32>, i32 -> vector<8x256xf32>
    %44 = vector.extract_strided_slice %0 {offsets = [7, 0], sizes = [1, 256], strides = [1, 1]} : vector<9x256xf32> to vector<1x256xf32>
    %45 = vector.broadcast %44 : vector<1x256xf32> to vector<8x256xf32>
    %46 = arith.mulf %43, %45 : vector<8x256xf32>
    %47 = arith.truncf %46 : vector<8x256xf32> to vector<8x256xbf16>
    %c56 = arith.constant 56 : index
    %c0_12 = arith.constant 0 : index
    %48 = vector.load %arg14[%c56, %c0_12] : memref<1224x256xbf16, #tpu.memory_space<vmem>>, vector<8x256xbf16>
    tpu.vector_store %arg14[%c56, %c0_12], %47 {strides = array<i32>} : memref<1224x256xbf16, #tpu.memory_space<vmem>>, vector<8x256xbf16>,
    %c239_i32 = arith.constant 239 : i32
    %49 = tpu.dynamic_rotate %4 by %c239_i32 dim 1 : vector<8x256xf32>, i32 -> vector<8x256xf32>
    %50 = vector.extract_strided_slice %0 {offsets = [8, 0], sizes = [1, 256], strides = [1, 1]} : vector<9x256xf32> to vector<1x256xf32>
    %51 = vector.broadcast %50 : vector<1x256xf32> to vector<8x256xf32>
    %52 = arith.mulf %49, %51 : vector<8x256xf32>
    %53 = arith.truncf %52 : vector<8x256xf32> to vector<8x256xbf16>
    %c64 = arith.constant 64 : index
    %c0_13 = arith.constant 0 : index
    %54 = vector.load %arg14[%c64, %c0_13] : memref<1224x256xbf16, #tpu.memory_space<vmem>>, vector<8x256xbf16>
    tpu.vector_store %arg14[%c64, %c0_13], %53 {strides = array<i32>} : memref<1224x256xbf16, #tpu.memory_space<vmem>>, vector<8x256xbf16>,
    %c0_14 = arith.constant 0 : index
    %c0_15 = arith.constant 0 : index
    %55 = vector.load %arg3[%c0_14, %c0_15] : memref<32x72xbf16, #tpu.memory_space<vmem>>, vector<32x72xbf16>
    %c0_16 = arith.constant 0 : index
    %c0_17 = arith.constant 0 : index
    %56 = vector.load %arg14[%c0_16, %c0_17] : memref<1224x256xbf16, #tpu.memory_space<vmem>>, vector<72x256xbf16>
    %cst_18 = arith.constant dense<0.000000e+00> : vector<32x256xf32>
    %57 = tpu.matmul %55, %56, %cst_18 {dimension_numbers = #tpu.dot_dimension_numbers<[1], [0], [0], [1], [0, 0, 1, 1], [], []>} : vector<32x72xbf16>, vector<72x256xbf16>, vector<32x256xf32> -> vector<32x256xf32>
    %c0_19 = arith.constant 0 : index
    %c0_20 = arith.constant 0 : index
    %58 = vector.load %arg8[%c0_19, %c0_20] : memref<32x1xf32, #tpu.memory_space<vmem>>, vector<32x1xf32>
    %59 = vector.broadcast %58 : vector<32x1xf32> to vector<32x256xf32>
    %60 = arith.addf %57, %59 : vector<32x256xf32>
    %cst_21 = arith.constant 2.000000e-01 : f32
    %61 = vector.broadcast %cst_21 : f32 to vector<32x256xf32>
    %62 = arith.mulf %61, %60 : vector<32x256xf32>
    %63 = arith.maximumf %60, %62 : vector<32x256xf32>
    %c17_i32_22 = arith.constant 17 : i32
    %64 = tpu.dynamic_rotate %63 by %c17_i32_22 dim 1 : vector<32x256xf32>, i32 -> vector<32x256xf32>
    %65 = vector.extract_strided_slice %0 {offsets = [0, 0], sizes = [1, 256], strides = [1, 1]} : vector<9x256xf32> to vector<1x256xf32>
    %66 = vector.broadcast %65 : vector<1x256xf32> to vector<32x256xf32>
    %67 = arith.mulf %64, %66 : vector<32x256xf32>
    %68 = arith.truncf %67 : vector<32x256xf32> to vector<32x256xbf16>
    %c72 = arith.constant 72 : index
    %c0_23 = arith.constant 0 : index
    %69 = vector.load %arg14[%c72, %c0_23] : memref<1224x256xbf16, #tpu.memory_space<vmem>>, vector<32x256xbf16>
    tpu.vector_store %arg14[%c72, %c0_23], %68 {strides = array<i32>} : memref<1224x256xbf16, #tpu.memory_space<vmem>>, vector<32x256xbf16>,
    %c16_i32_24 = arith.constant 16 : i32
    %70 = tpu.dynamic_rotate %63 by %c16_i32_24 dim 1 : vector<32x256xf32>, i32 -> vector<32x256xf32>
    %71 = vector.extract_strided_slice %0 {offsets = [1, 0], sizes = [1, 256], strides = [1, 1]} : vector<9x256xf32> to vector<1x256xf32>
    %72 = vector.broadcast %71 : vector<1x256xf32> to vector<32x256xf32>
    %73 = arith.mulf %70, %72 : vector<32x256xf32>
    %74 = arith.truncf %73 : vector<32x256xf32> to vector<32x256xbf16>
    %c104 = arith.constant 104 : index
    %c0_25 = arith.constant 0 : index
    %75 = vector.load %arg14[%c104, %c0_25] : memref<1224x256xbf16, #tpu.memory_space<vmem>>, vector<32x256xbf16>
    tpu.vector_store %arg14[%c104, %c0_25], %74 {strides = array<i32>} : memref<1224x256xbf16, #tpu.memory_space<vmem>>, vector<32x256xbf16>,
    %c15_i32_26 = arith.constant 15 : i32
    %76 = tpu.dynamic_rotate %63 by %c15_i32_26 dim 1 : vector<32x256xf32>, i32 -> vector<32x256xf32>
    %77 = vector.extract_strided_slice %0 {offsets = [2, 0], sizes = [1, 256], strides = [1, 1]} : vector<9x256xf32> to vector<1x256xf32>
    %78 = vector.broadcast %77 : vector<1x256xf32> to vector<32x256xf32>
    %79 = arith.mulf %76, %78 : vector<32x256xf32>
    %80 = arith.truncf %79 : vector<32x256xf32> to vector<32x256xbf16>
    %c136 = arith.constant 136 : index
    %c0_27 = arith.constant 0 : index
    %81 = vector.load %arg14[%c136, %c0_27] : memref<1224x256xbf16, #tpu.memory_space<vmem>>, vector<32x256xbf16>
    tpu.vector_store %arg14[%c136, %c0_27], %80 {strides = array<i32>} : memref<1224x256xbf16, #tpu.memory_space<vmem>>, vector<32x256xbf16>,
    %c1_i32_28 = arith.constant 1 : i32
    %82 = tpu.dynamic_rotate %63 by %c1_i32_28 dim 1 : vector<32x256xf32>, i32 -> vector<32x256xf32>
    %83 = vector.extract_strided_slice %0 {offsets = [3, 0], sizes = [1, 256], strides = [1, 1]} : vector<9x256xf32> to vector<1x256xf32>
    %84 = vector.broadcast %83 : vector<1x256xf32> to vector<32x256xf32>
    %85 = arith.mulf %82, %84 : vector<32x256xf32>
    %86 = arith.truncf %85 : vector<32x256xf32> to vector<32x256xbf16>
    %c168 = arith.constant 168 : index
    %c0_29 = arith.constant 0 : index
    %87 = vector.load %arg14[%c168, %c0_29] : memref<1224x256xbf16, #tpu.memory_space<vmem>>, vector<32x256xbf16>
    tpu.vector_store %arg14[%c168, %c0_29], %86 {strides = array<i32>} : memref<1224x256xbf16, #tpu.memory_space<vmem>>, vector<32x256xbf16>,
    %88 = arith.truncf %63 : vector<32x256xf32> to vector<32x256xbf16>
    %c200 = arith.constant 200 : index
    %c0_30 = arith.constant 0 : index
    %89 = vector.load %arg14[%c200, %c0_30] : memref<1224x256xbf16, #tpu.memory_space<vmem>>, vector<32x256xbf16>
    tpu.vector_store %arg14[%c200, %c0_30], %88 {strides = array<i32>} : memref<1224x256xbf16, #tpu.memory_space<vmem>>, vector<32x256xbf16>,
    %c255_i32_31 = arith.constant 255 : i32
    %90 = tpu.dynamic_rotate %63 by %c255_i32_31 dim 1 : vector<32x256xf32>, i32 -> vector<32x256xf32>
    %91 = vector.extract_strided_slice %0 {offsets = [5, 0], sizes = [1, 256], strides = [1, 1]} : vector<9x256xf32> to vector<1x256xf32>
    %92 = vector.broadcast %91 : vector<1x256xf32> to vector<32x256xf32>
    %93 = arith.mulf %90, %92 : vector<32x256xf32>
    %94 = arith.truncf %93 : vector<32x256xf32> to vector<32x256xbf16>
    %c232 = arith.constant 232 : index
    %c0_32 = arith.constant 0 : index
    %95 = vector.load %arg14[%c232, %c0_32] : memref<1224x256xbf16, #tpu.memory_space<vmem>>, vector<32x256xbf16>
    tpu.vector_store %arg14[%c232, %c0_32], %94 {strides = array<i32>} : memref<1224x256xbf16, #tpu.memory_space<vmem>>, vector<32x256xbf16>,
    %c241_i32_33 = arith.constant 241 : i32
    %96 = tpu.dynamic_rotate %63 by %c241_i32_33 dim 1 : vector<32x256xf32>, i32 -> vector<32x256xf32>
    %97 = vector.extract_strided_slice %0 {offsets = [6, 0], sizes = [1, 256], strides = [1, 1]} : vector<9x256xf32> to vector<1x256xf32>
    %98 = vector.broadcast %97 : vector<1x256xf32> to vector<32x256xf32>
    %99 = arith.mulf %96, %98 : vector<32x256xf32>
    %100 = arith.truncf %99 : vector<32x256xf32> to vector<32x256xbf16>
    %c264 = arith.constant 264 : index
    %c0_34 = arith.constant 0 : index
    %101 = vector.load %arg14[%c264, %c0_34] : memref<1224x256xbf16, #tpu.memory_space<vmem>>, vector<32x256xbf16>
    tpu.vector_store %arg14[%c264, %c0_34], %100 {strides = array<i32>} : memref<1224x256xbf16, #tpu.memory_space<vmem>>, vector<32x256xbf16>,
    %c240_i32_35 = arith.constant 240 : i32
    %102 = tpu.dynamic_rotate %63 by %c240_i32_35 dim 1 : vector<32x256xf32>, i32 -> vector<32x256xf32>
    %103 = vector.extract_strided_slice %0 {offsets = [7, 0], sizes = [1, 256], strides = [1, 1]} : vector<9x256xf32> to vector<1x256xf32>
    %104 = vector.broadcast %103 : vector<1x256xf32> to vector<32x256xf32>
    %105 = arith.mulf %102, %104 : vector<32x256xf32>
    %106 = arith.truncf %105 : vector<32x256xf32> to vector<32x256xbf16>
    %c296 = arith.constant 296 : index
    %c0_36 = arith.constant 0 : index
    %107 = vector.load %arg14[%c296, %c0_36] : memref<1224x256xbf16, #tpu.memory_space<vmem>>, vector<32x256xbf16>
    tpu.vector_store %arg14[%c296, %c0_36], %106 {strides = array<i32>} : memref<1224x256xbf16, #tpu.memory_space<vmem>>, vector<32x256xbf16>,
    %c239_i32_37 = arith.constant 239 : i32
    %108 = tpu.dynamic_rotate %63 by %c239_i32_37 dim 1 : vector<32x256xf32>, i32 -> vector<32x256xf32>
    %109 = vector.extract_strided_slice %0 {offsets = [8, 0], sizes = [1, 256], strides = [1, 1]} : vector<9x256xf32> to vector<1x256xf32>
    %110 = vector.broadcast %109 : vector<1x256xf32> to vector<32x256xf32>
    %111 = arith.mulf %108, %110 : vector<32x256xf32>
    %112 = arith.truncf %111 : vector<32x256xf32> to vector<32x256xbf16>
    %c328 = arith.constant 328 : index
    %c0_38 = arith.constant 0 : index
    %113 = vector.load %arg14[%c328, %c0_38] : memref<1224x256xbf16, #tpu.memory_space<vmem>>, vector<32x256xbf16>
    tpu.vector_store %arg14[%c328, %c0_38], %112 {strides = array<i32>} : memref<1224x256xbf16, #tpu.memory_space<vmem>>, vector<32x256xbf16>,
    %c0_39 = arith.constant 0 : index
    %c0_40 = arith.constant 0 : index
    %114 = vector.load %arg4[%c0_39, %c0_40] : memref<32x360xbf16, #tpu.memory_space<vmem>>, vector<32x360xbf16>
    %c0_41 = arith.constant 0 : index
    %c0_42 = arith.constant 0 : index
    %115 = vector.load %arg14[%c0_41, %c0_42] : memref<1224x256xbf16, #tpu.memory_space<vmem>>, vector<360x256xbf16>
    %cst_43 = arith.constant dense<0.000000e+00> : vector<32x256xf32>
    %116 = tpu.matmul %114, %115, %cst_43 {dimension_numbers = #tpu.dot_dimension_numbers<[1], [0], [0], [1], [0, 0, 1, 1], [], []>} : vector<32x360xbf16>, vector<360x256xbf16>, vector<32x256xf32> -> vector<32x256xf32>
    %c0_44 = arith.constant 0 : index
    %c0_45 = arith.constant 0 : index
    %117 = vector.load %arg9[%c0_44, %c0_45] : memref<32x1xf32, #tpu.memory_space<vmem>>, vector<32x1xf32>
    %118 = vector.broadcast %117 : vector<32x1xf32> to vector<32x256xf32>
    %119 = arith.addf %116, %118 : vector<32x256xf32>
    %cst_46 = arith.constant 2.000000e-01 : f32
    %120 = vector.broadcast %cst_46 : f32 to vector<32x256xf32>
    %121 = arith.mulf %120, %119 : vector<32x256xf32>
    %122 = arith.maximumf %119, %121 : vector<32x256xf32>
    %c17_i32_47 = arith.constant 17 : i32
    %123 = tpu.dynamic_rotate %122 by %c17_i32_47 dim 1 : vector<32x256xf32>, i32 -> vector<32x256xf32>
    %124 = vector.extract_strided_slice %0 {offsets = [0, 0], sizes = [1, 256], strides = [1, 1]} : vector<9x256xf32> to vector<1x256xf32>
    %125 = vector.broadcast %124 : vector<1x256xf32> to vector<32x256xf32>
    %126 = arith.mulf %123, %125 : vector<32x256xf32>
    %127 = arith.truncf %126 : vector<32x256xf32> to vector<32x256xbf16>
    %c360 = arith.constant 360 : index
    %c0_48 = arith.constant 0 : index
    %128 = vector.load %arg14[%c360, %c0_48] : memref<1224x256xbf16, #tpu.memory_space<vmem>>, vector<32x256xbf16>
    tpu.vector_store %arg14[%c360, %c0_48], %127 {strides = array<i32>} : memref<1224x256xbf16, #tpu.memory_space<vmem>>, vector<32x256xbf16>,
    %c16_i32_49 = arith.constant 16 : i32
    %129 = tpu.dynamic_rotate %122 by %c16_i32_49 dim 1 : vector<32x256xf32>, i32 -> vector<32x256xf32>
    %130 = vector.extract_strided_slice %0 {offsets = [1, 0], sizes = [1, 256], strides = [1, 1]} : vector<9x256xf32> to vector<1x256xf32>
    %131 = vector.broadcast %130 : vector<1x256xf32> to vector<32x256xf32>
    %132 = arith.mulf %129, %131 : vector<32x256xf32>
    %133 = arith.truncf %132 : vector<32x256xf32> to vector<32x256xbf16>
    %c392 = arith.constant 392 : index
    %c0_50 = arith.constant 0 : index
    %134 = vector.load %arg14[%c392, %c0_50] : memref<1224x256xbf16, #tpu.memory_space<vmem>>, vector<32x256xbf16>
    tpu.vector_store %arg14[%c392, %c0_50], %133 {strides = array<i32>} : memref<1224x256xbf16, #tpu.memory_space<vmem>>, vector<32x256xbf16>,
    %c15_i32_51 = arith.constant 15 : i32
    %135 = tpu.dynamic_rotate %122 by %c15_i32_51 dim 1 : vector<32x256xf32>, i32 -> vector<32x256xf32>
    %136 = vector.extract_strided_slice %0 {offsets = [2, 0], sizes = [1, 256], strides = [1, 1]} : vector<9x256xf32> to vector<1x256xf32>
    %137 = vector.broadcast %136 : vector<1x256xf32> to vector<32x256xf32>
    %138 = arith.mulf %135, %137 : vector<32x256xf32>
    %139 = arith.truncf %138 : vector<32x256xf32> to vector<32x256xbf16>
    %c424 = arith.constant 424 : index
    %c0_52 = arith.constant 0 : index
    %140 = vector.load %arg14[%c424, %c0_52] : memref<1224x256xbf16, #tpu.memory_space<vmem>>, vector<32x256xbf16>
    tpu.vector_store %arg14[%c424, %c0_52], %139 {strides = array<i32>} : memref<1224x256xbf16, #tpu.memory_space<vmem>>, vector<32x256xbf16>,
    %c1_i32_53 = arith.constant 1 : i32
    %141 = tpu.dynamic_rotate %122 by %c1_i32_53 dim 1 : vector<32x256xf32>, i32 -> vector<32x256xf32>
    %142 = vector.extract_strided_slice %0 {offsets = [3, 0], sizes = [1, 256], strides = [1, 1]} : vector<9x256xf32> to vector<1x256xf32>
    %143 = vector.broadcast %142 : vector<1x256xf32> to vector<32x256xf32>
    %144 = arith.mulf %141, %143 : vector<32x256xf32>
    %145 = arith.truncf %144 : vector<32x256xf32> to vector<32x256xbf16>
    %c456 = arith.constant 456 : index
    %c0_54 = arith.constant 0 : index
    %146 = vector.load %arg14[%c456, %c0_54] : memref<1224x256xbf16, #tpu.memory_space<vmem>>, vector<32x256xbf16>
    tpu.vector_store %arg14[%c456, %c0_54], %145 {strides = array<i32>} : memref<1224x256xbf16, #tpu.memory_space<vmem>>, vector<32x256xbf16>,
    %147 = arith.truncf %122 : vector<32x256xf32> to vector<32x256xbf16>
    %c488 = arith.constant 488 : index
    %c0_55 = arith.constant 0 : index
    %148 = vector.load %arg14[%c488, %c0_55] : memref<1224x256xbf16, #tpu.memory_space<vmem>>, vector<32x256xbf16>
    tpu.vector_store %arg14[%c488, %c0_55], %147 {strides = array<i32>} : memref<1224x256xbf16, #tpu.memory_space<vmem>>, vector<32x256xbf16>,
    %c255_i32_56 = arith.constant 255 : i32
    %149 = tpu.dynamic_rotate %122 by %c255_i32_56 dim 1 : vector<32x256xf32>, i32 -> vector<32x256xf32>
    %150 = vector.extract_strided_slice %0 {offsets = [5, 0], sizes = [1, 256], strides = [1, 1]} : vector<9x256xf32> to vector<1x256xf32>
    %151 = vector.broadcast %150 : vector<1x256xf32> to vector<32x256xf32>
    %152 = arith.mulf %149, %151 : vector<32x256xf32>
    %153 = arith.truncf %152 : vector<32x256xf32> to vector<32x256xbf16>
    %c520 = arith.constant 520 : index
    %c0_57 = arith.constant 0 : index
    %154 = vector.load %arg14[%c520, %c0_57] : memref<1224x256xbf16, #tpu.memory_space<vmem>>, vector<32x256xbf16>
    tpu.vector_store %arg14[%c520, %c0_57], %153 {strides = array<i32>} : memref<1224x256xbf16, #tpu.memory_space<vmem>>, vector<32x256xbf16>,
    %c241_i32_58 = arith.constant 241 : i32
    %155 = tpu.dynamic_rotate %122 by %c241_i32_58 dim 1 : vector<32x256xf32>, i32 -> vector<32x256xf32>
    %156 = vector.extract_strided_slice %0 {offsets = [6, 0], sizes = [1, 256], strides = [1, 1]} : vector<9x256xf32> to vector<1x256xf32>
    %157 = vector.broadcast %156 : vector<1x256xf32> to vector<32x256xf32>
    %158 = arith.mulf %155, %157 : vector<32x256xf32>
    %159 = arith.truncf %158 : vector<32x256xf32> to vector<32x256xbf16>
    %c552 = arith.constant 552 : index
    %c0_59 = arith.constant 0 : index
    %160 = vector.load %arg14[%c552, %c0_59] : memref<1224x256xbf16, #tpu.memory_space<vmem>>, vector<32x256xbf16>
    tpu.vector_store %arg14[%c552, %c0_59], %159 {strides = array<i32>} : memref<1224x256xbf16, #tpu.memory_space<vmem>>, vector<32x256xbf16>,
    %c240_i32_60 = arith.constant 240 : i32
    %161 = tpu.dynamic_rotate %122 by %c240_i32_60 dim 1 : vector<32x256xf32>, i32 -> vector<32x256xf32>
    %162 = vector.extract_strided_slice %0 {offsets = [7, 0], sizes = [1, 256], strides = [1, 1]} : vector<9x256xf32> to vector<1x256xf32>
    %163 = vector.broadcast %162 : vector<1x256xf32> to vector<32x256xf32>
    %164 = arith.mulf %161, %163 : vector<32x256xf32>
    %165 = arith.truncf %164 : vector<32x256xf32> to vector<32x256xbf16>
    %c584 = arith.constant 584 : index
    %c0_61 = arith.constant 0 : index
    %166 = vector.load %arg14[%c584, %c0_61] : memref<1224x256xbf16, #tpu.memory_space<vmem>>, vector<32x256xbf16>
    tpu.vector_store %arg14[%c584, %c0_61], %165 {strides = array<i32>} : memref<1224x256xbf16, #tpu.memory_space<vmem>>, vector<32x256xbf16>,
    %c239_i32_62 = arith.constant 239 : i32
    %167 = tpu.dynamic_rotate %122 by %c239_i32_62 dim 1 : vector<32x256xf32>, i32 -> vector<32x256xf32>
    %168 = vector.extract_strided_slice %0 {offsets = [8, 0], sizes = [1, 256], strides = [1, 1]} : vector<9x256xf32> to vector<1x256xf32>
    %169 = vector.broadcast %168 : vector<1x256xf32> to vector<32x256xf32>
    %170 = arith.mulf %167, %169 : vector<32x256xf32>
    %171 = arith.truncf %170 : vector<32x256xf32> to vector<32x256xbf16>
    %c616 = arith.constant 616 : index
    %c0_63 = arith.constant 0 : index
    %172 = vector.load %arg14[%c616, %c0_63] : memref<1224x256xbf16, #tpu.memory_space<vmem>>, vector<32x256xbf16>
    tpu.vector_store %arg14[%c616, %c0_63], %171 {strides = array<i32>} : memref<1224x256xbf16, #tpu.memory_space<vmem>>, vector<32x256xbf16>,
    %c0_64 = arith.constant 0 : index
    %c0_65 = arith.constant 0 : index
    %173 = vector.load %arg5[%c0_64, %c0_65] : memref<32x648xbf16, #tpu.memory_space<vmem>>, vector<32x648xbf16>
    %c0_66 = arith.constant 0 : index
    %c0_67 = arith.constant 0 : index
    %174 = vector.load %arg14[%c0_66, %c0_67] : memref<1224x256xbf16, #tpu.memory_space<vmem>>, vector<648x256xbf16>
    %cst_68 = arith.constant dense<0.000000e+00> : vector<32x256xf32>
    %175 = tpu.matmul %173, %174, %cst_68 {dimension_numbers = #tpu.dot_dimension_numbers<[1], [0], [0], [1], [0, 0, 1, 1], [], []>} : vector<32x648xbf16>, vector<648x256xbf16>, vector<32x256xf32> -> vector<32x256xf32>
    %c0_69 = arith.constant 0 : index
    %c0_70 = arith.constant 0 : index
    %176 = vector.load %arg10[%c0_69, %c0_70] : memref<32x1xf32, #tpu.memory_space<vmem>>, vector<32x1xf32>
    %177 = vector.broadcast %176 : vector<32x1xf32> to vector<32x256xf32>
    %178 = arith.addf %175, %177 : vector<32x256xf32>
    %cst_71 = arith.constant 2.000000e-01 : f32
    %179 = vector.broadcast %cst_71 : f32 to vector<32x256xf32>
    %180 = arith.mulf %179, %178 : vector<32x256xf32>
    %181 = arith.maximumf %178, %180 : vector<32x256xf32>
    %c17_i32_72 = arith.constant 17 : i32
    %182 = tpu.dynamic_rotate %181 by %c17_i32_72 dim 1 : vector<32x256xf32>, i32 -> vector<32x256xf32>
    %183 = vector.extract_strided_slice %0 {offsets = [0, 0], sizes = [1, 256], strides = [1, 1]} : vector<9x256xf32> to vector<1x256xf32>
    %184 = vector.broadcast %183 : vector<1x256xf32> to vector<32x256xf32>
    %185 = arith.mulf %182, %184 : vector<32x256xf32>
    %186 = arith.truncf %185 : vector<32x256xf32> to vector<32x256xbf16>
    %c648 = arith.constant 648 : index
    %c0_73 = arith.constant 0 : index
    %187 = vector.load %arg14[%c648, %c0_73] : memref<1224x256xbf16, #tpu.memory_space<vmem>>, vector<32x256xbf16>
    tpu.vector_store %arg14[%c648, %c0_73], %186 {strides = array<i32>} : memref<1224x256xbf16, #tpu.memory_space<vmem>>, vector<32x256xbf16>,
    %c16_i32_74 = arith.constant 16 : i32
    %188 = tpu.dynamic_rotate %181 by %c16_i32_74 dim 1 : vector<32x256xf32>, i32 -> vector<32x256xf32>
    %189 = vector.extract_strided_slice %0 {offsets = [1, 0], sizes = [1, 256], strides = [1, 1]} : vector<9x256xf32> to vector<1x256xf32>
    %190 = vector.broadcast %189 : vector<1x256xf32> to vector<32x256xf32>
    %191 = arith.mulf %188, %190 : vector<32x256xf32>
    %192 = arith.truncf %191 : vector<32x256xf32> to vector<32x256xbf16>
    %c680 = arith.constant 680 : index
    %c0_75 = arith.constant 0 : index
    %193 = vector.load %arg14[%c680, %c0_75] : memref<1224x256xbf16, #tpu.memory_space<vmem>>, vector<32x256xbf16>
    tpu.vector_store %arg14[%c680, %c0_75], %192 {strides = array<i32>} : memref<1224x256xbf16, #tpu.memory_space<vmem>>, vector<32x256xbf16>,
    %c15_i32_76 = arith.constant 15 : i32
    %194 = tpu.dynamic_rotate %181 by %c15_i32_76 dim 1 : vector<32x256xf32>, i32 -> vector<32x256xf32>
    %195 = vector.extract_strided_slice %0 {offsets = [2, 0], sizes = [1, 256], strides = [1, 1]} : vector<9x256xf32> to vector<1x256xf32>
    %196 = vector.broadcast %195 : vector<1x256xf32> to vector<32x256xf32>
    %197 = arith.mulf %194, %196 : vector<32x256xf32>
    %198 = arith.truncf %197 : vector<32x256xf32> to vector<32x256xbf16>
    %c712 = arith.constant 712 : index
    %c0_77 = arith.constant 0 : index
    %199 = vector.load %arg14[%c712, %c0_77] : memref<1224x256xbf16, #tpu.memory_space<vmem>>, vector<32x256xbf16>
    tpu.vector_store %arg14[%c712, %c0_77], %198 {strides = array<i32>} : memref<1224x256xbf16, #tpu.memory_space<vmem>>, vector<32x256xbf16>,
    %c1_i32_78 = arith.constant 1 : i32
    %200 = tpu.dynamic_rotate %181 by %c1_i32_78 dim 1 : vector<32x256xf32>, i32 -> vector<32x256xf32>
    %201 = vector.extract_strided_slice %0 {offsets = [3, 0], sizes = [1, 256], strides = [1, 1]} : vector<9x256xf32> to vector<1x256xf32>
    %202 = vector.broadcast %201 : vector<1x256xf32> to vector<32x256xf32>
    %203 = arith.mulf %200, %202 : vector<32x256xf32>
    %204 = arith.truncf %203 : vector<32x256xf32> to vector<32x256xbf16>
    %c744 = arith.constant 744 : index
    %c0_79 = arith.constant 0 : index
    %205 = vector.load %arg14[%c744, %c0_79] : memref<1224x256xbf16, #tpu.memory_space<vmem>>, vector<32x256xbf16>
    tpu.vector_store %arg14[%c744, %c0_79], %204 {strides = array<i32>} : memref<1224x256xbf16, #tpu.memory_space<vmem>>, vector<32x256xbf16>,
    %206 = arith.truncf %181 : vector<32x256xf32> to vector<32x256xbf16>
    %c776 = arith.constant 776 : index
    %c0_80 = arith.constant 0 : index
    %207 = vector.load %arg14[%c776, %c0_80] : memref<1224x256xbf16, #tpu.memory_space<vmem>>, vector<32x256xbf16>
    tpu.vector_store %arg14[%c776, %c0_80], %206 {strides = array<i32>} : memref<1224x256xbf16, #tpu.memory_space<vmem>>, vector<32x256xbf16>,
    %c255_i32_81 = arith.constant 255 : i32
    %208 = tpu.dynamic_rotate %181 by %c255_i32_81 dim 1 : vector<32x256xf32>, i32 -> vector<32x256xf32>
    %209 = vector.extract_strided_slice %0 {offsets = [5, 0], sizes = [1, 256], strides = [1, 1]} : vector<9x256xf32> to vector<1x256xf32>
    %210 = vector.broadcast %209 : vector<1x256xf32> to vector<32x256xf32>
    %211 = arith.mulf %208, %210 : vector<32x256xf32>
    %212 = arith.truncf %211 : vector<32x256xf32> to vector<32x256xbf16>
    %c808 = arith.constant 808 : index
    %c0_82 = arith.constant 0 : index
    %213 = vector.load %arg14[%c808, %c0_82] : memref<1224x256xbf16, #tpu.memory_space<vmem>>, vector<32x256xbf16>
    tpu.vector_store %arg14[%c808, %c0_82], %212 {strides = array<i32>} : memref<1224x256xbf16, #tpu.memory_space<vmem>>, vector<32x256xbf16>,
    %c241_i32_83 = arith.constant 241 : i32
    %214 = tpu.dynamic_rotate %181 by %c241_i32_83 dim 1 : vector<32x256xf32>, i32 -> vector<32x256xf32>
    %215 = vector.extract_strided_slice %0 {offsets = [6, 0], sizes = [1, 256], strides = [1, 1]} : vector<9x256xf32> to vector<1x256xf32>
    %216 = vector.broadcast %215 : vector<1x256xf32> to vector<32x256xf32>
    %217 = arith.mulf %214, %216 : vector<32x256xf32>
    %218 = arith.truncf %217 : vector<32x256xf32> to vector<32x256xbf16>
    %c840 = arith.constant 840 : index
    %c0_84 = arith.constant 0 : index
    %219 = vector.load %arg14[%c840, %c0_84] : memref<1224x256xbf16, #tpu.memory_space<vmem>>, vector<32x256xbf16>
    tpu.vector_store %arg14[%c840, %c0_84], %218 {strides = array<i32>} : memref<1224x256xbf16, #tpu.memory_space<vmem>>, vector<32x256xbf16>,
    %c240_i32_85 = arith.constant 240 : i32
    %220 = tpu.dynamic_rotate %181 by %c240_i32_85 dim 1 : vector<32x256xf32>, i32 -> vector<32x256xf32>
    %221 = vector.extract_strided_slice %0 {offsets = [7, 0], sizes = [1, 256], strides = [1, 1]} : vector<9x256xf32> to vector<1x256xf32>
    %222 = vector.broadcast %221 : vector<1x256xf32> to vector<32x256xf32>
    %223 = arith.mulf %220, %222 : vector<32x256xf32>
    %224 = arith.truncf %223 : vector<32x256xf32> to vector<32x256xbf16>
    %c872 = arith.constant 872 : index
    %c0_86 = arith.constant 0 : index
    %225 = vector.load %arg14[%c872, %c0_86] : memref<1224x256xbf16, #tpu.memory_space<vmem>>, vector<32x256xbf16>
    tpu.vector_store %arg14[%c872, %c0_86], %224 {strides = array<i32>} : memref<1224x256xbf16, #tpu.memory_space<vmem>>, vector<32x256xbf16>,
    %c239_i32_87 = arith.constant 239 : i32
    %226 = tpu.dynamic_rotate %181 by %c239_i32_87 dim 1 : vector<32x256xf32>, i32 -> vector<32x256xf32>
    %227 = vector.extract_strided_slice %0 {offsets = [8, 0], sizes = [1, 256], strides = [1, 1]} : vector<9x256xf32> to vector<1x256xf32>
    %228 = vector.broadcast %227 : vector<1x256xf32> to vector<32x256xf32>
    %229 = arith.mulf %226, %228 : vector<32x256xf32>
    %230 = arith.truncf %229 : vector<32x256xf32> to vector<32x256xbf16>
    %c904 = arith.constant 904 : index
    %c0_88 = arith.constant 0 : index
    %231 = vector.load %arg14[%c904, %c0_88] : memref<1224x256xbf16, #tpu.memory_space<vmem>>, vector<32x256xbf16>
    tpu.vector_store %arg14[%c904, %c0_88], %230 {strides = array<i32>} : memref<1224x256xbf16, #tpu.memory_space<vmem>>, vector<32x256xbf16>,
    %c0_89 = arith.constant 0 : index
    %c0_90 = arith.constant 0 : index
    %232 = vector.load %arg6[%c0_89, %c0_90] : memref<32x936xbf16, #tpu.memory_space<vmem>>, vector<32x936xbf16>
    %c0_91 = arith.constant 0 : index
    %c0_92 = arith.constant 0 : index
    %233 = vector.load %arg14[%c0_91, %c0_92] : memref<1224x256xbf16, #tpu.memory_space<vmem>>, vector<936x256xbf16>
    %cst_93 = arith.constant dense<0.000000e+00> : vector<32x256xf32>
    %234 = tpu.matmul %232, %233, %cst_93 {dimension_numbers = #tpu.dot_dimension_numbers<[1], [0], [0], [1], [0, 0, 1, 1], [], []>} : vector<32x936xbf16>, vector<936x256xbf16>, vector<32x256xf32> -> vector<32x256xf32>
    %c0_94 = arith.constant 0 : index
    %c0_95 = arith.constant 0 : index
    %235 = vector.load %arg11[%c0_94, %c0_95] : memref<32x1xf32, #tpu.memory_space<vmem>>, vector<32x1xf32>
    %236 = vector.broadcast %235 : vector<32x1xf32> to vector<32x256xf32>
    %237 = arith.addf %234, %236 : vector<32x256xf32>
    %cst_96 = arith.constant 2.000000e-01 : f32
    %238 = vector.broadcast %cst_96 : f32 to vector<32x256xf32>
    %239 = arith.mulf %238, %237 : vector<32x256xf32>
    %240 = arith.maximumf %237, %239 : vector<32x256xf32>
    %c17_i32_97 = arith.constant 17 : i32
    %241 = tpu.dynamic_rotate %240 by %c17_i32_97 dim 1 : vector<32x256xf32>, i32 -> vector<32x256xf32>
    %242 = vector.extract_strided_slice %0 {offsets = [0, 0], sizes = [1, 256], strides = [1, 1]} : vector<9x256xf32> to vector<1x256xf32>
    %243 = vector.broadcast %242 : vector<1x256xf32> to vector<32x256xf32>
    %244 = arith.mulf %241, %243 : vector<32x256xf32>
    %245 = arith.truncf %244 : vector<32x256xf32> to vector<32x256xbf16>
    %c936 = arith.constant 936 : index
    %c0_98 = arith.constant 0 : index
    %246 = vector.load %arg14[%c936, %c0_98] : memref<1224x256xbf16, #tpu.memory_space<vmem>>, vector<32x256xbf16>
    tpu.vector_store %arg14[%c936, %c0_98], %245 {strides = array<i32>} : memref<1224x256xbf16, #tpu.memory_space<vmem>>, vector<32x256xbf16>,
    %c16_i32_99 = arith.constant 16 : i32
    %247 = tpu.dynamic_rotate %240 by %c16_i32_99 dim 1 : vector<32x256xf32>, i32 -> vector<32x256xf32>
    %248 = vector.extract_strided_slice %0 {offsets = [1, 0], sizes = [1, 256], strides = [1, 1]} : vector<9x256xf32> to vector<1x256xf32>
    %249 = vector.broadcast %248 : vector<1x256xf32> to vector<32x256xf32>
    %250 = arith.mulf %247, %249 : vector<32x256xf32>
    %251 = arith.truncf %250 : vector<32x256xf32> to vector<32x256xbf16>
    %c968 = arith.constant 968 : index
    %c0_100 = arith.constant 0 : index
    %252 = vector.load %arg14[%c968, %c0_100] : memref<1224x256xbf16, #tpu.memory_space<vmem>>, vector<32x256xbf16>
    tpu.vector_store %arg14[%c968, %c0_100], %251 {strides = array<i32>} : memref<1224x256xbf16, #tpu.memory_space<vmem>>, vector<32x256xbf16>,
    %c15_i32_101 = arith.constant 15 : i32
    %253 = tpu.dynamic_rotate %240 by %c15_i32_101 dim 1 : vector<32x256xf32>, i32 -> vector<32x256xf32>
    %254 = vector.extract_strided_slice %0 {offsets = [2, 0], sizes = [1, 256], strides = [1, 1]} : vector<9x256xf32> to vector<1x256xf32>
    %255 = vector.broadcast %254 : vector<1x256xf32> to vector<32x256xf32>
    %256 = arith.mulf %253, %255 : vector<32x256xf32>
    %257 = arith.truncf %256 : vector<32x256xf32> to vector<32x256xbf16>
    %c1000 = arith.constant 1000 : index
    %c0_102 = arith.constant 0 : index
    %258 = vector.load %arg14[%c1000, %c0_102] : memref<1224x256xbf16, #tpu.memory_space<vmem>>, vector<32x256xbf16>
    tpu.vector_store %arg14[%c1000, %c0_102], %257 {strides = array<i32>} : memref<1224x256xbf16, #tpu.memory_space<vmem>>, vector<32x256xbf16>,
    %c1_i32_103 = arith.constant 1 : i32
    %259 = tpu.dynamic_rotate %240 by %c1_i32_103 dim 1 : vector<32x256xf32>, i32 -> vector<32x256xf32>
    %260 = vector.extract_strided_slice %0 {offsets = [3, 0], sizes = [1, 256], strides = [1, 1]} : vector<9x256xf32> to vector<1x256xf32>
    %261 = vector.broadcast %260 : vector<1x256xf32> to vector<32x256xf32>
    %262 = arith.mulf %259, %261 : vector<32x256xf32>
    %263 = arith.truncf %262 : vector<32x256xf32> to vector<32x256xbf16>
    %c1032 = arith.constant 1032 : index
    %c0_104 = arith.constant 0 : index
    %264 = vector.load %arg14[%c1032, %c0_104] : memref<1224x256xbf16, #tpu.memory_space<vmem>>, vector<32x256xbf16>
    tpu.vector_store %arg14[%c1032, %c0_104], %263 {strides = array<i32>} : memref<1224x256xbf16, #tpu.memory_space<vmem>>, vector<32x256xbf16>,
    %265 = arith.truncf %240 : vector<32x256xf32> to vector<32x256xbf16>
    %c1064 = arith.constant 1064 : index
    %c0_105 = arith.constant 0 : index
    %266 = vector.load %arg14[%c1064, %c0_105] : memref<1224x256xbf16, #tpu.memory_space<vmem>>, vector<32x256xbf16>
    tpu.vector_store %arg14[%c1064, %c0_105], %265 {strides = array<i32>} : memref<1224x256xbf16, #tpu.memory_space<vmem>>, vector<32x256xbf16>,
    %c255_i32_106 = arith.constant 255 : i32
    %267 = tpu.dynamic_rotate %240 by %c255_i32_106 dim 1 : vector<32x256xf32>, i32 -> vector<32x256xf32>
    %268 = vector.extract_strided_slice %0 {offsets = [5, 0], sizes = [1, 256], strides = [1, 1]} : vector<9x256xf32> to vector<1x256xf32>
    %269 = vector.broadcast %268 : vector<1x256xf32> to vector<32x256xf32>
    %270 = arith.mulf %267, %269 : vector<32x256xf32>
    %271 = arith.truncf %270 : vector<32x256xf32> to vector<32x256xbf16>
    %c1096 = arith.constant 1096 : index
    %c0_107 = arith.constant 0 : index
    %272 = vector.load %arg14[%c1096, %c0_107] : memref<1224x256xbf16, #tpu.memory_space<vmem>>, vector<32x256xbf16>
    tpu.vector_store %arg14[%c1096, %c0_107], %271 {strides = array<i32>} : memref<1224x256xbf16, #tpu.memory_space<vmem>>, vector<32x256xbf16>,
    %c241_i32_108 = arith.constant 241 : i32
    %273 = tpu.dynamic_rotate %240 by %c241_i32_108 dim 1 : vector<32x256xf32>, i32 -> vector<32x256xf32>
    %274 = vector.extract_strided_slice %0 {offsets = [6, 0], sizes = [1, 256], strides = [1, 1]} : vector<9x256xf32> to vector<1x256xf32>
    %275 = vector.broadcast %274 : vector<1x256xf32> to vector<32x256xf32>
    %276 = arith.mulf %273, %275 : vector<32x256xf32>
    %277 = arith.truncf %276 : vector<32x256xf32> to vector<32x256xbf16>
    %c1128 = arith.constant 1128 : index
    %c0_109 = arith.constant 0 : index
    %278 = vector.load %arg14[%c1128, %c0_109] : memref<1224x256xbf16, #tpu.memory_space<vmem>>, vector<32x256xbf16>
    tpu.vector_store %arg14[%c1128, %c0_109], %277 {strides = array<i32>} : memref<1224x256xbf16, #tpu.memory_space<vmem>>, vector<32x256xbf16>,
    %c240_i32_110 = arith.constant 240 : i32
    %279 = tpu.dynamic_rotate %240 by %c240_i32_110 dim 1 : vector<32x256xf32>, i32 -> vector<32x256xf32>
    %280 = vector.extract_strided_slice %0 {offsets = [7, 0], sizes = [1, 256], strides = [1, 1]} : vector<9x256xf32> to vector<1x256xf32>
    %281 = vector.broadcast %280 : vector<1x256xf32> to vector<32x256xf32>
    %282 = arith.mulf %279, %281 : vector<32x256xf32>
    %283 = arith.truncf %282 : vector<32x256xf32> to vector<32x256xbf16>
    %c1160 = arith.constant 1160 : index
    %c0_111 = arith.constant 0 : index
    %284 = vector.load %arg14[%c1160, %c0_111] : memref<1224x256xbf16, #tpu.memory_space<vmem>>, vector<32x256xbf16>
    tpu.vector_store %arg14[%c1160, %c0_111], %283 {strides = array<i32>} : memref<1224x256xbf16, #tpu.memory_space<vmem>>, vector<32x256xbf16>,
    %c239_i32_112 = arith.constant 239 : i32
    %285 = tpu.dynamic_rotate %240 by %c239_i32_112 dim 1 : vector<32x256xf32>, i32 -> vector<32x256xf32>
    %286 = vector.extract_strided_slice %0 {offsets = [8, 0], sizes = [1, 256], strides = [1, 1]} : vector<9x256xf32> to vector<1x256xf32>
    %287 = vector.broadcast %286 : vector<1x256xf32> to vector<32x256xf32>
    %288 = arith.mulf %285, %287 : vector<32x256xf32>
    %289 = arith.truncf %288 : vector<32x256xf32> to vector<32x256xbf16>
    %c1192 = arith.constant 1192 : index
    %c0_113 = arith.constant 0 : index
    %290 = vector.load %arg14[%c1192, %c0_113] : memref<1224x256xbf16, #tpu.memory_space<vmem>>, vector<32x256xbf16>
    tpu.vector_store %arg14[%c1192, %c0_113], %289 {strides = array<i32>} : memref<1224x256xbf16, #tpu.memory_space<vmem>>, vector<32x256xbf16>,
    %c0_114 = arith.constant 0 : index
    %c0_115 = arith.constant 0 : index
    %291 = vector.load %arg7[%c0_114, %c0_115] : memref<4x1224xbf16, #tpu.memory_space<vmem>>, vector<4x1224xbf16>
    %c0_116 = arith.constant 0 : index
    %c0_117 = arith.constant 0 : index
    %292 = vector.load %arg14[%c0_116, %c0_117] : memref<1224x256xbf16, #tpu.memory_space<vmem>>, vector<1224x256xbf16>
    %cst_118 = arith.constant dense<0.000000e+00> : vector<4x256xf32>
    %293 = tpu.matmul %291, %292, %cst_118 {dimension_numbers = #tpu.dot_dimension_numbers<[1], [0], [0], [1], [0, 0, 1, 1], [], []>} : vector<4x1224xbf16>, vector<1224x256xbf16>, vector<4x256xf32> -> vector<4x256xf32>
    %c0_119 = arith.constant 0 : index
    %c0_120 = arith.constant 0 : index
    %294 = vector.load %arg12[%c0_119, %c0_120] : memref<4x1xf32, #tpu.memory_space<vmem>>, vector<4x1xf32>
    %295 = vector.broadcast %294 : vector<4x1xf32> to vector<4x256xf32>
    %296 = arith.addf %293, %295 : vector<4x256xf32>
    %297 = arith.addf %296, %2 : vector<4x256xf32>
    %c0_121 = arith.constant 0 : index
    %c0_122 = arith.constant 0 : index
    %c0_123 = arith.constant 0 : index
    %298 = vector.load %arg13[%c0_121, %c0_122, %c0_123] : memref<1x4x256xf32, #tpu.memory_space<vmem>>, vector<1x4x256xf32>
    %299 = vector.shape_cast %298 : vector<1x4x256xf32> to vector<4x256xf32>
    %300 = vector.shape_cast %297 : vector<4x256xf32> to vector<1x4x256xf32>
    tpu.vector_store %arg13[%c0_121, %c0_122, %c0_123], %300 {strides = array<i32>} : memref<1x4x256xf32, #tpu.memory_space<vmem>>, vector<1x4x256xf32>,
    return
  }
  func.func @transform_0(%arg0: i32) -> (i32, i32, i32) {
    %c0_i32 = arith.constant 0 : i32
    %c0_i32_0 = arith.constant 0 : i32
    %c0_i32_1 = arith.constant 0 : i32
    return %arg0, %c0_i32, %c0_i32_0 : i32, i32, i32
  }
  func.func @transform_1(%arg0: i32) -> (i32, i32) {
    %c0_i32 = arith.constant 0 : i32
    %c0_i32_0 = arith.constant 0 : i32
    %c0_i32_1 = arith.constant 0 : i32
    return %c0_i32, %c0_i32_0 : i32, i32
  }
  func.func @transform_2(%arg0: i32) -> (i32, i32) {
    %c0_i32 = arith.constant 0 : i32
    %c0_i32_0 = arith.constant 0 : i32
    %c0_i32_1 = arith.constant 0 : i32
    return %c0_i32, %c0_i32_0 : i32, i32
  }
  func.func @transform_3(%arg0: i32) -> (i32, i32) {
    %c0_i32 = arith.constant 0 : i32
    %c0_i32_0 = arith.constant 0 : i32
    %c0_i32_1 = arith.constant 0 : i32
    return %c0_i32, %c0_i32_0 : i32, i32
  }
  func.func @transform_4(%arg0: i32) -> (i32, i32) {
    %c0_i32 = arith.constant 0 : i32
    %c0_i32_0 = arith.constant 0 : i32
    %c0_i32_1 = arith.constant 0 : i32
    return %c0_i32, %c0_i32_0 : i32, i32
  }
  func.func @transform_5(%arg0: i32) -> (i32, i32) {
    %c0_i32 = arith.constant 0 : i32
    %c0_i32_0 = arith.constant 0 : i32
    %c0_i32_1 = arith.constant 0 : i32
    return %c0_i32, %c0_i32_0 : i32, i32
  }
  func.func @transform_6(%arg0: i32) -> (i32, i32) {
    %c0_i32 = arith.constant 0 : i32
    %c0_i32_0 = arith.constant 0 : i32
    %c0_i32_1 = arith.constant 0 : i32
    return %c0_i32, %c0_i32_0 : i32, i32
  }
  func.func @transform_7(%arg0: i32) -> (i32, i32) {
    %c0_i32 = arith.constant 0 : i32
    %c0_i32_0 = arith.constant 0 : i32
    %c0_i32_1 = arith.constant 0 : i32
    return %c0_i32, %c0_i32_0 : i32, i32
  }
  func.func @transform_8(%arg0: i32) -> (i32, i32) {
    %c0_i32 = arith.constant 0 : i32
    %c0_i32_0 = arith.constant 0 : i32
    %c0_i32_1 = arith.constant 0 : i32
    return %c0_i32, %c0_i32_0 : i32, i32
  }
  func.func @transform_9(%arg0: i32) -> (i32, i32) {
    %c0_i32 = arith.constant 0 : i32
    %c0_i32_0 = arith.constant 0 : i32
    %c0_i32_1 = arith.constant 0 : i32
    return %c0_i32, %c0_i32_0 : i32, i32
  }
  func.func @transform_10(%arg0: i32) -> (i32, i32) {
    %c0_i32 = arith.constant 0 : i32
    %c0_i32_0 = arith.constant 0 : i32
    %c0_i32_1 = arith.constant 0 : i32
    return %c0_i32, %c0_i32_0 : i32, i32
  }
  func.func @transform_11(%arg0: i32) -> (i32, i32) {
    %c0_i32 = arith.constant 0 : i32
    %c0_i32_0 = arith.constant 0 : i32
    %c0_i32_1 = arith.constant 0 : i32
    return %c0_i32, %c0_i32_0 : i32, i32
  }
  func.func @transform_12(%arg0: i32) -> (i32, i32, i32) {
    %c0_i32 = arith.constant 0 : i32
    %c0_i32_0 = arith.constant 0 : i32
    %c0_i32_1 = arith.constant 0 : i32
    return %arg0, %c0_i32, %c0_i32_0 : i32, i32, i32
  }
}

</mosaic_0001>

<llo_original>
// kernel: residual_dense_block.1
$region0: #{residual_dense_block.1}
  #allocation0 [shape = 'u32[]', space=smem, size = 0x4, offset = 0x4, fixed_abs, tag = 'smem constant byte address 0x4 - core index']
  #allocation1 [shape = 'u32[144,128]{1,0:T(1,128)}', space=vmem, size = 0x12000, scoped, tag = 'internal scratch']
  #allocation2 [shape = 'bf16[1224,256]{1,0:T(8,128)(2,1)}', space=vmem, size = 0x99000, scoped, tag = 'scratch operand']
  %s0 = inlined_call_operand.vmem [shape: f32[2,4,256], index: 0, kind: input, shape index: {}]
  %s1 = inlined_call_operand.vmem [shape: f32[9,256], index: 1, kind: input, shape index: {}]
  %s2 = inlined_call_operand.vmem [shape: bf16[32,72], index: 2, kind: input, shape index: {}]
  %s3 = inlined_call_operand.vmem [shape: bf16[32,360], index: 3, kind: input, shape index: {}]
  %s4 = inlined_call_operand.vmem [shape: bf16[32,648], index: 4, kind: input, shape index: {}]
  %s5 = inlined_call_operand.vmem [shape: bf16[32,936], index: 5, kind: input, shape index: {}]
  %s6 = inlined_call_operand.vmem [shape: bf16[4,1224], index: 6, kind: input, shape index: {}]
  %s7 = inlined_call_operand.vmem [shape: f32[32,1], index: 7, kind: input, shape index: {}]
  %s8 = inlined_call_operand.vmem [shape: f32[32,1], index: 8, kind: input, shape index: {}]
  %s9 = inlined_call_operand.vmem [shape: f32[32,1], index: 9, kind: input, shape index: {}]
  %s10 = inlined_call_operand.vmem [shape: f32[32,1], index: 10, kind: input, shape index: {}]
  %s11 = inlined_call_operand.vmem [shape: f32[4,1], index: 11, kind: input, shape index: {}]
  %s12 = inlined_call_operand.vmem [shape: f32[2,4,256], index: 12, kind: output, shape index: {}]
  %s13 = sld [smem:[#allocation0]]
  $region81: #{residual_dense_block.1} parent=0
    _
  %s15 = ssub.s32 1, %s13
  %s16 = scalar_select 0, %s15, %s13
  loop: start=0, step=1, limit=4
  $region2: #{residual_dense_block.1} parent=0 // loop_pre_header
    _
  $region3: #{residual_dense_block.1} parent=0 // loop_header
    %s18 = sphi 0, %s22
    %p19 = scmp.ge.s32.totalorder %s18, 4
    %s28 = sphi 0, %s30
    %s31 = sphi 0, %s28
    %s32 = sphi 0, %s31
    %s48 = sphi 0, %s32
    %s52 = sphi 0, %s52
    %s54 = sphi 0, %s52
    %s55 = sphi 0, %s54
    %s69 = sphi 0, %s55
    %s73 = sphi 0, %s73
    %s75 = sphi 0, %s73
    %s76 = sphi 0, %s75
    %s90 = sphi 0, %s76
    %s94 = sphi 0, %s94
    %s96 = sphi 0, %s94
    %s97 = sphi 0, %s96
    %s111 = sphi 0, %s97
    %s115 = sphi 0, %s115
    %s117 = sphi 0, %s115
    %s118 = sphi 0, %s117
    %s132 = sphi 0, %s118
    %s136 = sphi 0, %s136
    %s138 = sphi 0, %s136
    %s139 = sphi 0, %s138
    %s153 = sphi 0, %s139
    %s157 = sphi 0, %s157
    %s159 = sphi 0, %s157
    %s160 = sphi 0, %s159
    %s174 = sphi 0, %s160
    %s178 = sphi 0, %s178
    %s180 = sphi 0, %s178
    %s181 = sphi 0, %s180
    %s195 = sphi 0, %s181
    %s199 = sphi 0, %s199
    %s201 = sphi 0, %s199
    %s202 = sphi 0, %s201
    %s216 = sphi 0, %s202
    %s220 = sphi 0, %s220
    %s222 = sphi 0, %s220
    %s223 = sphi 0, %s222
    %s237 = sphi 0, %s223
    %s241 = sphi 0, %s241
    %s243 = sphi 0, %s241
    %s244 = sphi 0, %s243
    %s258 = sphi 0, %s244
    %s262 = sphi 0, %s262
    %s264 = sphi 0, %s262
    %s265 = sphi 0, %s264
    %s279 = sphi 0, %s265
    %s285 = sphi 0, %s287
    %s288 = sphi 0, %s285
    %s289 = sphi 0, %s288
    %s305 = sphi 0, %s289
  $region4: #{residual_dense_block.1} parent=0 // loop_header_branch
    %21 = sbr.rel (%p19) target = $region8
  $region5: #{residual_dense_block.1} parent=0 // loop_body
    %s23 = ssub.s32 %s18, 1
    %s24 = ssub.s32 %s18, 2
    %s25 = sadd.s32 %s18, 1
    %s26 = ssub.s32 %s18, %s25
    %p27 = scmp.eq.s32.totalorder %s26, 0
    %s29 = sadd.s32 %s28, 1
    %s30 = scalar_select %p27, %s28, %s29
    %p33 = pneg %p27
    %p34 = scmp.eq.s32.totalorder %s18, 1
    %p35 = por %p33, %p34
    %p36 = scmp.ne.s32.totalorder %s28, %s31
    %p37 = scmp.eq.s32.totalorder %s18, 0
    %p38 = por %p36, %p37
    %p39 = scmp.ne.s32.totalorder %s28, %s31
    %p40 = scmp.eq.s32.totalorder %s23, 1
    %p41 = por %p39, %p40
    %p42 = scmp.ne.s32.totalorder %s31, %s32
    %p43 = scmp.eq.s32.totalorder %s23, 0
    %p44 = por %p42, %p43
    %p45 = scmp.ne.s32.totalorder %s31, %s32
    %p46 = scmp.eq.s32.totalorder %s24, 1
    %p47 = por %p45, %p46
    %p49 = scmp.ne.s32.totalorder %s32, %s48
    %p50 = scmp.eq.s32.totalorder %s24, 0
    %p51 = por %p49, %p50
    %s53 = sadd.s32 %s52, 1
    %p56 = scmp.eq.s32.totalorder %s18, 1
    %p57 = scmp.ne.s32.totalorder %s52, %s54
    %p58 = scmp.eq.s32.totalorder %s18, 0
    %p59 = por %p57, %p58
    %p60 = scmp.ne.s32.totalorder %s52, %s54
    %p61 = scmp.eq.s32.totalorder %s23, 1
    %p62 = por %p60, %p61
    %p63 = scmp.ne.s32.totalorder %s54, %s55
    %p64 = scmp.eq.s32.totalorder %s23, 0
    %p65 = por %p63, %p64
    %p66 = scmp.ne.s32.totalorder %s54, %s55
    %p67 = scmp.eq.s32.totalorder %s24, 1
    %p68 = por %p66, %p67
    %p70 = scmp.ne.s32.totalorder %s55, %s69
    %p71 = scmp.eq.s32.totalorder %s24, 0
    %p72 = por %p70, %p71
    %s74 = sadd.s32 %s73, 1
    %p77 = scmp.eq.s32.totalorder %s18, 1
    %p78 = scmp.ne.s32.totalorder %s73, %s75
    %p79 = scmp.eq.s32.totalorder %s18, 0
    %p80 = por %p78, %p79
    %p81 = scmp.ne.s32.totalorder %s73, %s75
    %p82 = scmp.eq.s32.totalorder %s23, 1
    %p83 = por %p81, %p82
    %p84 = scmp.ne.s32.totalorder %s75, %s76
    %p85 = scmp.eq.s32.totalorder %s23, 0
    %p86 = por %p84, %p85
    %p87 = scmp.ne.s32.totalorder %s75, %s76
    %p88 = scmp.eq.s32.totalorder %s24, 1
    %p89 = por %p87, %p88
    %p91 = scmp.ne.s32.totalorder %s76, %s90
    %p92 = scmp.eq.s32.totalorder %s24, 0
    %p93 = por %p91, %p92
    %s95 = sadd.s32 %s94, 1
    %p98 = scmp.eq.s32.totalorder %s18, 1
    %p99 = scmp.ne.s32.totalorder %s94, %s96
    %p100 = scmp.eq.s32.totalorder %s18, 0
    %p101 = por %p99, %p100
    %p102 = scmp.ne.s32.totalorder %s94, %s96
    %p103 = scmp.eq.s32.totalorder %s23, 1
    %p104 = por %p102, %p103
    %p105 = scmp.ne.s32.totalorder %s96, %s97
    %p106 = scmp.eq.s32.totalorder %s23, 0
    %p107 = por %p105, %p106
    %p108 = scmp.ne.s32.totalorder %s96, %s97
    %p109 = scmp.eq.s32.totalorder %s24, 1
    %p110 = por %p108, %p109
    %p112 = scmp.ne.s32.totalorder %s97, %s111
    %p113 = scmp.eq.s32.totalorder %s24, 0
    %p114 = por %p112, %p113
    %s116 = sadd.s32 %s115, 1
    %p119 = scmp.eq.s32.totalorder %s18, 1
    %p120 = scmp.ne.s32.totalorder %s115, %s117
    %p121 = scmp.eq.s32.totalorder %s18, 0
    %p122 = por %p120, %p121
    %p123 = scmp.ne.s32.totalorder %s115, %s117
    %p124 = scmp.eq.s32.totalorder %s23, 1
    %p125 = por %p123, %p124
    %p126 = scmp.ne.s32.totalorder %s117, %s118
    %p127 = scmp.eq.s32.totalorder %s23, 0
    %p128 = por %p126, %p127
    %p129 = scmp.ne.s32.totalorder %s117, %s118
    %p130 = scmp.eq.s32.totalorder %s24, 1
    %p131 = por %p129, %p130
    %p133 = scmp.ne.s32.totalorder %s118, %s132
    %p134 = scmp.eq.s32.totalorder %s24, 0
    %p135 = por %p133, %p134
    %s137 = sadd.s32 %s136, 1
    %p140 = scmp.eq.s32.totalorder %s18, 1
    %p141 = scmp.ne.s32.totalorder %s136, %s138
    %p142 = scmp.eq.s32.totalorder %s18, 0
    %p143 = por %p141, %p142
    %p144 = scmp.ne.s32.totalorder %s136, %s138
    %p145 = scmp.eq.s32.totalorder %s23, 1
    %p146 = por %p144, %p145
    %p147 = scmp.ne.s32.totalorder %s138, %s139
    %p148 = scmp.eq.s32.totalorder %s23, 0
    %p149 = por %p147, %p148
    %p150 = scmp.ne.s32.totalorder %s138, %s139
    %p151 = scmp.eq.s32.totalorder %s24, 1
    %p152 = por %p150, %p151
    %p154 = scmp.ne.s32.totalorder %s139, %s153
    %p155 = scmp.eq.s32.totalorder %s24, 0
    %p156 = por %p154, %p155
    %s158 = sadd.s32 %s157, 1
    %p161 = scmp.eq.s32.totalorder %s18, 1
    %p162 = scmp.ne.s32.totalorder %s157, %s159
    %p163 = scmp.eq.s32.totalorder %s18, 0
    %p164 = por %p162, %p163
    %p165 = scmp.ne.s32.totalorder %s157, %s159
    %p166 = scmp.eq.s32.totalorder %s23, 1
    %p167 = por %p165, %p166
    %p168 = scmp.ne.s32.totalorder %s159, %s160
    %p169 = scmp.eq.s32.totalorder %s23, 0
    %p170 = por %p168, %p169
    %p171 = scmp.ne.s32.totalorder %s159, %s160
    %p172 = scmp.eq.s32.totalorder %s24, 1
    %p173 = por %p171, %p172
    %p175 = scmp.ne.s32.totalorder %s160, %s174
    %p176 = scmp.eq.s32.totalorder %s24, 0
    %p177 = por %p175, %p176
    %s179 = sadd.s32 %s178, 1
    %p182 = scmp.eq.s32.totalorder %s18, 1
    %p183 = scmp.ne.s32.totalorder %s178, %s180
    %p184 = scmp.eq.s32.totalorder %s18, 0
    %p185 = por %p183, %p184
    %p186 = scmp.ne.s32.totalorder %s178, %s180
    %p187 = scmp.eq.s32.totalorder %s23, 1
    %p188 = por %p186, %p187
    %p189 = scmp.ne.s32.totalorder %s180, %s181
    %p190 = scmp.eq.s32.totalorder %s23, 0
    %p191 = por %p189, %p190
    %p192 = scmp.ne.s32.totalorder %s180, %s181
    %p193 = scmp.eq.s32.totalorder %s24, 1
    %p194 = por %p192, %p193
    %p196 = scmp.ne.s32.totalorder %s181, %s195
    %p197 = scmp.eq.s32.totalorder %s24, 0
    %p198 = por %p196, %p197
    %s200 = sadd.s32 %s199, 1
    %p203 = scmp.eq.s32.totalorder %s18, 1
    %p204 = scmp.ne.s32.totalorder %s199, %s201
    %p205 = scmp.eq.s32.totalorder %s18, 0
    %p206 = por %p204, %p205
    %p207 = scmp.ne.s32.totalorder %s199, %s201
    %p208 = scmp.eq.s32.totalorder %s23, 1
    %p209 = por %p207, %p208
    %p210 = scmp.ne.s32.totalorder %s201, %s202
    %p211 = scmp.eq.s32.totalorder %s23, 0
    %p212 = por %p210, %p211
    %p213 = scmp.ne.s32.totalorder %s201, %s202
    %p214 = scmp.eq.s32.totalorder %s24, 1
    %p215 = por %p213, %p214
    %p217 = scmp.ne.s32.totalorder %s202, %s216
    %p218 = scmp.eq.s32.totalorder %s24, 0
    %p219 = por %p217, %p218
    %s221 = sadd.s32 %s220, 1
    %p224 = scmp.eq.s32.totalorder %s18, 1
    %p225 = scmp.ne.s32.totalorder %s220, %s222
    %p226 = scmp.eq.s32.totalorder %s18, 0
    %p227 = por %p225, %p226
    %p228 = scmp.ne.s32.totalorder %s220, %s222
    %p229 = scmp.eq.s32.totalorder %s23, 1
    %p230 = por %p228, %p229
    %p231 = scmp.ne.s32.totalorder %s222, %s223
    %p232 = scmp.eq.s32.totalorder %s23, 0
    %p233 = por %p231, %p232
    %p234 = scmp.ne.s32.totalorder %s222, %s223
    %p235 = scmp.eq.s32.totalorder %s24, 1
    %p236 = por %p234, %p235
    %p238 = scmp.ne.s32.totalorder %s223, %s237
    %p239 = scmp.eq.s32.totalorder %s24, 0
    %p240 = por %p238, %p239
    %s242 = sadd.s32 %s241, 1
    %p245 = scmp.eq.s32.totalorder %s18, 1
    %p246 = scmp.ne.s32.totalorder %s241, %s243
    %p247 = scmp.eq.s32.totalorder %s18, 0
    %p248 = por %p246, %p247
    %p249 = scmp.ne.s32.totalorder %s241, %s243
    %p250 = scmp.eq.s32.totalorder %s23, 1
    %p251 = por %p249, %p250
    %p252 = scmp.ne.s32.totalorder %s243, %s244
    %p253 = scmp.eq.s32.totalorder %s23, 0
    %p254 = por %p252, %p253
    %p255 = scmp.ne.s32.totalorder %s243, %s244
    %p256 = scmp.eq.s32.totalorder %s24, 1
    %p257 = por %p255, %p256
    %p259 = scmp.ne.s32.totalorder %s244, %s258
    %p260 = scmp.eq.s32.totalorder %s24, 0
    %p261 = por %p259, %p260
    %s263 = sadd.s32 %s262, 1
    %p266 = scmp.eq.s32.totalorder %s18, 1
    %p267 = scmp.ne.s32.totalorder %s262, %s264
    %p268 = scmp.eq.s32.totalorder %s18, 0
    %p269 = por %p267, %p268
    %p270 = scmp.ne.s32.totalorder %s262, %s264
    %p271 = scmp.eq.s32.totalorder %s23, 1
    %p272 = por %p270, %p271
    %p273 = scmp.ne.s32.totalorder %s264, %s265
    %p274 = scmp.eq.s32.totalorder %s23, 0
    %p275 = por %p273, %p274
    %p276 = scmp.ne.s32.totalorder %s264, %s265
    %p277 = scmp.eq.s32.totalorder %s24, 1
    %p278 = por %p276, %p277
    %p280 = scmp.ne.s32.totalorder %s265, %s279
    %p281 = scmp.eq.s32.totalorder %s24, 0
    %p282 = por %p280, %p281
    %s283 = ssub.s32 %s18, %s25
    %p284 = scmp.eq.s32.totalorder %s283, 0
    %s286 = sadd.s32 %s285, 1
    %s287 = scalar_select %p284, %s285, %s286
    %p290 = pneg %p284
    %p291 = scmp.eq.s32.totalorder %s18, 1
    %p292 = por %p290, %p291
    %p293 = scmp.ne.s32.totalorder %s285, %s288
    %p294 = scmp.eq.s32.totalorder %s18, 0
    %p295 = por %p293, %p294
    %p296 = scmp.ne.s32.totalorder %s285, %s288
    %p297 = scmp.eq.s32.totalorder %s23, 1
    %p298 = por %p296, %p297
    %p299 = scmp.ne.s32.totalorder %s288, %s289
    %p300 = scmp.eq.s32.totalorder %s23, 0
    %p301 = por %p299, %p300
    %p302 = scmp.ne.s32.totalorder %s288, %s289
    %p303 = scmp.eq.s32.totalorder %s24, 1
    %p304 = por %p302, %p303
    %p306 = scmp.ne.s32.totalorder %s289, %s305
    %p307 = scmp.eq.s32.totalorder %s24, 0
    %p308 = por %p306, %p307
    %p309 = scmp.le.s32.totalorder 1, %s18
    %p310 = scmp.lt.s32.totalorder %s18, 3
    %p311 = pnand %p309, %p310
    %p312 = pneg %p311
    // Predicated region
    $region9: #{residual_dense_block.1} parent=5 // pred_check
      _
    $region10: #{residual_dense_block.1} parent=5 // pred_check_branch
      %314 = sbr.rel (%p311) target = $region12
    $region11: #{residual_dense_block.1} parent=5 // pred_region
      %s315 = ssub.s32 %s18, 1
      // Predicated region
      $region13: #{residual_dense_block.1} parent=11 // pred_check
        %p316 = pneg %p65
      $region14: #{residual_dense_block.1} parent=11 // pred_check_branch
        %318 = sbr.rel (%p316) target = $region16
      $region15: #{residual_dense_block.1} parent=11 // pred_region
        _
      $region16: #{residual_dense_block.1} parent=11 // pred_fallthru
        _
      // Predicated region
      $region17: #{residual_dense_block.1} parent=11 // pred_check
        %p319 = pneg %p86
      $region18: #{residual_dense_block.1} parent=11 // pred_check_branch
        %321 = sbr.rel (%p319) target = $region20
      $region19: #{residual_dense_block.1} parent=11 // pred_region
        _
      $region20: #{residual_dense_block.1} parent=11 // pred_fallthru
        _
      // Predicated region
      $region21: #{residual_dense_block.1} parent=11 // pred_check
        %p322 = pneg %p107
      $region22: #{residual_dense_block.1} parent=11 // pred_check_branch
        %324 = sbr.rel (%p322) target = $region24
      $region23: #{residual_dense_block.1} parent=11 // pred_region
        _
      $region24: #{residual_dense_block.1} parent=11 // pred_fallthru
        _
      // Predicated region
      $region25: #{residual_dense_block.1} parent=11 // pred_check
        %p325 = pneg %p128
      $region26: #{residual_dense_block.1} parent=11 // pred_check_branch
        %327 = sbr.rel (%p325) target = $region28
      $region27: #{residual_dense_block.1} parent=11 // pred_region
        _
      $region28: #{residual_dense_block.1} parent=11 // pred_fallthru
        _
      // Predicated region
      $region29: #{residual_dense_block.1} parent=11 // pred_check
        %p328 = pneg %p149
      $region30: #{residual_dense_block.1} parent=11 // pred_check_branch
        %330 = sbr.rel (%p328) target = $region32
      $region31: #{residual_dense_block.1} parent=11 // pred_region
        _
      $region32: #{residual_dense_block.1} parent=11 // pred_fallthru
        _
      // Predicated region
      $region33: #{residual_dense_block.1} parent=11 // pred_check
        %p331 = pneg %p170
      $region34: #{residual_dense_block.1} parent=11 // pred_check_branch
        %333 = sbr.rel (%p331) target = $region36
      $region35: #{residual_dense_block.1} parent=11 // pred_region
        _
      $region36: #{residual_dense_block.1} parent=11 // pred_fallthru
        _
      // Predicated region
      $region37: #{residual_dense_block.1} parent=11 // pred_check
        %p334 = pneg %p191
      $region38: #{residual_dense_block.1} parent=11 // pred_check_branch
        %336 = sbr.rel (%p334) target = $region40
      $region39: #{residual_dense_block.1} parent=11 // pred_region
        _
      $region40: #{residual_dense_block.1} parent=11 // pred_fallthru
        _
      // Predicated region
      $region41: #{residual_dense_block.1} parent=11 // pred_check
        %p337 = pneg %p212
      $region42: #{residual_dense_block.1} parent=11 // pred_check_branch
        %339 = sbr.rel (%p337) target = $region44
      $region43: #{residual_dense_block.1} parent=11 // pred_region
        _
      $region44: #{residual_dense_block.1} parent=11 // pred_fallthru
        _
      // Predicated region
      $region45: #{residual_dense_block.1} parent=11 // pred_check
        %p340 = pneg %p233
      $region46: #{residual_dense_block.1} parent=11 // pred_check_branch
        %342 = sbr.rel (%p340) target = $region48
      $region47: #{residual_dense_block.1} parent=11 // pred_region
        _
      $region48: #{residual_dense_block.1} parent=11 // pred_fallthru
        _
      // Predicated region
      $region49: #{residual_dense_block.1} parent=11 // pred_check
        %p343 = pneg %p254
      $region50: #{residual_dense_block.1} parent=11 // pred_check_branch
        %345 = sbr.rel (%p343) target = $region52
      $region51: #{residual_dense_block.1} parent=11 // pred_region
        _
      $region52: #{residual_dense_block.1} parent=11 // pred_fallthru
        _
      // Predicated region
      $region53: #{residual_dense_block.1} parent=11 // pred_check
        %p346 = pneg %p275
      $region54: #{residual_dense_block.1} parent=11 // pred_check_branch
        %348 = sbr.rel (%p346) target = $region56
      $region55: #{residual_dense_block.1} parent=11 // pred_region
        _
      $region56: #{residual_dense_block.1} parent=11 // pred_fallthru
        _
    $region12: #{residual_dense_block.1} parent=5 // pred_fallthru
      _
    %p349 = scmp.lt.s32.totalorder %s18, 2
    // Predicated region
    $region57: #{residual_dense_block.1} parent=5 // pred_check
      %p350 = pneg %p349
    $region58: #{residual_dense_block.1} parent=5 // pred_check_branch
      %352 = sbr.rel (%p350) target = $region60
    $region59: #{residual_dense_block.1} parent=5 // pred_region
      // Predicated region
      $region61: #{residual_dense_block.1} parent=59 // pred_check
        %p353 = pneg %p38
      $region62: #{residual_dense_block.1} parent=59 // pred_check_branch
        %355 = sbr.rel (%p353) target = $region64
      $region63: #{residual_dense_block.1} parent=59 // pred_region
        %p356 = scmp.lt.s32.totalorder %s18, 1
        %s357 = scalar_select %p356, %s18, 1
        %s358 = smul.addr %s357, 2
        %s359 = smul.addr %s358, 4
        %s360 = scalar_lea.vmem %s0, %s359
      $region64: #{residual_dense_block.1} parent=59 // pred_fallthru
        _
    $region60: #{residual_dense_block.1} parent=5 // pred_fallthru
      _
    %p361 = scmp.le.s32.totalorder 1, %s18
    %p362 = scmp.lt.s32.totalorder %s18, 3
    %p363 = pnand %p361, %p362
    %p364 = pneg %p363
    // Predicated region
    $region65: #{residual_dense_block.1} parent=5 // pred_check
      _
    $region66: #{residual_dense_block.1} parent=5 // pred_check_branch
      %366 = sbr.rel (%p363) target = $region68
    $region67: #{residual_dense_block.1} parent=5 // pred_region
      %s367 = ssub.s32 %s18, 1
      %p368 = scmp.lt.s32.totalorder %s23, 1
      %s369 = scalar_select %p368, %s23, 1
      %s370 = smul.addr %s369, 2
      %s371 = smul.addr %s370, 4
      %s372 = scalar_lea.vmem %s0, %s371
      %p373 = pneg %p44
      %p374 = pneg %p41
      %p375 = pneg %p65
      %p376 = pneg %p62
      %p377 = pneg %p86
      %p378 = pneg %p83
      %p379 = pneg %p107
      %p380 = pneg %p104
      %p381 = pneg %p128
      %p382 = pneg %p125
      %p383 = pneg %p149
      %p384 = pneg %p146
      %p385 = pneg %p170
      %p386 = pneg %p167
      %p387 = pneg %p191
      %p388 = pneg %p188
      %p389 = pneg %p212
      %p390 = pneg %p209
      %p391 = pneg %p233
      %p392 = pneg %p230
      %p393 = pneg %p254
      %p394 = pneg %p251
      %p395 = pneg %p275
      %p396 = pneg %p272
      %p397 = pneg %p301
      %p398 = pneg %p298
      %p399 = scmp.lt.s32.totalorder %s23, 1
      %s400 = scalar_select %p399, %s23, 1
      %s401 = smul.addr %s400, 2
      %s402 = smul.addr %s401, 4
      %s403 = scalar_lea.vmem %s12, %s402
      %p404 = scmp.lt.s32.totalorder %s23, 1
      %s405 = scalar_select %p404, %s23, 1
      %s406 = smul.addr %s405, 2
      %s407 = smul.addr %s406, 4
      %s408 = scalar_lea.vmem %s0, %s407
      %p409 = scmp.lt.s32.totalorder %s23, 1
      %s410 = scalar_select %p409, %s23, 1
      %s411 = smul.addr %s410, 2
      %s412 = smul.addr %s411, 4
      %s413 = scalar_lea.vmem %s12, %s412
      %v415 = vld [vmem:[%s1] sm:$0xff]
      %v416 = vld [vmem:[%s1 + $0x8] sm:$0xff]
      %v417 = vld [vmem:[%s1 + $0x10] sm:$0x1]
      %v418 = vld [vmem:[%s1 + $0x18] sm:$0x1]
      %v419 = vld [vmem:[%s408] sm:$0xff]
      %v421 = vcombine.high %v419, %v419
      %vm423 = vcmask 1043456
      %v424 = vsel %vm423, %v419, 0.0
      %v425 = vsel %vm423, %v421, 0.0
      %426 = vrot.lane.b32.xlu0 %v424, 17
      %v427 = vpop.permute.xlu0 %426
      %428 = vrot.lane.b32.xlu0 %v425, 17
      %v429 = vpop.permute.xlu0 %428
      %v430 = vlaneseq
      %v431 = vand.u32 %v430, 127
      %vm432 = vcmp.lt.s32.totalorder %v431, 17
      %v433 = vsel %vm432, %v427, %v429
      %v434 = vsel %vm432, %v429, %v427
      %v435 = vlaneseq
      %v436 = vshrl.u32 %v435, 7
      %v437 = vsub.s32 0, %v436
      %v438 = vrot.slane %v415, %v437
      %v439 = vlaneseq
      %v440 = vshrl.u32 %v439, 7
      %v441 = vsub.s32 0, %v440
      %v442 = vrot.slane %v416, %v441
      %v443 = vmul.f32 %v434, %v438
      %v444 = vmul.f32 %v433, %v442
      %v445 = vpack.c.bf16 %v443, %v443
      %v446 = vpack.c.bf16 %v444, %v444
      %v449 = vunpack.c.l.b16 %v445
      %v450 = vunpack.c.l.b16 %v446
      %v451 = vpack.c.b16 %v450, %v449
      %453 = vst [vmem:[#allocation2] sm:$0xff] %v451
      %454 = vrot.lane.b32.xlu0 %v424, 16
      %v455 = vpop.permute.xlu0 %454
      %456 = vrot.lane.b32.xlu0 %v425, 16
      %v457 = vpop.permute.xlu0 %456
      %vm458 = vcmp.lt.s32.totalorder %v431, 16
      %v459 = vsel %vm458, %v455, %v457
      %v460 = vsel %vm458, %v457, %v455
      %v461 = vlaneseq
      %v462 = vshrl.u32 %v461, 7
      %v463 = vsub.s32 1, %v462
      %v464 = vrot.slane %v415, %v463
      %v465 = vlaneseq
      %v466 = vshrl.u32 %v465, 7
      %v467 = vsub.s32 1, %v466
      %v468 = vrot.slane %v416, %v467
      %v469 = vmul.f32 %v460, %v464
      %v470 = vmul.f32 %v459, %v468
      %v471 = vpack.c.bf16 %v469, %v469
      %v472 = vpack.c.bf16 %v470, %v470
      %v475 = vunpack.c.l.b16 %v471
      %v476 = vunpack.c.l.b16 %v472
      %v477 = vpack.c.b16 %v476, %v475
      %479 = vst [vmem:[#allocation2 + $0x8] sm:$0xff] %v477
      %480 = vrot.lane.b32.xlu0 %v424, 15
      %v481 = vpop.permute.xlu0 %480
      %482 = vrot.lane.b32.xlu0 %v425, 15
      %v483 = vpop.permute.xlu0 %482
      %vm484 = vcmp.lt.s32.totalorder %v431, 15
      %v485 = vsel %vm484, %v481, %v483
      %v486 = vsel %vm484, %v483, %v481
      %v487 = vlaneseq
      %v488 = vshrl.u32 %v487, 7
      %v489 = vsub.s32 2, %v488
      %v490 = vrot.slane %v415, %v489
      %v491 = vlaneseq
      %v492 = vshrl.u32 %v491, 7
      %v493 = vsub.s32 2, %v492
      %v494 = vrot.slane %v416, %v493
      %v495 = vmul.f32 %v486, %v490
      %v496 = vmul.f32 %v485, %v494
      %v497 = vpack.c.bf16 %v495, %v495
      %v498 = vpack.c.bf16 %v496, %v496
      %v501 = vunpack.c.l.b16 %v497
      %v502 = vunpack.c.l.b16 %v498
      %v503 = vpack.c.b16 %v502, %v501
      %505 = vst [vmem:[#allocation2 + $0x10] sm:$0xff] %v503
      %506 = vrot.lane.b32.xlu0 %v424, 1
      %v507 = vpop.permute.xlu0 %506
      %508 = vrot.lane.b32.xlu0 %v425, 1
      %v509 = vpop.permute.xlu0 %508
      %vm510 = vcmp.lt.s32.totalorder %v431, 1
      %v511 = vsel %vm510, %v507, %v509
      %v512 = vsel %vm510, %v509, %v507
      %v513 = vlaneseq
      %v514 = vshrl.u32 %v513, 7
      %v515 = vsub.s32 3, %v514
      %v516 = vrot.slane %v415, %v515
      %v517 = vlaneseq
      %v518 = vshrl.u32 %v517, 7
      %v519 = vsub.s32 3, %v518
      %v520 = vrot.slane %v416, %v519
      %v521 = vmul.f32 %v512, %v516
      %v522 = vmul.f32 %v511, %v520
      %v523 = vpack.c.bf16 %v521, %v521
      %v524 = vpack.c.bf16 %v522, %v522
      %v527 = vunpack.c.l.b16 %v523
      %v528 = vunpack.c.l.b16 %v524
      %v529 = vpack.c.b16 %v528, %v527
      %531 = vst [vmem:[#allocation2 + $0x18] sm:$0xff] %v529
      %v532 = vpack.c.bf16 %v424, %v424
      %v533 = vpack.c.bf16 %v425, %v425
      %v536 = vunpack.c.l.b16 %v532
      %v537 = vunpack.c.l.b16 %v533
      %v538 = vpack.c.b16 %v537, %v536
      %540 = vst [vmem:[#allocation2 + $0x20] sm:$0xff] %v538
      %541 = vrot.lane.b32.xlu0 %v424, 127
      %v542 = vpop.permute.xlu0 %541
      %543 = vrot.lane.b32.xlu0 %v425, 127
      %v544 = vpop.permute.xlu0 %543
      %vm545 = vcmp.lt.s32.totalorder %v431, 127
      %v546 = vsel %vm545, %v542, %v544
      %v547 = vsel %vm545, %v544, %v542
      %v548 = vlaneseq
      %v549 = vshrl.u32 %v548, 7
      %v550 = vsub.s32 5, %v549
      %v551 = vrot.slane %v415, %v550
      %v552 = vlaneseq
      %v553 = vshrl.u32 %v552, 7
      %v554 = vsub.s32 5, %v553
      %v555 = vrot.slane %v416, %v554
      %v556 = vmul.f32 %v546, %v551
      %v557 = vmul.f32 %v547, %v555
      %v558 = vpack.c.bf16 %v556, %v556
      %v559 = vpack.c.bf16 %v557, %v557
      %v562 = vunpack.c.l.b16 %v558
      %v563 = vunpack.c.l.b16 %v559
      %v564 = vpack.c.b16 %v563, %v562
      %566 = vst [vmem:[#allocation2 + $0x28] sm:$0xff] %v564
      %567 = vrot.lane.b32.xlu0 %v424, 113
      %v568 = vpop.permute.xlu0 %567
      %569 = vrot.lane.b32.xlu0 %v425, 113
      %v570 = vpop.permute.xlu0 %569
      %vm571 = vcmp.lt.s32.totalorder %v431, 113
      %v572 = vsel %vm571, %v568, %v570
      %v573 = vsel %vm571, %v570, %v568
      %v574 = vlaneseq
      %v575 = vshrl.u32 %v574, 7
      %v576 = vsub.s32 6, %v575
      %v577 = vrot.slane %v415, %v576
      %v578 = vlaneseq
      %v579 = vshrl.u32 %v578, 7
      %v580 = vsub.s32 6, %v579
      %v581 = vrot.slane %v416, %v580
      %v582 = vmul.f32 %v572, %v577
      %v583 = vmul.f32 %v573, %v581
      %v584 = vpack.c.bf16 %v582, %v582
      %v585 = vpack.c.bf16 %v583, %v583
      %v588 = vunpack.c.l.b16 %v584
      %v589 = vunpack.c.l.b16 %v585
      %v590 = vpack.c.b16 %v589, %v588
      %592 = vst [vmem:[#allocation2 + $0x30] sm:$0xff] %v590
      %593 = vrot.lane.b32.xlu0 %v424, 112
      %v594 = vpop.permute.xlu0 %593
      %595 = vrot.lane.b32.xlu0 %v425, 112
      %v596 = vpop.permute.xlu0 %595
      %vm597 = vcmp.lt.s32.totalorder %v431, 112
      %v598 = vsel %vm597, %v594, %v596
      %v599 = vsel %vm597, %v596, %v594
      %v600 = vlaneseq
      %v601 = vshrl.u32 %v600, 7
      %v602 = vsub.s32 7, %v601
      %v603 = vrot.slane %v415, %v602
      %v604 = vlaneseq
      %v605 = vshrl.u32 %v604, 7
      %v606 = vsub.s32 7, %v605
      %v607 = vrot.slane %v416, %v606
      %v608 = vmul.f32 %v598, %v603
      %v609 = vmul.f32 %v599, %v607
      %v610 = vpack.c.bf16 %v608, %v608
      %v611 = vpack.c.bf16 %v609, %v609
      %v614 = vunpack.c.l.b16 %v610
      %v615 = vunpack.c.l.b16 %v611
      %v616 = vpack.c.b16 %v615, %v614
      %618 = vst [vmem:[#allocation2 + $0x38] sm:$0xff] %v616
      %619 = vrot.lane.b32.xlu0 %v424, 111
      %v620 = vpop.permute.xlu0 %619
      %621 = vrot.lane.b32.xlu0 %v425, 111
      %v622 = vpop.permute.xlu0 %621
      %vm623 = vcmp.lt.s32.totalorder %v431, 111
      %v624 = vsel %vm623, %v620, %v622
      %v625 = vsel %vm623, %v622, %v620
      %v626 = vlaneseq
      %v627 = vshrl.u32 %v626, 7
      %v628 = vsub.s32 0, %v627
      %v629 = vrot.slane %v417, %v628
      %v630 = vlaneseq
      %v631 = vshrl.u32 %v630, 7
      %v632 = vsub.s32 0, %v631
      %v633 = vrot.slane %v418, %v632
      %v634 = vmul.f32 %v624, %v629
      %v635 = vmul.f32 %v625, %v633
      %v636 = vpack.c.bf16 %v634, %v634
      %v637 = vpack.c.bf16 %v635, %v635
      %v640 = vunpack.c.l.b16 %v636
      %v641 = vunpack.c.l.b16 %v637
      %v642 = vpack.c.b16 %v641, %v640
      %644 = vst [vmem:[#allocation2 + $0x40] sm:$0xff] %v642
      %v645 = vld [vmem:[%s2] sm:$0xf]
      %v646 = vld [vmem:[%s2 + $0x4] sm:$0xf]
      %v647 = vld [vmem:[%s2 + $0x8] sm:$0xf]
      %v648 = vld [vmem:[%s2 + $0xc] sm:$0xf]
      %v649 = vld [vmem:[#allocation2] sm:$0xff]
      %v650 = vld [vmem:[#allocation2 + $0x8] sm:$0xff]
      %v651 = vld [vmem:[#allocation2 + $0x10] sm:$0xff]
      %v652 = vld [vmem:[#allocation2 + $0x18] sm:$0xff]
      %v653 = vld [vmem:[#allocation2 + $0x20] sm:$0xff]
      %v654 = vld [vmem:[#allocation2 + $0x28] sm:$0xff]
      %v655 = vld [vmem:[#allocation2 + $0x30] sm:$0xff]
      %v656 = vld [vmem:[#allocation2 + $0x38] sm:$0xff]
      %v657 = vld [vmem:[#allocation2 + $0x40] sm:$0xff]
      %v658 = vld [vmem:[%s7] sm:$0xff]
      %v659 = vld [vmem:[%s7 + $0x8] sm:$0xff]
      %v660 = vld [vmem:[%s7 + $0x10] sm:$0xff]
      %v661 = vld [vmem:[%s7 + $0x18] sm:$0xff]
      %663 = vset.pattern.permute.xlu0 0
      %664 = vperm.xlu0 %663, %v658
      %v665 = vpop.permute.xlu0 %664
      %668 = vset.pattern.permute.xlu0 0
      %669 = vperm.xlu0 %668, %v659
      %v670 = vpop.permute.xlu0 %669
      %673 = vset.pattern.permute.xlu0 0
      %674 = vperm.xlu0 %673, %v660
      %v675 = vpop.permute.xlu0 %674
      %678 = vset.pattern.permute.xlu0 0
      %679 = vperm.xlu0 %678, %v661
      %v680 = vpop.permute.xlu0 %679
      %v686 = vunpack.c.l.b16 %v645
      %v687 = vunpack.c.l.b16 %v646
      %v688 = vunpack.c.l.b16 %v647
      %v689 = vunpack.c.l.b16 %v648
      %v690 = vpack.c.b16 %v687, %v686
      %v691 = vpack.c.b16 %v689, %v688
      %v701 = vunpack.c.l.b16 %v649
      %v702 = vunpack.c.h.b16 %v649
      %v703 = vunpack.c.l.b16 %v650
      %v704 = vunpack.c.h.b16 %v650
      %v705 = vunpack.c.l.b16 %v651
      %v706 = vunpack.c.h.b16 %v651
      %v707 = vunpack.c.l.b16 %v652
      %v708 = vunpack.c.h.b16 %v652
      %v709 = vunpack.c.l.b16 %v653
      %v710 = vunpack.c.h.b16 %v653
      %v711 = vunpack.c.l.b16 %v654
      %v712 = vunpack.c.h.b16 %v654
      %v713 = vunpack.c.l.b16 %v655
      %v714 = vunpack.c.h.b16 %v655
      %v715 = vunpack.c.l.b16 %v656
      %v716 = vunpack.c.h.b16 %v656
      %v717 = vunpack.c.l.b16 %v657
      %v718 = vunpack.c.h.b16 %v657
      %v719 = vpack.c.b16 %v703, %v701
      %v720 = vpack.c.b16 %v704, %v702
      %v721 = vpack.c.b16 %v707, %v705
      %v722 = vpack.c.b16 %v708, %v706
      %v723 = vpack.c.b16 %v711, %v709
      %v724 = vpack.c.b16 %v712, %v710
      %v725 = vpack.c.b16 %v715, %v713
      %v726 = vpack.c.b16 %v716, %v714
      %v727 = vpack.c.b16 %v717, %v717
      %v728 = vpack.c.b16 %v718, %v718
      %vm737 = vcmask 588800
      %v739 = vsel %vm737, %v690, 0
      %v742 = vsel %vm737, %v691, 0
      %v745 = vsel %vm423, %v727, 0
      %v748 = vsel %vm423, %v728, 0
      %750 = vmatprep.subr.bf16.mxu0 %v720
      %751 = vmatpush1.bf16.msra.mxu0 %v719
      %752 = vmatprep.subr.bf16.mxu0 %v722
      %753 = vmatpush1.bf16.msra.mxu0 %v721
      %754 = vmatprep.subr.bf16.mxu0 %v724
      %755 = vmatpush1.bf16.msra.mxu0 %v723
      %756 = vmatprep.subr.bf16.mxu0 %v726
      %757 = vmatpush1.bf16.msra.mxu0 %v725
      %758 = vmatprep.subr.bf16.mxu0 %v748
      %759 = vmatpush1.bf16.msra.mxu0 %v745
      %760 = vmatprep.subr.bf16.mxu0 0
      %761 = vmatpush1.bf16.msra.mxu0 0
      %762 = vmatprep.subr.bf16.mxu0 0
      %763 = vmatpush1.bf16.msra.mxu0 0
      %764 = vmatprep.subr.bf16.mxu0 0
      %765 = vmatpush1.bf16.msra.mxu0 0
      %766 = vmatprep.subr.bf16.mxu0 0
      %767 = vmatpush1.bf16.msra.mxu0 0
      %768 = vmatprep.subr.bf16.mxu0 0
      %769 = vmatpush1.bf16.msra.mxu0 0
      %770 = vmatprep.subr.bf16.mxu0 0
      %771 = vmatpush1.bf16.msra.mxu0 0
      %772 = vmatprep.subr.bf16.mxu0 0
      %773 = vmatpush1.bf16.msra.mxu0 0
      %774 = vmatprep.subr.bf16.mxu0 0
      %775 = vmatpush1.bf16.msra.mxu0 0
      %776 = vmatprep.subr.bf16.mxu0 0
      %777 = vmatpush1.bf16.msra.mxu0 0
      %778 = vmatprep.subr.bf16.mxu0 0
      %779 = vmatpush1.bf16.msra.mxu0 0
      %780 = vmatprep.subr.bf16.mxu0 0
      %781 = vmatpush1.bf16.msra.mxu0 0
      %782 = vmatprep.mubr.bf16.mxu0 0
      %783 = vmatmul.mubr.bf16.gmra.mrb[0].mxu0 %v739
      %v784 = vpop.f32.mrb[0].mxu0
      %v785 = vadd.f32 %v665, %v784
      %v786 = vpop.f32.mrb[0].mxu0
      %v787 = vadd.f32 %v665, %v786
      %v788 = vpop.f32.mrb[0].mxu0
      %v789 = vadd.f32 %v670, %v788
      %v790 = vpop.f32.mrb[0].mxu0
      %v791 = vadd.f32 %v670, %v790
      %792 = vmatprep.mubr.bf16.mxu0 0
      %793 = vmatmul.mubr.bf16.gmra.mrb[0].mxu0 %v742
      %v794 = vpop.f32.mrb[0].mxu0
      %v795 = vadd.f32 %v675, %v794
      %v796 = vpop.f32.mrb[0].mxu0
      %v797 = vadd.f32 %v675, %v796
      %v798 = vpop.f32.mrb[0].mxu0
      %v799 = vadd.f32 %v680, %v798
      %v800 = vpop.f32.mrb[0].mxu0
      %v801 = vadd.f32 %v680, %v800
      %802 = vdwg.mxu0
      %v803 = vmul.f32 %v785, 0.2
      %v804 = vmul.f32 %v787, 0.2
      %v805 = vmul.f32 %v789, 0.2
      %v806 = vmul.f32 %v791, 0.2
      %v807 = vmul.f32 %v795, 0.2
      %v808 = vmul.f32 %v797, 0.2
      %v809 = vmul.f32 %v799, 0.2
      %v810 = vmul.f32 %v801, 0.2
      %v811 = vmax.f32 %v785, %v803
      %v812 = vmax.f32 %v787, %v804
      %v813 = vmax.f32 %v789, %v805
      %v814 = vmax.f32 %v791, %v806
      %v815 = vmax.f32 %v795, %v807
      %v816 = vmax.f32 %v797, %v808
      %v817 = vmax.f32 %v799, %v809
      %v818 = vmax.f32 %v801, %v810
      %819 = vrot.lane.b32.xlu0 %v811, 17
      %v820 = vpop.permute.xlu0 %819
      %821 = vrot.lane.b32.xlu0 %v813, 17
      %v822 = vpop.permute.xlu0 %821
      %823 = vrot.lane.b32.xlu0 %v815, 17
      %v824 = vpop.permute.xlu0 %823
      %825 = vrot.lane.b32.xlu0 %v817, 17
      %v826 = vpop.permute.xlu0 %825
      %827 = vrot.lane.b32.xlu0 %v812, 17
      %v828 = vpop.permute.xlu0 %827
      %829 = vrot.lane.b32.xlu0 %v814, 17
      %v830 = vpop.permute.xlu0 %829
      %831 = vrot.lane.b32.xlu0 %v816, 17
      %v832 = vpop.permute.xlu0 %831
      %833 = vrot.lane.b32.xlu0 %v818, 17
      %v834 = vpop.permute.xlu0 %833
      %v835 = vsel %vm432, %v820, %v828
      %v836 = vsel %vm432, %v822, %v830
      %v837 = vsel %vm432, %v824, %v832
      %v838 = vsel %vm432, %v826, %v834
      %v839 = vsel %vm432, %v828, %v820
      %v840 = vsel %vm432, %v830, %v822
      %v841 = vsel %vm432, %v832, %v824
      %v842 = vsel %vm432, %v834, %v826
      %v843 = vmul.f32 %v839, %v438
      %v844 = vmul.f32 %v835, %v442
      %v845 = vmul.f32 %v840, %v438
      %v846 = vmul.f32 %v836, %v442
      %v847 = vmul.f32 %v841, %v438
      %v848 = vmul.f32 %v837, %v442
      %v849 = vmul.f32 %v842, %v438
      %v850 = vmul.f32 %v838, %v442
      %v851 = vpack.c.bf16 %v845, %v843
      %v852 = vpack.c.bf16 %v846, %v844
      %v853 = vpack.c.bf16 %v849, %v847
      %v854 = vpack.c.bf16 %v850, %v848
      %v859 = vunpack.c.l.b16 %v851
      %v860 = vunpack.c.l.b16 %v852
      %v861 = vunpack.c.h.b16 %v851
      %v862 = vunpack.c.h.b16 %v852
      %v863 = vunpack.c.l.b16 %v853
      %v864 = vunpack.c.l.b16 %v854
      %v865 = vunpack.c.h.b16 %v853
      %v866 = vunpack.c.h.b16 %v854
      %v867 = vpack.c.b16 %v860, %v859
      %v868 = vpack.c.b16 %v862, %v861
      %v869 = vpack.c.b16 %v864, %v863
      %v870 = vpack.c.b16 %v866, %v865
      %875 = vst [vmem:[#allocation2 + $0x48] sm:$0xff] %v867
      %876 = vst [vmem:[#allocation2 + $0x50] sm:$0xff] %v868
      %877 = vst [vmem:[#allocation2 + $0x58] sm:$0xff] %v869
      %878 = vst [vmem:[#allocation2 + $0x60] sm:$0xff] %v870
      %879 = vrot.lane.b32.xlu0 %v811, 16
      %v880 = vpop.permute.xlu0 %879
      %881 = vrot.lane.b32.xlu0 %v813, 16
      %v882 = vpop.permute.xlu0 %881
      %883 = vrot.lane.b32.xlu0 %v815, 16
      %v884 = vpop.permute.xlu0 %883
      %885 = vrot.lane.b32.xlu0 %v817, 16
      %v886 = vpop.permute.xlu0 %885
      %887 = vrot.lane.b32.xlu0 %v812, 16
      %v888 = vpop.permute.xlu0 %887
      %889 = vrot.lane.b32.xlu0 %v814, 16
      %v890 = vpop.permute.xlu0 %889
      %891 = vrot.lane.b32.xlu0 %v816, 16
      %v892 = vpop.permute.xlu0 %891
      %893 = vrot.lane.b32.xlu0 %v818, 16
      %v894 = vpop.permute.xlu0 %893
      %v895 = vsel %vm458, %v880, %v888
      %v896 = vsel %vm458, %v882, %v890
      %v897 = vsel %vm458, %v884, %v892
      %v898 = vsel %vm458, %v886, %v894
      %v899 = vsel %vm458, %v888, %v880
      %v900 = vsel %vm458, %v890, %v882
      %v901 = vsel %vm458, %v892, %v884
      %v902 = vsel %vm458, %v894, %v886
      %v903 = vmul.f32 %v899, %v464
      %v904 = vmul.f32 %v895, %v468
      %v905 = vmul.f32 %v900, %v464
      %v906 = vmul.f32 %v896, %v468
      %v907 = vmul.f32 %v901, %v464
      %v908 = vmul.f32 %v897, %v468
      %v909 = vmul.f32 %v902, %v464
      %v910 = vmul.f32 %v898, %v468
      %v911 = vpack.c.bf16 %v905, %v903
      %v912 = vpack.c.bf16 %v906, %v904
      %v913 = vpack.c.bf16 %v909, %v907
      %v914 = vpack.c.bf16 %v910, %v908
      %v919 = vunpack.c.l.b16 %v911
      %v920 = vunpack.c.l.b16 %v912
      %v921 = vunpack.c.h.b16 %v911
      %v922 = vunpack.c.h.b16 %v912
      %v923 = vunpack.c.l.b16 %v913
      %v924 = vunpack.c.l.b16 %v914
      %v925 = vunpack.c.h.b16 %v913
      %v926 = vunpack.c.h.b16 %v914
      %v927 = vpack.c.b16 %v920, %v919
      %v928 = vpack.c.b16 %v922, %v921
      %v929 = vpack.c.b16 %v924, %v923
      %v930 = vpack.c.b16 %v926, %v925
      %935 = vst [vmem:[#allocation2 + $0x68] sm:$0xff] %v927
      %936 = vst [vmem:[#allocation2 + $0x70] sm:$0xff] %v928
      %937 = vst [vmem:[#allocation2 + $0x78] sm:$0xff] %v929
      %938 = vst [vmem:[#allocation2 + $0x80] sm:$0xff] %v930
      %939 = vrot.lane.b32.xlu0 %v811, 15
      %v940 = vpop.permute.xlu0 %939
      %941 = vrot.lane.b32.xlu0 %v813, 15
      %v942 = vpop.permute.xlu0 %941
      %943 = vrot.lane.b32.xlu0 %v815, 15
      %v944 = vpop.permute.xlu0 %943
      %945 = vrot.lane.b32.xlu0 %v817, 15
      %v946 = vpop.permute.xlu0 %945
      %947 = vrot.lane.b32.xlu0 %v812, 15
      %v948 = vpop.permute.xlu0 %947
      %949 = vrot.lane.b32.xlu0 %v814, 15
      %v950 = vpop.permute.xlu0 %949
      %951 = vrot.lane.b32.xlu0 %v816, 15
      %v952 = vpop.permute.xlu0 %951
      %953 = vrot.lane.b32.xlu0 %v818, 15
      %v954 = vpop.permute.xlu0 %953
      %v955 = vsel %vm484, %v940, %v948
      %v956 = vsel %vm484, %v942, %v950
      %v957 = vsel %vm484, %v944, %v952
      %v958 = vsel %vm484, %v946, %v954
      %v959 = vsel %vm484, %v948, %v940
      %v960 = vsel %vm484, %v950, %v942
      %v961 = vsel %vm484, %v952, %v944
      %v962 = vsel %vm484, %v954, %v946
      %v963 = vmul.f32 %v959, %v490
      %v964 = vmul.f32 %v955, %v494
      %v965 = vmul.f32 %v960, %v490
      %v966 = vmul.f32 %v956, %v494
      %v967 = vmul.f32 %v961, %v490
      %v968 = vmul.f32 %v957, %v494
      %v969 = vmul.f32 %v962, %v490
      %v970 = vmul.f32 %v958, %v494
      %v971 = vpack.c.bf16 %v965, %v963
      %v972 = vpack.c.bf16 %v966, %v964
      %v973 = vpack.c.bf16 %v969, %v967
      %v974 = vpack.c.bf16 %v970, %v968
      %v979 = vunpack.c.l.b16 %v971
      %v980 = vunpack.c.l.b16 %v972
      %v981 = vunpack.c.h.b16 %v971
      %v982 = vunpack.c.h.b16 %v972
      %v983 = vunpack.c.l.b16 %v973
      %v984 = vunpack.c.l.b16 %v974
      %v985 = vunpack.c.h.b16 %v973
      %v986 = vunpack.c.h.b16 %v974
      %v987 = vpack.c.b16 %v980, %v979
      %v988 = vpack.c.b16 %v982, %v981
      %v989 = vpack.c.b16 %v984, %v983
      %v990 = vpack.c.b16 %v986, %v985
      %995 = vst [vmem:[#allocation2 + $0x88] sm:$0xff] %v987
      %996 = vst [vmem:[#allocation2 + $0x90] sm:$0xff] %v988
      %997 = vst [vmem:[#allocation2 + $0x98] sm:$0xff] %v989
      %998 = vst [vmem:[#allocation2 + $0xa0] sm:$0xff] %v990
      %999 = vrot.lane.b32.xlu0 %v811, 1
      %v1000 = vpop.permute.xlu0 %999
      %1001 = vrot.lane.b32.xlu0 %v813, 1
      %v1002 = vpop.permute.xlu0 %1001
      %1003 = vrot.lane.b32.xlu0 %v815, 1
      %v1004 = vpop.permute.xlu0 %1003
      %1005 = vrot.lane.b32.xlu0 %v817, 1
      %v1006 = vpop.permute.xlu0 %1005
      %1007 = vrot.lane.b32.xlu0 %v812, 1
      %v1008 = vpop.permute.xlu0 %1007
      %1009 = vrot.lane.b32.xlu0 %v814, 1
      %v1010 = vpop.permute.xlu0 %1009
      %1011 = vrot.lane.b32.xlu0 %v816, 1
      %v1012 = vpop.permute.xlu0 %1011
      %1013 = vrot.lane.b32.xlu0 %v818, 1
      %v1014 = vpop.permute.xlu0 %1013
      %v1015 = vsel %vm510, %v1000, %v1008
      %v1016 = vsel %vm510, %v1002, %v1010
      %v1017 = vsel %vm510, %v1004, %v1012
      %v1018 = vsel %vm510, %v1006, %v1014
      %v1019 = vsel %vm510, %v1008, %v1000
      %v1020 = vsel %vm510, %v1010, %v1002
      %v1021 = vsel %vm510, %v1012, %v1004
      %v1022 = vsel %vm510, %v1014, %v1006
      %v1023 = vmul.f32 %v1019, %v516
      %v1024 = vmul.f32 %v1015, %v520
      %v1025 = vmul.f32 %v1020, %v516
      %v1026 = vmul.f32 %v1016, %v520
      %v1027 = vmul.f32 %v1021, %v516
      %v1028 = vmul.f32 %v1017, %v520
      %v1029 = vmul.f32 %v1022, %v516
      %v1030 = vmul.f32 %v1018, %v520
      %v1031 = vpack.c.bf16 %v1025, %v1023
      %v1032 = vpack.c.bf16 %v1026, %v1024
      %v1033 = vpack.c.bf16 %v1029, %v1027
      %v1034 = vpack.c.bf16 %v1030, %v1028
      %v1039 = vunpack.c.l.b16 %v1031
      %v1040 = vunpack.c.l.b16 %v1032
      %v1041 = vunpack.c.h.b16 %v1031
      %v1042 = vunpack.c.h.b16 %v1032
      %v1043 = vunpack.c.l.b16 %v1033
      %v1044 = vunpack.c.l.b16 %v1034
      %v1045 = vunpack.c.h.b16 %v1033
      %v1046 = vunpack.c.h.b16 %v1034
      %v1047 = vpack.c.b16 %v1040, %v1039
      %v1048 = vpack.c.b16 %v1042, %v1041
      %v1049 = vpack.c.b16 %v1044, %v1043
      %v1050 = vpack.c.b16 %v1046, %v1045
      %1055 = vst [vmem:[#allocation2 + $0xa8] sm:$0xff] %v1047
      %1056 = vst [vmem:[#allocation2 + $0xb0] sm:$0xff] %v1048
      %1057 = vst [vmem:[#allocation2 + $0xb8] sm:$0xff] %v1049
      %1058 = vst [vmem:[#allocation2 + $0xc0] sm:$0xff] %v1050
      %v1059 = vpack.c.bf16 %v813, %v811
      %v1060 = vpack.c.bf16 %v814, %v812
      %v1061 = vpack.c.bf16 %v817, %v815
      %v1062 = vpack.c.bf16 %v818, %v816
      %v1067 = vunpack.c.l.b16 %v1059
      %v1068 = vunpack.c.l.b16 %v1060
      %v1069 = vunpack.c.h.b16 %v1059
      %v1070 = vunpack.c.h.b16 %v1060
      %v1071 = vunpack.c.l.b16 %v1061
      %v1072 = vunpack.c.l.b16 %v1062
      %v1073 = vunpack.c.h.b16 %v1061
      %v1074 = vunpack.c.h.b16 %v1062
      %v1075 = vpack.c.b16 %v1068, %v1067
      %v1076 = vpack.c.b16 %v1070, %v1069
      %v1077 = vpack.c.b16 %v1072, %v1071
      %v1078 = vpack.c.b16 %v1074, %v1073
      %1083 = vst [vmem:[#allocation2 + $0xc8] sm:$0xff] %v1075
      %1084 = vst [vmem:[#allocation2 + $0xd0] sm:$0xff] %v1076
      %1085 = vst [vmem:[#allocation2 + $0xd8] sm:$0xff] %v1077
      %1086 = vst [vmem:[#allocation2 + $0xe0] sm:$0xff] %v1078
      %1087 = vrot.lane.b32.xlu0 %v811, 127
      %v1088 = vpop.permute.xlu0 %1087
      %1089 = vrot.lane.b32.xlu0 %v813, 127
      %v1090 = vpop.permute.xlu0 %1089
      %1091 = vrot.lane.b32.xlu0 %v815, 127
      %v1092 = vpop.permute.xlu0 %1091
      %1093 = vrot.lane.b32.xlu0 %v817, 127
      %v1094 = vpop.permute.xlu0 %1093
      %1095 = vrot.lane.b32.xlu0 %v812, 127
      %v1096 = vpop.permute.xlu0 %1095
      %1097 = vrot.lane.b32.xlu0 %v814, 127
      %v1098 = vpop.permute.xlu0 %1097
      %1099 = vrot.lane.b32.xlu0 %v816, 127
      %v1100 = vpop.permute.xlu0 %1099
      %1101 = vrot.lane.b32.xlu0 %v818, 127
      %v1102 = vpop.permute.xlu0 %1101
      %v1103 = vsel %vm545, %v1088, %v1096
      %v1104 = vsel %vm545, %v1090, %v1098
      %v1105 = vsel %vm545, %v1092, %v1100
      %v1106 = vsel %vm545, %v1094, %v1102
      %v1107 = vsel %vm545, %v1096, %v1088
      %v1108 = vsel %vm545, %v1098, %v1090
      %v1109 = vsel %vm545, %v1100, %v1092
      %v1110 = vsel %vm545, %v1102, %v1094
      %v1111 = vmul.f32 %v1103, %v551
      %v1112 = vmul.f32 %v1107, %v555
      %v1113 = vmul.f32 %v1104, %v551
      %v1114 = vmul.f32 %v1108, %v555
      %v1115 = vmul.f32 %v1105, %v551
      %v1116 = vmul.f32 %v1109, %v555
      %v1117 = vmul.f32 %v1106, %v551
      %v1118 = vmul.f32 %v1110, %v555
      %v1119 = vpack.c.bf16 %v1113, %v1111
      %v1120 = vpack.c.bf16 %v1114, %v1112
      %v1121 = vpack.c.bf16 %v1117, %v1115
      %v1122 = vpack.c.bf16 %v1118, %v1116
      %v1127 = vunpack.c.l.b16 %v1119
      %v1128 = vunpack.c.l.b16 %v1120
      %v1129 = vunpack.c.h.b16 %v1119
      %v1130 = vunpack.c.h.b16 %v1120
      %v1131 = vunpack.c.l.b16 %v1121
      %v1132 = vunpack.c.l.b16 %v1122
      %v1133 = vunpack.c.h.b16 %v1121
      %v1134 = vunpack.c.h.b16 %v1122
      %v1135 = vpack.c.b16 %v1128, %v1127
      %v1136 = vpack.c.b16 %v1130, %v1129
      %v1137 = vpack.c.b16 %v1132, %v1131
      %v1138 = vpack.c.b16 %v1134, %v1133
      %1143 = vst [vmem:[#allocation2 + $0xe8] sm:$0xff] %v1135
      %1144 = vst [vmem:[#allocation2 + $0xf0] sm:$0xff] %v1136
      %1145 = vst [vmem:[#allocation2 + $0xf8] sm:$0xff] %v1137
      %1146 = vst [vmem:[#allocation2 + $0x100] sm:$0xff] %v1138
      %1147 = vrot.lane.b32.xlu0 %v811, 113
      %v1148 = vpop.permute.xlu0 %1147
      %1149 = vrot.lane.b32.xlu0 %v813, 113
      %v1150 = vpop.permute.xlu0 %1149
      %1151 = vrot.lane.b32.xlu0 %v815, 113
      %v1152 = vpop.permute.xlu0 %1151
      %1153 = vrot.lane.b32.xlu0 %v817, 113
      %v1154 = vpop.permute.xlu0 %1153
      %1155 = vrot.lane.b32.xlu0 %v812, 113
      %v1156 = vpop.permute.xlu0 %1155
      %1157 = vrot.lane.b32.xlu0 %v814, 113
      %v1158 = vpop.permute.xlu0 %1157
      %1159 = vrot.lane.b32.xlu0 %v816, 113
      %v1160 = vpop.permute.xlu0 %1159
      %1161 = vrot.lane.b32.xlu0 %v818, 113
      %v1162 = vpop.permute.xlu0 %1161
      %v1163 = vsel %vm571, %v1148, %v1156
      %v1164 = vsel %vm571, %v1150, %v1158
      %v1165 = vsel %vm571, %v1152, %v1160
      %v1166 = vsel %vm571, %v1154, %v1162
      %v1167 = vsel %vm571, %v1156, %v1148
      %v1168 = vsel %vm571, %v1158, %v1150
      %v1169 = vsel %vm571, %v1160, %v1152
      %v1170 = vsel %vm571, %v1162, %v1154
      %v1171 = vmul.f32 %v1163, %v577
      %v1172 = vmul.f32 %v1167, %v581
      %v1173 = vmul.f32 %v1164, %v577
      %v1174 = vmul.f32 %v1168, %v581
      %v1175 = vmul.f32 %v1165, %v577
      %v1176 = vmul.f32 %v1169, %v581
      %v1177 = vmul.f32 %v1166, %v577
      %v1178 = vmul.f32 %v1170, %v581
      %v1179 = vpack.c.bf16 %v1173, %v1171
      %v1180 = vpack.c.bf16 %v1174, %v1172
      %v1181 = vpack.c.bf16 %v1177, %v1175
      %v1182 = vpack.c.bf16 %v1178, %v1176
      %v1187 = vunpack.c.l.b16 %v1179
      %v1188 = vunpack.c.l.b16 %v1180
      %v1189 = vunpack.c.h.b16 %v1179
      %v1190 = vunpack.c.h.b16 %v1180
      %v1191 = vunpack.c.l.b16 %v1181
      %v1192 = vunpack.c.l.b16 %v1182
      %v1193 = vunpack.c.h.b16 %v1181
      %v1194 = vunpack.c.h.b16 %v1182
      %v1195 = vpack.c.b16 %v1188, %v1187
      %v1196 = vpack.c.b16 %v1190, %v1189
      %v1197 = vpack.c.b16 %v1192, %v1191
      %v1198 = vpack.c.b16 %v1194, %v1193
      %1203 = vst [vmem:[#allocation2 + $0x108] sm:$0xff] %v1195
      %1204 = vst [vmem:[#allocation2 + $0x110] sm:$0xff] %v1196
      %1205 = vst [vmem:[#allocation2 + $0x118] sm:$0xff] %v1197
      %1206 = vst [vmem:[#allocation2 + $0x120] sm:$0xff] %v1198
      %1207 = vrot.lane.b32.xlu0 %v811, 112
      %v1208 = vpop.permute.xlu0 %1207
      %1209 = vrot.lane.b32.xlu0 %v813, 112
      %v1210 = vpop.permute.xlu0 %1209
      %1211 = vrot.lane.b32.xlu0 %v815, 112
      %v1212 = vpop.permute.xlu0 %1211
      %1213 = vrot.lane.b32.xlu0 %v817, 112
      %v1214 = vpop.permute.xlu0 %1213
      %1215 = vrot.lane.b32.xlu0 %v812, 112
      %v1216 = vpop.permute.xlu0 %1215
      %1217 = vrot.lane.b32.xlu0 %v814, 112
      %v1218 = vpop.permute.xlu0 %1217
      %1219 = vrot.lane.b32.xlu0 %v816, 112
      %v1220 = vpop.permute.xlu0 %1219
      %1221 = vrot.lane.b32.xlu0 %v818, 112
      %v1222 = vpop.permute.xlu0 %1221
      %v1223 = vsel %vm597, %v1208, %v1216
      %v1224 = vsel %vm597, %v1210, %v1218
      %v1225 = vsel %vm597, %v1212, %v1220
      %v1226 = vsel %vm597, %v1214, %v1222
      %v1227 = vsel %vm597, %v1216, %v1208
      %v1228 = vsel %vm597, %v1218, %v1210
      %v1229 = vsel %vm597, %v1220, %v1212
      %v1230 = vsel %vm597, %v1222, %v1214
      %v1231 = vmul.f32 %v1223, %v603
      %v1232 = vmul.f32 %v1227, %v607
      %v1233 = vmul.f32 %v1224, %v603
      %v1234 = vmul.f32 %v1228, %v607
      %v1235 = vmul.f32 %v1225, %v603
      %v1236 = vmul.f32 %v1229, %v607
      %v1237 = vmul.f32 %v1226, %v603
      %v1238 = vmul.f32 %v1230, %v607
      %v1239 = vpack.c.bf16 %v1233, %v1231
      %v1240 = vpack.c.bf16 %v1234, %v1232
      %v1241 = vpack.c.bf16 %v1237, %v1235
      %v1242 = vpack.c.bf16 %v1238, %v1236
      %v1247 = vunpack.c.l.b16 %v1239
      %v1248 = vunpack.c.l.b16 %v1240
      %v1249 = vunpack.c.h.b16 %v1239
      %v1250 = vunpack.c.h.b16 %v1240
      %v1251 = vunpack.c.l.b16 %v1241
      %v1252 = vunpack.c.l.b16 %v1242
      %v1253 = vunpack.c.h.b16 %v1241
      %v1254 = vunpack.c.h.b16 %v1242
      %v1255 = vpack.c.b16 %v1248, %v1247
      %v1256 = vpack.c.b16 %v1250, %v1249
      %v1257 = vpack.c.b16 %v1252, %v1251
      %v1258 = vpack.c.b16 %v1254, %v1253
      %1263 = vst [vmem:[#allocation2 + $0x128] sm:$0xff] %v1255
      %1264 = vst [vmem:[#allocation2 + $0x130] sm:$0xff] %v1256
      %1265 = vst [vmem:[#allocation2 + $0x138] sm:$0xff] %v1257
      %1266 = vst [vmem:[#allocation2 + $0x140] sm:$0xff] %v1258
      %1267 = vrot.lane.b32.xlu0 %v811, 111
      %v1268 = vpop.permute.xlu0 %1267
      %1269 = vrot.lane.b32.xlu0 %v813, 111
      %v1270 = vpop.permute.xlu0 %1269
      %1271 = vrot.lane.b32.xlu0 %v815, 111
      %v1272 = vpop.permute.xlu0 %1271
      %1273 = vrot.lane.b32.xlu0 %v817, 111
      %v1274 = vpop.permute.xlu0 %1273
      %1275 = vrot.lane.b32.xlu0 %v812, 111
      %v1276 = vpop.permute.xlu0 %1275
      %1277 = vrot.lane.b32.xlu0 %v814, 111
      %v1278 = vpop.permute.xlu0 %1277
      %1279 = vrot.lane.b32.xlu0 %v816, 111
      %v1280 = vpop.permute.xlu0 %1279
      %1281 = vrot.lane.b32.xlu0 %v818, 111
      %v1282 = vpop.permute.xlu0 %1281
      %v1283 = vsel %vm623, %v1268, %v1276
      %v1284 = vsel %vm623, %v1270, %v1278
      %v1285 = vsel %vm623, %v1272, %v1280
      %v1286 = vsel %vm623, %v1274, %v1282
      %v1287 = vsel %vm623, %v1276, %v1268
      %v1288 = vsel %vm623, %v1278, %v1270
      %v1289 = vsel %vm623, %v1280, %v1272
      %v1290 = vsel %vm623, %v1282, %v1274
      %v1291 = vmul.f32 %v1283, %v629
      %v1292 = vmul.f32 %v1287, %v633
      %v1293 = vmul.f32 %v1284, %v629
      %v1294 = vmul.f32 %v1288, %v633
      %v1295 = vmul.f32 %v1285, %v629
      %v1296 = vmul.f32 %v1289, %v633
      %v1297 = vmul.f32 %v1286, %v629
      %v1298 = vmul.f32 %v1290, %v633
      %v1299 = vpack.c.bf16 %v1293, %v1291
      %v1300 = vpack.c.bf16 %v1294, %v1292
      %v1301 = vpack.c.bf16 %v1297, %v1295
      %v1302 = vpack.c.bf16 %v1298, %v1296
      %v1307 = vunpack.c.l.b16 %v1299
      %v1308 = vunpack.c.l.b16 %v1300
      %v1309 = vunpack.c.h.b16 %v1299
      %v1310 = vunpack.c.h.b16 %v1300
      %v1311 = vunpack.c.l.b16 %v1301
      %v1312 = vunpack.c.l.b16 %v1302
      %v1313 = vunpack.c.h.b16 %v1301
      %v1314 = vunpack.c.h.b16 %v1302
      %v1315 = vpack.c.b16 %v1308, %v1307
      %v1316 = vpack.c.b16 %v1310, %v1309
      %v1317 = vpack.c.b16 %v1312, %v1311
      %v1318 = vpack.c.b16 %v1314, %v1313
      %1323 = vst [vmem:[#allocation2 + $0x148] sm:$0xff] %v1315
      %1324 = vst [vmem:[#allocation2 + $0x150] sm:$0xff] %v1316
      %1325 = vst [vmem:[#allocation2 + $0x158] sm:$0xff] %v1317
      %1326 = vst [vmem:[#allocation2 + $0x160] sm:$0xff] %v1318
      %v1327 = vld [vmem:[%s3] sm:$0xff]
      %v1328 = vld [vmem:[%s3 + $0x8] sm:$0xf]
      %v1329 = vld [vmem:[%s3 + $0xc] sm:$0xff]
      %v1330 = vld [vmem:[%s3 + $0x14] sm:$0xf]
      %v1331 = vld [vmem:[%s3 + $0x18] sm:$0xff]
      %v1332 = vld [vmem:[%s3 + $0x20] sm:$0xf]
      %v1333 = vld [vmem:[%s3 + $0x24] sm:$0xff]
      %v1334 = vld [vmem:[%s3 + $0x2c] sm:$0xf]
      %v1335 = vld [vmem:[#allocation2] sm:$0xff]
      %v1336 = vld [vmem:[#allocation2 + $0x8] sm:$0xff]
      %v1337 = vld [vmem:[#allocation2 + $0x10] sm:$0xff]
      %v1338 = vld [vmem:[#allocation2 + $0x18] sm:$0xff]
      %v1339 = vld [vmem:[#allocation2 + $0x20] sm:$0xff]
      %v1340 = vld [vmem:[#allocation2 + $0x28] sm:$0xff]
      %v1341 = vld [vmem:[#allocation2 + $0x30] sm:$0xff]
      %v1342 = vld [vmem:[#allocation2 + $0x38] sm:$0xff]
      %v1343 = vld [vmem:[#allocation2 + $0x40] sm:$0xff]
      %v1344 = vld [vmem:[#allocation2 + $0x48] sm:$0xff]
      %v1345 = vld [vmem:[#allocation2 + $0x50] sm:$0xff]
      %v1346 = vld [vmem:[#allocation2 + $0x58] sm:$0xff]
      %v1347 = vld [vmem:[#allocation2 + $0x60] sm:$0xff]
      %v1348 = vld [vmem:[#allocation2 + $0x68] sm:$0xff]
      %v1349 = vld [vmem:[#allocation2 + $0x70] sm:$0xff]
      %v1350 = vld [vmem:[#allocation2 + $0x78] sm:$0xff]
      %v1351 = vld [vmem:[#allocation2 + $0x80] sm:$0xff]
      %v1352 = vld [vmem:[#allocation2 + $0x88] sm:$0xff]
      %v1353 = vld [vmem:[#allocation2 + $0x90] sm:$0xff]
      %v1354 = vld [vmem:[#allocation2 + $0x98] sm:$0xff]
      %v1355 = vld [vmem:[#allocation2 + $0xa0] sm:$0xff]
      %v1356 = vld [vmem:[#allocation2 + $0xa8] sm:$0xff]
      %v1357 = vld [vmem:[#allocation2 + $0xb0] sm:$0xff]
      %v1358 = vld [vmem:[#allocation2 + $0xb8] sm:$0xff]
      %v1359 = vld [vmem:[#allocation2 + $0xc0] sm:$0xff]
      %v1360 = vld [vmem:[#allocation2 + $0xc8] sm:$0xff]
      %v1361 = vld [vmem:[#allocation2 + $0xd0] sm:$0xff]
      %v1362 = vld [vmem:[#allocation2 + $0xd8] sm:$0xff]
      %v1363 = vld [vmem:[#allocation2 + $0xe0] sm:$0xff]
      %v1364 = vld [vmem:[#allocation2 + $0xe8] sm:$0xff]
      %v1365 = vld [vmem:[#allocation2 + $0xf0] sm:$0xff]
      %v1366 = vld [vmem:[#allocation2 + $0xf8] sm:$0xff]
      %v1367 = vld [vmem:[#allocation2 + $0x100] sm:$0xff]
      %v1368 = vld [vmem:[#allocation2 + $0x108] sm:$0xff]
      %v1369 = vld [vmem:[#allocation2 + $0x110] sm:$0xff]
      %v1370 = vld [vmem:[#allocation2 + $0x118] sm:$0xff]
      %v1371 = vld [vmem:[#allocation2 + $0x120] sm:$0xff]
      %v1372 = vld [vmem:[#allocation2 + $0x128] sm:$0xff]
      %v1373 = vld [vmem:[#allocation2 + $0x130] sm:$0xff]
      %v1374 = vld [vmem:[#allocation2 + $0x138] sm:$0xff]
      %v1375 = vld [vmem:[#allocation2 + $0x140] sm:$0xff]
      %v1376 = vld [vmem:[#allocation2 + $0x148] sm:$0xff]
      %v1377 = vld [vmem:[#allocation2 + $0x150] sm:$0xff]
      %v1378 = vld [vmem:[#allocation2 + $0x158] sm:$0xff]
      %v1379 = vld [vmem:[#allocation2 + $0x160] sm:$0xff]
      %v1380 = vld [vmem:[%s8] sm:$0xff]
      %v1381 = vld [vmem:[%s8 + $0x8] sm:$0xff]
      %v1382 = vld [vmem:[%s8 + $0x10] sm:$0xff]
      %v1383 = vld [vmem:[%s8 + $0x18] sm:$0xff]
      %1385 = vset.pattern.permute.xlu0 0
      %1386 = vperm.xlu0 %1385, %v1380
      %v1387 = vpop.permute.xlu0 %1386
      %1390 = vset.pattern.permute.xlu0 0
      %1391 = vperm.xlu0 %1390, %v1381
      %v1392 = vpop.permute.xlu0 %1391
      %1395 = vset.pattern.permute.xlu0 0
      %1396 = vperm.xlu0 %1395, %v1382
      %v1397 = vpop.permute.xlu0 %1396
      %1400 = vset.pattern.permute.xlu0 0
      %1401 = vperm.xlu0 %1400, %v1383
      %v1402 = vpop.permute.xlu0 %1401
      %v1412 = vunpack.c.l.b16 %v1327
      %v1413 = vunpack.c.h.b16 %v1327
      %v1414 = vunpack.c.l.b16 %v1328
      %v1415 = vunpack.c.l.b16 %v1329
      %v1416 = vunpack.c.h.b16 %v1329
      %v1417 = vunpack.c.l.b16 %v1330
      %v1418 = vunpack.c.l.b16 %v1331
      %v1419 = vunpack.c.h.b16 %v1331
      %v1420 = vunpack.c.l.b16 %v1332
      %v1421 = vunpack.c.l.b16 %v1333
      %v1422 = vunpack.c.h.b16 %v1333
      %v1423 = vunpack.c.l.b16 %v1334
      %v1424 = vpack.c.b16 %v1415, %v1412
      %v1425 = vpack.c.b16 %v1416, %v1413
      %v1426 = vpack.c.b16 %v1417, %v1414
      %v1427 = vpack.c.b16 %v1421, %v1418
      %v1428 = vpack.c.b16 %v1422, %v1419
      %v1429 = vpack.c.b16 %v1423, %v1420
      %v1479 = vunpack.c.l.b16 %v1335
      %v1480 = vunpack.c.h.b16 %v1335
      %v1481 = vunpack.c.l.b16 %v1336
      %v1482 = vunpack.c.h.b16 %v1336
      %v1483 = vunpack.c.l.b16 %v1337
      %v1484 = vunpack.c.h.b16 %v1337
      %v1485 = vunpack.c.l.b16 %v1338
      %v1486 = vunpack.c.h.b16 %v1338
      %v1487 = vunpack.c.l.b16 %v1339
      %v1488 = vunpack.c.h.b16 %v1339
      %v1489 = vunpack.c.l.b16 %v1340
      %v1490 = vunpack.c.h.b16 %v1340
      %v1491 = vunpack.c.l.b16 %v1341
      %v1492 = vunpack.c.h.b16 %v1341
      %v1493 = vunpack.c.l.b16 %v1342
      %v1494 = vunpack.c.h.b16 %v1342
      %v1495 = vunpack.c.l.b16 %v1343
      %v1496 = vunpack.c.h.b16 %v1343
      %v1497 = vunpack.c.l.b16 %v1344
      %v1498 = vunpack.c.h.b16 %v1344
      %v1499 = vunpack.c.l.b16 %v1345
      %v1500 = vunpack.c.h.b16 %v1345
      %v1501 = vunpack.c.l.b16 %v1346
      %v1502 = vunpack.c.h.b16 %v1346
      %v1503 = vunpack.c.l.b16 %v1347
      %v1504 = vunpack.c.h.b16 %v1347
      %v1505 = vunpack.c.l.b16 %v1348
      %v1506 = vunpack.c.h.b16 %v1348
      %v1507 = vunpack.c.l.b16 %v1349
      %v1508 = vunpack.c.h.b16 %v1349
      %v1509 = vunpack.c.l.b16 %v1350
      %v1510 = vunpack.c.h.b16 %v1350
      %v1511 = vunpack.c.l.b16 %v1351
      %v1512 = vunpack.c.h.b16 %v1351
      %v1513 = vunpack.c.l.b16 %v1352
      %v1514 = vunpack.c.h.b16 %v1352
      %v1515 = vunpack.c.l.b16 %v1353
      %v1516 = vunpack.c.h.b16 %v1353
      %v1517 = vunpack.c.l.b16 %v1354
      %v1518 = vunpack.c.h.b16 %v1354
      %v1519 = vunpack.c.l.b16 %v1355
      %v1520 = vunpack.c.h.b16 %v1355
      %v1521 = vunpack.c.l.b16 %v1356
      %v1522 = vunpack.c.h.b16 %v1356
      %v1523 = vunpack.c.l.b16 %v1357
      %v1524 = vunpack.c.h.b16 %v1357
      %v1525 = vunpack.c.l.b16 %v1358
      %v1526 = vunpack.c.h.b16 %v1358
      %v1527 = vunpack.c.l.b16 %v1359
      %v1528 = vunpack.c.h.b16 %v1359
      %v1529 = vunpack.c.l.b16 %v1360
      %v1530 = vunpack.c.h.b16 %v1360
      %v1531 = vunpack.c.l.b16 %v1361
      %v1532 = vunpack.c.h.b16 %v1361
      %v1533 = vunpack.c.l.b16 %v1362
      %v1534 = vunpack.c.h.b16 %v1362
      %v1535 = vunpack.c.l.b16 %v1363
      %v1536 = vunpack.c.h.b16 %v1363
      %v1537 = vunpack.c.l.b16 %v1364
      %v1538 = vunpack.c.h.b16 %v1364
      %v1539 = vunpack.c.l.b16 %v1365
      %v1540 = vunpack.c.h.b16 %v1365
      %v1541 = vunpack.c.l.b16 %v1366
      %v1542 = vunpack.c.h.b16 %v1366
      %v1543 = vunpack.c.l.b16 %v1367
      %v1544 = vunpack.c.h.b16 %v1367
      %v1545 = vunpack.c.l.b16 %v1368
      %v1546 = vunpack.c.h.b16 %v1368
      %v1547 = vunpack.c.l.b16 %v1369
      %v1548 = vunpack.c.h.b16 %v1369
      %v1549 = vunpack.c.l.b16 %v1370
      %v1550 = vunpack.c.h.b16 %v1370
      %v1551 = vunpack.c.l.b16 %v1371
      %v1552 = vunpack.c.h.b16 %v1371
      %v1553 = vunpack.c.l.b16 %v1372
      %v1554 = vunpack.c.h.b16 %v1372
      %v1555 = vunpack.c.l.b16 %v1373
      %v1556 = vunpack.c.h.b16 %v1373
      %v1557 = vunpack.c.l.b16 %v1374
      %v1558 = vunpack.c.h.b16 %v1374
      %v1559 = vunpack.c.l.b16 %v1375
      %v1560 = vunpack.c.h.b16 %v1375
      %v1561 = vunpack.c.l.b16 %v1376
      %v1562 = vunpack.c.h.b16 %v1376
      %v1563 = vunpack.c.l.b16 %v1377
      %v1564 = vunpack.c.h.b16 %v1377
      %v1565 = vunpack.c.l.b16 %v1378
      %v1566 = vunpack.c.h.b16 %v1378
      %v1567 = vunpack.c.l.b16 %v1379
      %v1568 = vunpack.c.h.b16 %v1379
      %v1569 = vpack.c.b16 %v1481, %v1479
      %v1570 = vpack.c.b16 %v1482, %v1480
      %v1571 = vpack.c.b16 %v1485, %v1483
      %v1572 = vpack.c.b16 %v1486, %v1484
      %v1573 = vpack.c.b16 %v1489, %v1487
      %v1574 = vpack.c.b16 %v1490, %v1488
      %v1575 = vpack.c.b16 %v1493, %v1491
      %v1576 = vpack.c.b16 %v1494, %v1492
      %v1577 = vpack.c.b16 %v1497, %v1495
      %v1578 = vpack.c.b16 %v1498, %v1496
      %v1579 = vpack.c.b16 %v1501, %v1499
      %v1580 = vpack.c.b16 %v1502, %v1500
      %v1581 = vpack.c.b16 %v1505, %v1503
      %v1582 = vpack.c.b16 %v1506, %v1504
      %v1583 = vpack.c.b16 %v1509, %v1507
      %v1584 = vpack.c.b16 %v1510, %v1508
      %v1585 = vpack.c.b16 %v1513, %v1511
      %v1586 = vpack.c.b16 %v1514, %v1512
      %v1587 = vpack.c.b16 %v1517, %v1515
      %v1588 = vpack.c.b16 %v1518, %v1516
      %v1589 = vpack.c.b16 %v1521, %v1519
      %v1590 = vpack.c.b16 %v1522, %v1520
      %v1591 = vpack.c.b16 %v1525, %v1523
      %v1592 = vpack.c.b16 %v1526, %v1524
      %v1593 = vpack.c.b16 %v1529, %v1527
      %v1594 = vpack.c.b16 %v1530, %v1528
      %v1595 = vpack.c.b16 %v1533, %v1531
      %v1596 = vpack.c.b16 %v1534, %v1532
      %v1597 = vpack.c.b16 %v1537, %v1535
      %v1598 = vpack.c.b16 %v1538, %v1536
      %v1599 = vpack.c.b16 %v1541, %v1539
      %v1600 = vpack.c.b16 %v1542, %v1540
      %v1601 = vpack.c.b16 %v1545, %v1543
      %v1602 = vpack.c.b16 %v1546, %v1544
      %v1603 = vpack.c.b16 %v1549, %v1547
      %v1604 = vpack.c.b16 %v1550, %v1548
      %v1605 = vpack.c.b16 %v1553, %v1551
      %v1606 = vpack.c.b16 %v1554, %v1552
      %v1607 = vpack.c.b16 %v1557, %v1555
      %v1608 = vpack.c.b16 %v1558, %v1556
      %v1609 = vpack.c.b16 %v1561, %v1559
      %v1610 = vpack.c.b16 %v1562, %v1560
      %v1611 = vpack.c.b16 %v1565, %v1563
      %v1612 = vpack.c.b16 %v1566, %v1564
      %v1613 = vpack.c.b16 %v1567, %v1567
      %v1614 = vpack.c.b16 %v1568, %v1568
      %vm1659 = vcmask 850944
      %v1661 = vsel %vm1659, %v1426, 0
      %v1664 = vsel %vm1659, %v1429, 0
      %v1667 = vsel %vm423, %v1613, 0
      %v1670 = vsel %vm423, %v1614, 0
      %1672 = vmatprep.subr.bf16.mxu0 %v1570
      %1673 = vmatpush1.bf16.msra.mxu0 %v1569
      %1674 = vmatprep.subr.bf16.mxu0 %v1572
      %1675 = vmatpush1.bf16.msra.mxu0 %v1571
      %1676 = vmatprep.subr.bf16.mxu0 %v1574
      %1677 = vmatpush1.bf16.msra.mxu0 %v1573
      %1678 = vmatprep.subr.bf16.mxu0 %v1576
      %1679 = vmatpush1.bf16.msra.mxu0 %v1575
      %1680 = vmatprep.subr.bf16.mxu0 %v1578
      %1681 = vmatpush1.bf16.msra.mxu0 %v1577
      %1682 = vmatprep.subr.bf16.mxu0 %v1580
      %1683 = vmatpush1.bf16.msra.mxu0 %v1579
      %1684 = vmatprep.subr.bf16.mxu0 %v1582
      %1685 = vmatpush1.bf16.msra.mxu0 %v1581
      %1686 = vmatprep.subr.bf16.mxu0 %v1584
      %1687 = vmatpush1.bf16.msra.mxu0 %v1583
      %1688 = vmatprep.subr.bf16.mxu0 %v1586
      %1689 = vmatpush1.bf16.msra.mxu0 %v1585
      %1690 = vmatprep.subr.bf16.mxu0 %v1588
      %1691 = vmatpush1.bf16.msra.mxu0 %v1587
      %1692 = vmatprep.subr.bf16.mxu0 %v1590
      %1693 = vmatpush1.bf16.msra.mxu0 %v1589
      %1694 = vmatprep.subr.bf16.mxu0 %v1592
      %1695 = vmatpush1.bf16.msra.mxu0 %v1591
      %1696 = vmatprep.subr.bf16.mxu0 %v1594
      %1697 = vmatpush1.bf16.msra.mxu0 %v1593
      %1698 = vmatprep.subr.bf16.mxu0 %v1596
      %1699 = vmatpush1.bf16.msra.mxu0 %v1595
      %1700 = vmatprep.subr.bf16.mxu0 %v1598
      %1701 = vmatpush1.bf16.msra.mxu0 %v1597
      %1702 = vmatprep.subr.bf16.mxu0 %v1600
      %1703 = vmatpush1.bf16.msra.mxu0 %v1599
      %1704 = vmatprep.mubr.bf16.mxu0 %v1425
      %1705 = vmatmul.mubr.bf16.gmra.mrb[0].mxu0 %v1424
      %v1706 = vpop.f32.mrb[0].mxu0
      %v1707 = vadd.f32 %v1387, %v1706
      %v1708 = vpop.f32.mrb[0].mxu0
      %v1709 = vadd.f32 %v1387, %v1708
      %v1710 = vpop.f32.mrb[0].mxu0
      %v1711 = vadd.f32 %v1392, %v1710
      %v1712 = vpop.f32.mrb[0].mxu0
      %v1713 = vadd.f32 %v1392, %v1712
      %1714 = vmatprep.mubr.bf16.mxu0 %v1428
      %1715 = vmatmul.mubr.bf16.gmra.mrb[0].mxu0 %v1427
      %v1716 = vpop.f32.mrb[0].mxu0
      %v1717 = vadd.f32 %v1397, %v1716
      %v1718 = vpop.f32.mrb[0].mxu0
      %v1719 = vadd.f32 %v1397, %v1718
      %v1720 = vpop.f32.mrb[0].mxu0
      %v1721 = vadd.f32 %v1402, %v1720
      %v1722 = vpop.f32.mrb[0].mxu0
      %v1723 = vadd.f32 %v1402, %v1722
      %1724 = vdwg.mxu0
      %1725 = vmatprep.subr.bf16.mxu0 %v1602
      %1726 = vmatpush1.bf16.msra.mxu0 %v1601
      %1727 = vmatprep.subr.bf16.mxu0 %v1604
      %1728 = vmatpush1.bf16.msra.mxu0 %v1603
      %1729 = vmatprep.subr.bf16.mxu0 %v1606
      %1730 = vmatpush1.bf16.msra.mxu0 %v1605
      %1731 = vmatprep.subr.bf16.mxu0 %v1608
      %1732 = vmatpush1.bf16.msra.mxu0 %v1607
      %1733 = vmatprep.subr.bf16.mxu0 %v1610
      %1734 = vmatpush1.bf16.msra.mxu0 %v1609
      %1735 = vmatprep.subr.bf16.mxu0 %v1612
      %1736 = vmatpush1.bf16.msra.mxu0 %v1611
      %1737 = vmatprep.subr.bf16.mxu0 %v1670
      %1738 = vmatpush1.bf16.msra.mxu0 %v1667
      %1739 = vmatprep.subr.bf16.mxu0 0
      %1740 = vmatpush1.bf16.msra.mxu0 0
      %1741 = vmatprep.subr.bf16.mxu0 0
      %1742 = vmatpush1.bf16.msra.mxu0 0
      %1743 = vmatprep.subr.bf16.mxu0 0
      %1744 = vmatpush1.bf16.msra.mxu0 0
      %1745 = vmatprep.subr.bf16.mxu0 0
      %1746 = vmatpush1.bf16.msra.mxu0 0
      %1747 = vmatprep.subr.bf16.mxu0 0
      %1748 = vmatpush1.bf16.msra.mxu0 0
      %1749 = vmatprep.subr.bf16.mxu0 0
      %1750 = vmatpush1.bf16.msra.mxu0 0
      %1751 = vmatprep.subr.bf16.mxu0 0
      %1752 = vmatpush1.bf16.msra.mxu0 0
      %1753 = vmatprep.subr.bf16.mxu0 0
      %1754 = vmatpush1.bf16.msra.mxu0 0
      %1755 = vmatprep.subr.bf16.mxu0 0
      %1756 = vmatpush1.bf16.msra.mxu0 0
      %1757 = vmatprep.mubr.bf16.mxu0 0
      %1758 = vmatmul.mubr.bf16.gmra.mrb[0].mxu0 %v1661
      %v1759 = vpop.f32.mrb[0].mxu0
      %v1760 = vadd.f32 %v1707, %v1759
      %v1761 = vpop.f32.mrb[0].mxu0
      %v1762 = vadd.f32 %v1709, %v1761
      %v1763 = vpop.f32.mrb[0].mxu0
      %v1764 = vadd.f32 %v1711, %v1763
      %v1765 = vpop.f32.mrb[0].mxu0
      %v1766 = vadd.f32 %v1713, %v1765
      %1767 = vmatprep.mubr.bf16.mxu0 0
      %1768 = vmatmul.mubr.bf16.gmra.mrb[0].mxu0 %v1664
      %v1769 = vpop.f32.mrb[0].mxu0
      %v1770 = vadd.f32 %v1717, %v1769
      %v1771 = vpop.f32.mrb[0].mxu0
      %v1772 = vadd.f32 %v1719, %v1771
      %v1773 = vpop.f32.mrb[0].mxu0
      %v1774 = vadd.f32 %v1721, %v1773
      %v1775 = vpop.f32.mrb[0].mxu0
      %v1776 = vadd.f32 %v1723, %v1775
      %1777 = vdwg.mxu0
      %v1778 = vmul.f32 %v1760, 0.2
      %v1779 = vmul.f32 %v1762, 0.2
      %v1780 = vmul.f32 %v1764, 0.2
      %v1781 = vmul.f32 %v1766, 0.2
      %v1782 = vmul.f32 %v1770, 0.2
      %v1783 = vmul.f32 %v1772, 0.2
      %v1784 = vmul.f32 %v1774, 0.2
      %v1785 = vmul.f32 %v1776, 0.2
      %v1786 = vmax.f32 %v1760, %v1778
      %v1787 = vmax.f32 %v1762, %v1779
      %v1788 = vmax.f32 %v1764, %v1780
      %v1789 = vmax.f32 %v1766, %v1781
      %v1790 = vmax.f32 %v1770, %v1782
      %v1791 = vmax.f32 %v1772, %v1783
      %v1792 = vmax.f32 %v1774, %v1784
      %v1793 = vmax.f32 %v1776, %v1785
      %1794 = vrot.lane.b32.xlu0 %v1786, 17
      %v1795 = vpop.permute.xlu0 %1794
      %1796 = vrot.lane.b32.xlu0 %v1788, 17
      %v1797 = vpop.permute.xlu0 %1796
      %1798 = vrot.lane.b32.xlu0 %v1790, 17
      %v1799 = vpop.permute.xlu0 %1798
      %1800 = vrot.lane.b32.xlu0 %v1792, 17
      %v1801 = vpop.permute.xlu0 %1800
      %1802 = vrot.lane.b32.xlu0 %v1787, 17
      %v1803 = vpop.permute.xlu0 %1802
      %1804 = vrot.lane.b32.xlu0 %v1789, 17
      %v1805 = vpop.permute.xlu0 %1804
      %1806 = vrot.lane.b32.xlu0 %v1791, 17
      %v1807 = vpop.permute.xlu0 %1806
      %1808 = vrot.lane.b32.xlu0 %v1793, 17
      %v1809 = vpop.permute.xlu0 %1808
      %v1810 = vsel %vm432, %v1795, %v1803
      %v1811 = vsel %vm432, %v1797, %v1805
      %v1812 = vsel %vm432, %v1799, %v1807
      %v1813 = vsel %vm432, %v1801, %v1809
      %v1814 = vsel %vm432, %v1803, %v1795
      %v1815 = vsel %vm432, %v1805, %v1797
      %v1816 = vsel %vm432, %v1807, %v1799
      %v1817 = vsel %vm432, %v1809, %v1801
      %v1818 = vmul.f32 %v1814, %v438
      %v1819 = vmul.f32 %v1810, %v442
      %v1820 = vmul.f32 %v1815, %v438
      %v1821 = vmul.f32 %v1811, %v442
      %v1822 = vmul.f32 %v1816, %v438
      %v1823 = vmul.f32 %v1812, %v442
      %v1824 = vmul.f32 %v1817, %v438
      %v1825 = vmul.f32 %v1813, %v442
      %v1826 = vpack.c.bf16 %v1820, %v1818
      %v1827 = vpack.c.bf16 %v1821, %v1819
      %v1828 = vpack.c.bf16 %v1824, %v1822
      %v1829 = vpack.c.bf16 %v1825, %v1823
      %v1834 = vunpack.c.l.b16 %v1826
      %v1835 = vunpack.c.l.b16 %v1827
      %v1836 = vunpack.c.h.b16 %v1826
      %v1837 = vunpack.c.h.b16 %v1827
      %v1838 = vunpack.c.l.b16 %v1828
      %v1839 = vunpack.c.l.b16 %v1829
      %v1840 = vunpack.c.h.b16 %v1828
      %v1841 = vunpack.c.h.b16 %v1829
      %v1842 = vpack.c.b16 %v1835, %v1834
      %v1843 = vpack.c.b16 %v1837, %v1836
      %v1844 = vpack.c.b16 %v1839, %v1838
      %v1845 = vpack.c.b16 %v1841, %v1840
      %1850 = vst [vmem:[#allocation2 + $0x168] sm:$0xff] %v1842
      %1851 = vst [vmem:[#allocation2 + $0x170] sm:$0xff] %v1843
      %1852 = vst [vmem:[#allocation2 + $0x178] sm:$0xff] %v1844
      %1853 = vst [vmem:[#allocation2 + $0x180] sm:$0xff] %v1845
      %1854 = vrot.lane.b32.xlu0 %v1786, 16
      %v1855 = vpop.permute.xlu0 %1854
      %1856 = vrot.lane.b32.xlu0 %v1788, 16
      %v1857 = vpop.permute.xlu0 %1856
      %1858 = vrot.lane.b32.xlu0 %v1790, 16
      %v1859 = vpop.permute.xlu0 %1858
      %1860 = vrot.lane.b32.xlu0 %v1792, 16
      %v1861 = vpop.permute.xlu0 %1860
      %1862 = vrot.lane.b32.xlu0 %v1787, 16
      %v1863 = vpop.permute.xlu0 %1862
      %1864 = vrot.lane.b32.xlu0 %v1789, 16
      %v1865 = vpop.permute.xlu0 %1864
      %1866 = vrot.lane.b32.xlu0 %v1791, 16
      %v1867 = vpop.permute.xlu0 %1866
      %1868 = vrot.lane.b32.xlu0 %v1793, 16
      %v1869 = vpop.permute.xlu0 %1868
      %v1870 = vsel %vm458, %v1855, %v1863
      %v1871 = vsel %vm458, %v1857, %v1865
      %v1872 = vsel %vm458, %v1859, %v1867
      %v1873 = vsel %vm458, %v1861, %v1869
      %v1874 = vsel %vm458, %v1863, %v1855
      %v1875 = vsel %vm458, %v1865, %v1857
      %v1876 = vsel %vm458, %v1867, %v1859
      %v1877 = vsel %vm458, %v1869, %v1861
      %v1878 = vmul.f32 %v1874, %v464
      %v1879 = vmul.f32 %v1870, %v468
      %v1880 = vmul.f32 %v1875, %v464
      %v1881 = vmul.f32 %v1871, %v468
      %v1882 = vmul.f32 %v1876, %v464
      %v1883 = vmul.f32 %v1872, %v468
      %v1884 = vmul.f32 %v1877, %v464
      %v1885 = vmul.f32 %v1873, %v468
      %v1886 = vpack.c.bf16 %v1880, %v1878
      %v1887 = vpack.c.bf16 %v1881, %v1879
      %v1888 = vpack.c.bf16 %v1884, %v1882
      %v1889 = vpack.c.bf16 %v1885, %v1883
      %v1894 = vunpack.c.l.b16 %v1886
      %v1895 = vunpack.c.l.b16 %v1887
      %v1896 = vunpack.c.h.b16 %v1886
      %v1897 = vunpack.c.h.b16 %v1887
      %v1898 = vunpack.c.l.b16 %v1888
      %v1899 = vunpack.c.l.b16 %v1889
      %v1900 = vunpack.c.h.b16 %v1888
      %v1901 = vunpack.c.h.b16 %v1889
      %v1902 = vpack.c.b16 %v1895, %v1894
      %v1903 = vpack.c.b16 %v1897, %v1896
      %v1904 = vpack.c.b16 %v1899, %v1898
      %v1905 = vpack.c.b16 %v1901, %v1900
      %1910 = vst [vmem:[#allocation2 + $0x188] sm:$0xff] %v1902
      %1911 = vst [vmem:[#allocation2 + $0x190] sm:$0xff] %v1903
      %1912 = vst [vmem:[#allocation2 + $0x198] sm:$0xff] %v1904
      %1913 = vst [vmem:[#allocation2 + $0x1a0] sm:$0xff] %v1905
      %1914 = vrot.lane.b32.xlu0 %v1786, 15
      %v1915 = vpop.permute.xlu0 %1914
      %1916 = vrot.lane.b32.xlu0 %v1788, 15
      %v1917 = vpop.permute.xlu0 %1916
      %1918 = vrot.lane.b32.xlu0 %v1790, 15
      %v1919 = vpop.permute.xlu0 %1918
      %1920 = vrot.lane.b32.xlu0 %v1792, 15
      %v1921 = vpop.permute.xlu0 %1920
      %1922 = vrot.lane.b32.xlu0 %v1787, 15
      %v1923 = vpop.permute.xlu0 %1922
      %1924 = vrot.lane.b32.xlu0 %v1789, 15
      %v1925 = vpop.permute.xlu0 %1924
      %1926 = vrot.lane.b32.xlu0 %v1791, 15
      %v1927 = vpop.permute.xlu0 %1926
      %1928 = vrot.lane.b32.xlu0 %v1793, 15
      %v1929 = vpop.permute.xlu0 %1928
      %v1930 = vsel %vm484, %v1915, %v1923
      %v1931 = vsel %vm484, %v1917, %v1925
      %v1932 = vsel %vm484, %v1919, %v1927
      %v1933 = vsel %vm484, %v1921, %v1929
      %v1934 = vsel %vm484, %v1923, %v1915
      %v1935 = vsel %vm484, %v1925, %v1917
      %v1936 = vsel %vm484, %v1927, %v1919
      %v1937 = vsel %vm484, %v1929, %v1921
      %v1938 = vmul.f32 %v1934, %v490
      %v1939 = vmul.f32 %v1930, %v494
      %v1940 = vmul.f32 %v1935, %v490
      %v1941 = vmul.f32 %v1931, %v494
      %v1942 = vmul.f32 %v1936, %v490
      %v1943 = vmul.f32 %v1932, %v494
      %v1944 = vmul.f32 %v1937, %v490
      %v1945 = vmul.f32 %v1933, %v494
      %v1946 = vpack.c.bf16 %v1940, %v1938
      %v1947 = vpack.c.bf16 %v1941, %v1939
      %v1948 = vpack.c.bf16 %v1944, %v1942
      %v1949 = vpack.c.bf16 %v1945, %v1943
      %v1954 = vunpack.c.l.b16 %v1946
      %v1955 = vunpack.c.l.b16 %v1947
      %v1956 = vunpack.c.h.b16 %v1946
      %v1957 = vunpack.c.h.b16 %v1947
      %v1958 = vunpack.c.l.b16 %v1948
      %v1959 = vunpack.c.l.b16 %v1949
      %v1960 = vunpack.c.h.b16 %v1948
      %v1961 = vunpack.c.h.b16 %v1949
      %v1962 = vpack.c.b16 %v1955, %v1954
      %v1963 = vpack.c.b16 %v1957, %v1956
      %v1964 = vpack.c.b16 %v1959, %v1958
      %v1965 = vpack.c.b16 %v1961, %v1960
      %1970 = vst [vmem:[#allocation2 + $0x1a8] sm:$0xff] %v1962
      %1971 = vst [vmem:[#allocation2 + $0x1b0] sm:$0xff] %v1963
      %1972 = vst [vmem:[#allocation2 + $0x1b8] sm:$0xff] %v1964
      %1973 = vst [vmem:[#allocation2 + $0x1c0] sm:$0xff] %v1965
      %1974 = vrot.lane.b32.xlu0 %v1786, 1
      %v1975 = vpop.permute.xlu0 %1974
      %1976 = vrot.lane.b32.xlu0 %v1788, 1
      %v1977 = vpop.permute.xlu0 %1976
      %1978 = vrot.lane.b32.xlu0 %v1790, 1
      %v1979 = vpop.permute.xlu0 %1978
      %1980 = vrot.lane.b32.xlu0 %v1792, 1
      %v1981 = vpop.permute.xlu0 %1980
      %1982 = vrot.lane.b32.xlu0 %v1787, 1
      %v1983 = vpop.permute.xlu0 %1982
      %1984 = vrot.lane.b32.xlu0 %v1789, 1
      %v1985 = vpop.permute.xlu0 %1984
      %1986 = vrot.lane.b32.xlu0 %v1791, 1
      %v1987 = vpop.permute.xlu0 %1986
      %1988 = vrot.lane.b32.xlu0 %v1793, 1
      %v1989 = vpop.permute.xlu0 %1988
      %v1990 = vsel %vm510, %v1975, %v1983
      %v1991 = vsel %vm510, %v1977, %v1985
      %v1992 = vsel %vm510, %v1979, %v1987
      %v1993 = vsel %vm510, %v1981, %v1989
      %v1994 = vsel %vm510, %v1983, %v1975
      %v1995 = vsel %vm510, %v1985, %v1977
      %v1996 = vsel %vm510, %v1987, %v1979
      %v1997 = vsel %vm510, %v1989, %v1981
      %v1998 = vmul.f32 %v1994, %v516
      %v1999 = vmul.f32 %v1990, %v520
      %v2000 = vmul.f32 %v1995, %v516
      %v2001 = vmul.f32 %v1991, %v520
      %v2002 = vmul.f32 %v1996, %v516
      %v2003 = vmul.f32 %v1992, %v520
      %v2004 = vmul.f32 %v1997, %v516
      %v2005 = vmul.f32 %v1993, %v520
      %v2006 = vpack.c.bf16 %v2000, %v1998
      %v2007 = vpack.c.bf16 %v2001, %v1999
      %v2008 = vpack.c.bf16 %v2004, %v2002
      %v2009 = vpack.c.bf16 %v2005, %v2003
      %v2014 = vunpack.c.l.b16 %v2006
      %v2015 = vunpack.c.l.b16 %v2007
      %v2016 = vunpack.c.h.b16 %v2006
      %v2017 = vunpack.c.h.b16 %v2007
      %v2018 = vunpack.c.l.b16 %v2008
      %v2019 = vunpack.c.l.b16 %v2009
      %v2020 = vunpack.c.h.b16 %v2008
      %v2021 = vunpack.c.h.b16 %v2009
      %v2022 = vpack.c.b16 %v2015, %v2014
      %v2023 = vpack.c.b16 %v2017, %v2016
      %v2024 = vpack.c.b16 %v2019, %v2018
      %v2025 = vpack.c.b16 %v2021, %v2020
      %2030 = vst [vmem:[#allocation2 + $0x1c8] sm:$0xff] %v2022
      %2031 = vst [vmem:[#allocation2 + $0x1d0] sm:$0xff] %v2023
      %2032 = vst [vmem:[#allocation2 + $0x1d8] sm:$0xff] %v2024
      %2033 = vst [vmem:[#allocation2 + $0x1e0] sm:$0xff] %v2025
      %v2034 = vpack.c.bf16 %v1788, %v1786
      %v2035 = vpack.c.bf16 %v1789, %v1787
      %v2036 = vpack.c.bf16 %v1792, %v1790
      %v2037 = vpack.c.bf16 %v1793, %v1791
      %v2042 = vunpack.c.l.b16 %v2034
      %v2043 = vunpack.c.l.b16 %v2035
      %v2044 = vunpack.c.h.b16 %v2034
      %v2045 = vunpack.c.h.b16 %v2035
      %v2046 = vunpack.c.l.b16 %v2036
      %v2047 = vunpack.c.l.b16 %v2037
      %v2048 = vunpack.c.h.b16 %v2036
      %v2049 = vunpack.c.h.b16 %v2037
      %v2050 = vpack.c.b16 %v2043, %v2042
      %v2051 = vpack.c.b16 %v2045, %v2044
      %v2052 = vpack.c.b16 %v2047, %v2046
      %v2053 = vpack.c.b16 %v2049, %v2048
      %2058 = vst [vmem:[#allocation2 + $0x1e8] sm:$0xff] %v2050
      %2059 = vst [vmem:[#allocation2 + $0x1f0] sm:$0xff] %v2051
      %2060 = vst [vmem:[#allocation2 + $0x1f8] sm:$0xff] %v2052
      %2061 = vst [vmem:[#allocation2 + $0x200] sm:$0xff] %v2053
      %2062 = vrot.lane.b32.xlu0 %v1786, 127
      %v2063 = vpop.permute.xlu0 %2062
      %2064 = vrot.lane.b32.xlu0 %v1788, 127
      %v2065 = vpop.permute.xlu0 %2064
      %2066 = vrot.lane.b32.xlu0 %v1790, 127
      %v2067 = vpop.permute.xlu0 %2066
      %2068 = vrot.lane.b32.xlu0 %v1792, 127
      %v2069 = vpop.permute.xlu0 %2068
      %2070 = vrot.lane.b32.xlu0 %v1787, 127
      %v2071 = vpop.permute.xlu0 %2070
      %2072 = vrot.lane.b32.xlu0 %v1789, 127
      %v2073 = vpop.permute.xlu0 %2072
      %2074 = vrot.lane.b32.xlu0 %v1791, 127
      %v2075 = vpop.permute.xlu0 %2074
      %2076 = vrot.lane.b32.xlu0 %v1793, 127
      %v2077 = vpop.permute.xlu0 %2076
      %v2078 = vsel %vm545, %v2063, %v2071
      %v2079 = vsel %vm545, %v2065, %v2073
      %v2080 = vsel %vm545, %v2067, %v2075
      %v2081 = vsel %vm545, %v2069, %v2077
      %v2082 = vsel %vm545, %v2071, %v2063
      %v2083 = vsel %vm545, %v2073, %v2065
      %v2084 = vsel %vm545, %v2075, %v2067
      %v2085 = vsel %vm545, %v2077, %v2069
      %v2086 = vmul.f32 %v2078, %v551
      %v2087 = vmul.f32 %v2082, %v555
      %v2088 = vmul.f32 %v2079, %v551
      %v2089 = vmul.f32 %v2083, %v555
      %v2090 = vmul.f32 %v2080, %v551
      %v2091 = vmul.f32 %v2084, %v555
      %v2092 = vmul.f32 %v2081, %v551
      %v2093 = vmul.f32 %v2085, %v555
      %v2094 = vpack.c.bf16 %v2088, %v2086
      %v2095 = vpack.c.bf16 %v2089, %v2087
      %v2096 = vpack.c.bf16 %v2092, %v2090
      %v2097 = vpack.c.bf16 %v2093, %v2091
      %v2102 = vunpack.c.l.b16 %v2094
      %v2103 = vunpack.c.l.b16 %v2095
      %v2104 = vunpack.c.h.b16 %v2094
      %v2105 = vunpack.c.h.b16 %v2095
      %v2106 = vunpack.c.l.b16 %v2096
      %v2107 = vunpack.c.l.b16 %v2097
      %v2108 = vunpack.c.h.b16 %v2096
      %v2109 = vunpack.c.h.b16 %v2097
      %v2110 = vpack.c.b16 %v2103, %v2102
      %v2111 = vpack.c.b16 %v2105, %v2104
      %v2112 = vpack.c.b16 %v2107, %v2106
      %v2113 = vpack.c.b16 %v2109, %v2108
      %2118 = vst [vmem:[#allocation2 + $0x208] sm:$0xff] %v2110
      %2119 = vst [vmem:[#allocation2 + $0x210] sm:$0xff] %v2111
      %2120 = vst [vmem:[#allocation2 + $0x218] sm:$0xff] %v2112
      %2121 = vst [vmem:[#allocation2 + $0x220] sm:$0xff] %v2113
      %2122 = vrot.lane.b32.xlu0 %v1786, 113
      %v2123 = vpop.permute.xlu0 %2122
      %2124 = vrot.lane.b32.xlu0 %v1788, 113
      %v2125 = vpop.permute.xlu0 %2124
      %2126 = vrot.lane.b32.xlu0 %v1790, 113
      %v2127 = vpop.permute.xlu0 %2126
      %2128 = vrot.lane.b32.xlu0 %v1792, 113
      %v2129 = vpop.permute.xlu0 %2128
      %2130 = vrot.lane.b32.xlu0 %v1787, 113
      %v2131 = vpop.permute.xlu0 %2130
      %2132 = vrot.lane.b32.xlu0 %v1789, 113
      %v2133 = vpop.permute.xlu0 %2132
      %2134 = vrot.lane.b32.xlu0 %v1791, 113
      %v2135 = vpop.permute.xlu0 %2134
      %2136 = vrot.lane.b32.xlu0 %v1793, 113
      %v2137 = vpop.permute.xlu0 %2136
      %v2138 = vsel %vm571, %v2123, %v2131
      %v2139 = vsel %vm571, %v2125, %v2133
      %v2140 = vsel %vm571, %v2127, %v2135
      %v2141 = vsel %vm571, %v2129, %v2137
      %v2142 = vsel %vm571, %v2131, %v2123
      %v2143 = vsel %vm571, %v2133, %v2125
      %v2144 = vsel %vm571, %v2135, %v2127
      %v2145 = vsel %vm571, %v2137, %v2129
      %v2146 = vmul.f32 %v2138, %v577
      %v2147 = vmul.f32 %v2142, %v581
      %v2148 = vmul.f32 %v2139, %v577
      %v2149 = vmul.f32 %v2143, %v581
      %v2150 = vmul.f32 %v2140, %v577
      %v2151 = vmul.f32 %v2144, %v581
      %v2152 = vmul.f32 %v2141, %v577
      %v2153 = vmul.f32 %v2145, %v581
      %v2154 = vpack.c.bf16 %v2148, %v2146
      %v2155 = vpack.c.bf16 %v2149, %v2147
      %v2156 = vpack.c.bf16 %v2152, %v2150
      %v2157 = vpack.c.bf16 %v2153, %v2151
      %v2162 = vunpack.c.l.b16 %v2154
      %v2163 = vunpack.c.l.b16 %v2155
      %v2164 = vunpack.c.h.b16 %v2154
      %v2165 = vunpack.c.h.b16 %v2155
      %v2166 = vunpack.c.l.b16 %v2156
      %v2167 = vunpack.c.l.b16 %v2157
      %v2168 = vunpack.c.h.b16 %v2156
      %v2169 = vunpack.c.h.b16 %v2157
      %v2170 = vpack.c.b16 %v2163, %v2162
      %v2171 = vpack.c.b16 %v2165, %v2164
      %v2172 = vpack.c.b16 %v2167, %v2166
      %v2173 = vpack.c.b16 %v2169, %v2168
      %2178 = vst [vmem:[#allocation2 + $0x228] sm:$0xff] %v2170
      %2179 = vst [vmem:[#allocation2 + $0x230] sm:$0xff] %v2171
      %2180 = vst [vmem:[#allocation2 + $0x238] sm:$0xff] %v2172
      %2181 = vst [vmem:[#allocation2 + $0x240] sm:$0xff] %v2173
      %2182 = vrot.lane.b32.xlu0 %v1786, 112
      %v2183 = vpop.permute.xlu0 %2182
      %2184 = vrot.lane.b32.xlu0 %v1788, 112
      %v2185 = vpop.permute.xlu0 %2184
      %2186 = vrot.lane.b32.xlu0 %v1790, 112
      %v2187 = vpop.permute.xlu0 %2186
      %2188 = vrot.lane.b32.xlu0 %v1792, 112
      %v2189 = vpop.permute.xlu0 %2188
      %2190 = vrot.lane.b32.xlu0 %v1787, 112
      %v2191 = vpop.permute.xlu0 %2190
      %2192 = vrot.lane.b32.xlu0 %v1789, 112
      %v2193 = vpop.permute.xlu0 %2192
      %2194 = vrot.lane.b32.xlu0 %v1791, 112
      %v2195 = vpop.permute.xlu0 %2194
      %2196 = vrot.lane.b32.xlu0 %v1793, 112
      %v2197 = vpop.permute.xlu0 %2196
      %v2198 = vsel %vm597, %v2183, %v2191
      %v2199 = vsel %vm597, %v2185, %v2193
      %v2200 = vsel %vm597, %v2187, %v2195
      %v2201 = vsel %vm597, %v2189, %v2197
      %v2202 = vsel %vm597, %v2191, %v2183
      %v2203 = vsel %vm597, %v2193, %v2185
      %v2204 = vsel %vm597, %v2195, %v2187
      %v2205 = vsel %vm597, %v2197, %v2189
      %v2206 = vmul.f32 %v2198, %v603
      %v2207 = vmul.f32 %v2202, %v607
      %v2208 = vmul.f32 %v2199, %v603
      %v2209 = vmul.f32 %v2203, %v607
      %v2210 = vmul.f32 %v2200, %v603
      %v2211 = vmul.f32 %v2204, %v607
      %v2212 = vmul.f32 %v2201, %v603
      %v2213 = vmul.f32 %v2205, %v607
      %v2214 = vpack.c.bf16 %v2208, %v2206
      %v2215 = vpack.c.bf16 %v2209, %v2207
      %v2216 = vpack.c.bf16 %v2212, %v2210
      %v2217 = vpack.c.bf16 %v2213, %v2211
      %v2222 = vunpack.c.l.b16 %v2214
      %v2223 = vunpack.c.l.b16 %v2215
      %v2224 = vunpack.c.h.b16 %v2214
      %v2225 = vunpack.c.h.b16 %v2215
      %v2226 = vunpack.c.l.b16 %v2216
      %v2227 = vunpack.c.l.b16 %v2217
      %v2228 = vunpack.c.h.b16 %v2216
      %v2229 = vunpack.c.h.b16 %v2217
      %v2230 = vpack.c.b16 %v2223, %v2222
      %v2231 = vpack.c.b16 %v2225, %v2224
      %v2232 = vpack.c.b16 %v2227, %v2226
      %v2233 = vpack.c.b16 %v2229, %v2228
      %2238 = vst [vmem:[#allocation2 + $0x248] sm:$0xff] %v2230
      %2239 = vst [vmem:[#allocation2 + $0x250] sm:$0xff] %v2231
      %2240 = vst [vmem:[#allocation2 + $0x258] sm:$0xff] %v2232
      %2241 = vst [vmem:[#allocation2 + $0x260] sm:$0xff] %v2233
      %2242 = vrot.lane.b32.xlu0 %v1786, 111
      %v2243 = vpop.permute.xlu0 %2242
      %2244 = vrot.lane.b32.xlu0 %v1788, 111
      %v2245 = vpop.permute.xlu0 %2244
      %2246 = vrot.lane.b32.xlu0 %v1790, 111
      %v2247 = vpop.permute.xlu0 %2246
      %2248 = vrot.lane.b32.xlu0 %v1792, 111
      %v2249 = vpop.permute.xlu0 %2248
      %2250 = vrot.lane.b32.xlu0 %v1787, 111
      %v2251 = vpop.permute.xlu0 %2250
      %2252 = vrot.lane.b32.xlu0 %v1789, 111
      %v2253 = vpop.permute.xlu0 %2252
      %2254 = vrot.lane.b32.xlu0 %v1791, 111
      %v2255 = vpop.permute.xlu0 %2254
      %2256 = vrot.lane.b32.xlu0 %v1793, 111
      %v2257 = vpop.permute.xlu0 %2256
      %v2258 = vsel %vm623, %v2243, %v2251
      %v2259 = vsel %vm623, %v2245, %v2253
      %v2260 = vsel %vm623, %v2247, %v2255
      %v2261 = vsel %vm623, %v2249, %v2257
      %v2262 = vsel %vm623, %v2251, %v2243
      %v2263 = vsel %vm623, %v2253, %v2245
      %v2264 = vsel %vm623, %v2255, %v2247
      %v2265 = vsel %vm623, %v2257, %v2249
      %v2266 = vmul.f32 %v2258, %v629
      %v2267 = vmul.f32 %v2262, %v633
      %v2268 = vmul.f32 %v2259, %v629
      %v2269 = vmul.f32 %v2263, %v633
      %v2270 = vmul.f32 %v2260, %v629
      %v2271 = vmul.f32 %v2264, %v633
      %v2272 = vmul.f32 %v2261, %v629
      %v2273 = vmul.f32 %v2265, %v633
      %v2274 = vpack.c.bf16 %v2268, %v2266
      %v2275 = vpack.c.bf16 %v2269, %v2267
      %v2276 = vpack.c.bf16 %v2272, %v2270
      %v2277 = vpack.c.bf16 %v2273, %v2271
      %v2282 = vunpack.c.l.b16 %v2274
      %v2283 = vunpack.c.l.b16 %v2275
      %v2284 = vunpack.c.h.b16 %v2274
      %v2285 = vunpack.c.h.b16 %v2275
      %v2286 = vunpack.c.l.b16 %v2276
      %v2287 = vunpack.c.l.b16 %v2277
      %v2288 = vunpack.c.h.b16 %v2276
      %v2289 = vunpack.c.h.b16 %v2277
      %v2290 = vpack.c.b16 %v2283, %v2282
      %v2291 = vpack.c.b16 %v2285, %v2284
      %v2292 = vpack.c.b16 %v2287, %v2286
      %v2293 = vpack.c.b16 %v2289, %v2288
      %2298 = vst [vmem:[#allocation2 + $0x268] sm:$0xff] %v2290
      %2299 = vst [vmem:[#allocation2 + $0x270] sm:$0xff] %v2291
      %2300 = vst [vmem:[#allocation2 + $0x278] sm:$0xff] %v2292
      %2301 = vst [vmem:[#allocation2 + $0x280] sm:$0xff] %v2293
      %v2302 = vld [vmem:[%s4] sm:$0xff]
      %v2303 = vld [vmem:[%s4 + $0x8] sm:$0xff]
      %v2304 = vld [vmem:[%s4 + $0x10] sm:$0xff]
      %v2305 = vld [vmem:[%s4 + $0x18] sm:$0xff]
      %v2306 = vld [vmem:[%s4 + $0x20] sm:$0xff]
      %v2307 = vld [vmem:[%s4 + $0x28] sm:$0xff]
      %v2308 = vld [vmem:[%s4 + $0x30] sm:$0xff]
      %v2309 = vld [vmem:[%s4 + $0x38] sm:$0xff]
      %v2310 = vld [vmem:[%s4 + $0x40] sm:$0xff]
      %v2311 = vld [vmem:[%s4 + $0x48] sm:$0xff]
      %v2312 = vld [vmem:[%s4 + $0x50] sm:$0xff]
      %v2313 = vld [vmem:[%s4 + $0x58] sm:$0xff]
      %v2314 = vld [vmem:[#allocation2] sm:$0xff]
      %v2315 = vld [vmem:[#allocation2 + $0x8] sm:$0xff]
      %v2316 = vld [vmem:[#allocation2 + $0x10] sm:$0xff]
      %v2317 = vld [vmem:[#allocation2 + $0x18] sm:$0xff]
      %v2318 = vld [vmem:[#allocation2 + $0x20] sm:$0xff]
      %v2319 = vld [vmem:[#allocation2 + $0x28] sm:$0xff]
      %v2320 = vld [vmem:[#allocation2 + $0x30] sm:$0xff]
      %v2321 = vld [vmem:[#allocation2 + $0x38] sm:$0xff]
      %v2322 = vld [vmem:[#allocation2 + $0x40] sm:$0xff]
      %v2323 = vld [vmem:[#allocation2 + $0x48] sm:$0xff]
      %v2324 = vld [vmem:[#allocation2 + $0x50] sm:$0xff]
      %v2325 = vld [vmem:[#allocation2 + $0x58] sm:$0xff]
      %v2326 = vld [vmem:[#allocation2 + $0x60] sm:$0xff]
      %v2327 = vld [vmem:[#allocation2 + $0x68] sm:$0xff]
      %v2328 = vld [vmem:[#allocation2 + $0x70] sm:$0xff]
      %v2329 = vld [vmem:[#allocation2 + $0x78] sm:$0xff]
      %v2330 = vld [vmem:[#allocation2 + $0x80] sm:$0xff]
      %v2331 = vld [vmem:[#allocation2 + $0x88] sm:$0xff]
      %v2332 = vld [vmem:[#allocation2 + $0x90] sm:$0xff]
      %v2333 = vld [vmem:[#allocation2 + $0x98] sm:$0xff]
      %v2334 = vld [vmem:[#allocation2 + $0xa0] sm:$0xff]
      %v2335 = vld [vmem:[#allocation2 + $0xa8] sm:$0xff]
      %v2336 = vld [vmem:[#allocation2 + $0xb0] sm:$0xff]
      %v2337 = vld [vmem:[#allocation2 + $0xb8] sm:$0xff]
      %v2338 = vld [vmem:[#allocation2 + $0xc0] sm:$0xff]
      %v2339 = vld [vmem:[#allocation2 + $0xc8] sm:$0xff]
      %v2340 = vld [vmem:[#allocation2 + $0xd0] sm:$0xff]
      %v2341 = vld [vmem:[#allocation2 + $0xd8] sm:$0xff]
      %v2342 = vld [vmem:[#allocation2 + $0xe0] sm:$0xff]
      %v2343 = vld [vmem:[#allocation2 + $0xe8] sm:$0xff]
      %v2344 = vld [vmem:[#allocation2 + $0xf0] sm:$0xff]
      %v2345 = vld [vmem:[#allocation2 + $0xf8] sm:$0xff]
      %v2346 = vld [vmem:[#allocation2 + $0x100] sm:$0xff]
      %v2347 = vld [vmem:[#allocation2 + $0x108] sm:$0xff]
      %v2348 = vld [vmem:[#allocation2 + $0x110] sm:$0xff]
      %v2349 = vld [vmem:[#allocation2 + $0x118] sm:$0xff]
      %v2350 = vld [vmem:[#allocation2 + $0x120] sm:$0xff]
      %v2351 = vld [vmem:[#allocation2 + $0x128] sm:$0xff]
      %v2352 = vld [vmem:[#allocation2 + $0x130] sm:$0xff]
      %v2353 = vld [vmem:[#allocation2 + $0x138] sm:$0xff]
      %v2354 = vld [vmem:[#allocation2 + $0x140] sm:$0xff]
      %v2355 = vld [vmem:[#allocation2 + $0x148] sm:$0xff]
      %v2356 = vld [vmem:[#allocation2 + $0x150] sm:$0xff]
      %v2357 = vld [vmem:[#allocation2 + $0x158] sm:$0xff]
      %v2358 = vld [vmem:[#allocation2 + $0x160] sm:$0xff]
      %v2359 = vld [vmem:[#allocation2 + $0x168] sm:$0xff]
      %v2360 = vld [vmem:[#allocation2 + $0x170] sm:$0xff]
      %v2361 = vld [vmem:[#allocation2 + $0x178] sm:$0xff]
      %v2362 = vld [vmem:[#allocation2 + $0x180] sm:$0xff]
      %v2363 = vld [vmem:[#allocation2 + $0x188] sm:$0xff]
      %v2364 = vld [vmem:[#allocation2 + $0x190] sm:$0xff]
      %v2365 = vld [vmem:[#allocation2 + $0x198] sm:$0xff]
      %v2366 = vld [vmem:[#allocation2 + $0x1a0] sm:$0xff]
      %v2367 = vld [vmem:[#allocation2 + $0x1a8] sm:$0xff]
      %v2368 = vld [vmem:[#allocation2 + $0x1b0] sm:$0xff]
      %v2369 = vld [vmem:[#allocation2 + $0x1b8] sm:$0xff]
      %v2370 = vld [vmem:[#allocation2 + $0x1c0] sm:$0xff]
      %v2371 = vld [vmem:[#allocation2 + $0x1c8] sm:$0xff]
      %v2372 = vld [vmem:[#allocation2 + $0x1d0] sm:$0xff]
      %v2373 = vld [vmem:[#allocation2 + $0x1d8] sm:$0xff]
      %v2374 = vld [vmem:[#allocation2 + $0x1e0] sm:$0xff]
      %v2375 = vld [vmem:[#allocation2 + $0x1e8] sm:$0xff]
      %v2376 = vld [vmem:[#allocation2 + $0x1f0] sm:$0xff]
      %v2377 = vld [vmem:[#allocation2 + $0x1f8] sm:$0xff]
      %v2378 = vld [vmem:[#allocation2 + $0x200] sm:$0xff]
      %v2379 = vld [vmem:[#allocation2 + $0x208] sm:$0xff]
      %v2380 = vld [vmem:[#allocation2 + $0x210] sm:$0xff]
      %v2381 = vld [vmem:[#allocation2 + $0x218] sm:$0xff]
      %v2382 = vld [vmem:[#allocation2 + $0x220] sm:$0xff]
      %v2383 = vld [vmem:[#allocation2 + $0x228] sm:$0xff]
      %v2384 = vld [vmem:[#allocation2 + $0x230] sm:$0xff]
      %v2385 = vld [vmem:[#allocation2 + $0x238] sm:$0xff]
      %v2386 = vld [vmem:[#allocation2 + $0x240] sm:$0xff]
      %v2387 = vld [vmem:[#allocation2 + $0x248] sm:$0xff]
      %v2388 = vld [vmem:[#allocation2 + $0x250] sm:$0xff]
      %v2389 = vld [vmem:[#allocation2 + $0x258] sm:$0xff]
      %v2390 = vld [vmem:[#allocation2 + $0x260] sm:$0xff]
      %v2391 = vld [vmem:[#allocation2 + $0x268] sm:$0xff]
      %v2392 = vld [vmem:[#allocation2 + $0x270] sm:$0xff]
      %v2393 = vld [vmem:[#allocation2 + $0x278] sm:$0xff]
      %v2394 = vld [vmem:[#allocation2 + $0x280] sm:$0xff]
      %v2395 = vld [vmem:[%s9] sm:$0xff]
      %v2396 = vld [vmem:[%s9 + $0x8] sm:$0xff]
      %v2397 = vld [vmem:[%s9 + $0x10] sm:$0xff]
      %v2398 = vld [vmem:[%s9 + $0x18] sm:$0xff]
      %2400 = vset.pattern.permute.xlu0 0
      %2401 = vperm.xlu0 %2400, %v2395
      %v2402 = vpop.permute.xlu0 %2401
      %2405 = vset.pattern.permute.xlu0 0
      %2406 = vperm.xlu0 %2405, %v2396
      %v2407 = vpop.permute.xlu0 %2406
      %2410 = vset.pattern.permute.xlu0 0
      %2411 = vperm.xlu0 %2410, %v2397
      %v2412 = vpop.permute.xlu0 %2411
      %2415 = vset.pattern.permute.xlu0 0
      %2416 = vperm.xlu0 %2415, %v2398
      %v2417 = vpop.permute.xlu0 %2416
      %v2431 = vunpack.c.l.b16 %v2302
      %v2432 = vunpack.c.h.b16 %v2302
      %v2433 = vunpack.c.l.b16 %v2303
      %v2434 = vunpack.c.h.b16 %v2303
      %v2435 = vunpack.c.l.b16 %v2304
      %v2436 = vunpack.c.h.b16 %v2304
      %v2437 = vunpack.c.l.b16 %v2305
      %v2438 = vunpack.c.h.b16 %v2305
      %v2439 = vunpack.c.l.b16 %v2306
      %v2440 = vunpack.c.h.b16 %v2306
      %v2441 = vunpack.c.l.b16 %v2307
      %v2442 = vunpack.c.h.b16 %v2307
      %v2443 = vunpack.c.l.b16 %v2308
      %v2444 = vunpack.c.h.b16 %v2308
      %v2445 = vunpack.c.l.b16 %v2309
      %v2446 = vunpack.c.h.b16 %v2309
      %v2447 = vunpack.c.l.b16 %v2310
      %v2448 = vunpack.c.h.b16 %v2310
      %v2449 = vunpack.c.l.b16 %v2311
      %v2450 = vunpack.c.h.b16 %v2311
      %v2451 = vunpack.c.l.b16 %v2312
      %v2452 = vunpack.c.h.b16 %v2312
      %v2453 = vunpack.c.l.b16 %v2313
      %v2454 = vunpack.c.h.b16 %v2313
      %v2455 = vpack.c.b16 %v2437, %v2431
      %v2456 = vpack.c.b16 %v2438, %v2432
      %v2457 = vpack.c.b16 %v2439, %v2433
      %v2458 = vpack.c.b16 %v2440, %v2434
      %v2459 = vpack.c.b16 %v2441, %v2435
      %v2460 = vpack.c.b16 %v2442, %v2436
      %v2461 = vpack.c.b16 %v2449, %v2443
      %v2462 = vpack.c.b16 %v2450, %v2444
      %v2463 = vpack.c.b16 %v2451, %v2445
      %v2464 = vpack.c.b16 %v2452, %v2446
      %v2465 = vpack.c.b16 %v2453, %v2447
      %v2466 = vpack.c.b16 %v2454, %v2448
      %v2558 = vunpack.c.l.b16 %v2314
      %v2559 = vunpack.c.h.b16 %v2314
      %v2560 = vunpack.c.l.b16 %v2315
      %v2561 = vunpack.c.h.b16 %v2315
      %v2562 = vunpack.c.l.b16 %v2316
      %v2563 = vunpack.c.h.b16 %v2316
      %v2564 = vunpack.c.l.b16 %v2317
      %v2565 = vunpack.c.h.b16 %v2317
      %v2566 = vunpack.c.l.b16 %v2318
      %v2567 = vunpack.c.h.b16 %v2318
      %v2568 = vunpack.c.l.b16 %v2319
      %v2569 = vunpack.c.h.b16 %v2319
      %v2570 = vunpack.c.l.b16 %v2320
      %v2571 = vunpack.c.h.b16 %v2320
      %v2572 = vunpack.c.l.b16 %v2321
      %v2573 = vunpack.c.h.b16 %v2321
      %v2574 = vunpack.c.l.b16 %v2322
      %v2575 = vunpack.c.h.b16 %v2322
      %v2576 = vunpack.c.l.b16 %v2323
      %v2577 = vunpack.c.h.b16 %v2323
      %v2578 = vunpack.c.l.b16 %v2324
      %v2579 = vunpack.c.h.b16 %v2324
      %v2580 = vunpack.c.l.b16 %v2325
      %v2581 = vunpack.c.h.b16 %v2325
      %v2582 = vunpack.c.l.b16 %v2326
      %v2583 = vunpack.c.h.b16 %v2326
      %v2584 = vunpack.c.l.b16 %v2327
      %v2585 = vunpack.c.h.b16 %v2327
      %v2586 = vunpack.c.l.b16 %v2328
      %v2587 = vunpack.c.h.b16 %v2328
      %v2588 = vunpack.c.l.b16 %v2329
      %v2589 = vunpack.c.h.b16 %v2329
      %v2590 = vunpack.c.l.b16 %v2330
      %v2591 = vunpack.c.h.b16 %v2330
      %v2592 = vunpack.c.l.b16 %v2331
      %v2593 = vunpack.c.h.b16 %v2331
      %v2594 = vunpack.c.l.b16 %v2332
      %v2595 = vunpack.c.h.b16 %v2332
      %v2596 = vunpack.c.l.b16 %v2333
      %v2597 = vunpack.c.h.b16 %v2333
      %v2598 = vunpack.c.l.b16 %v2334
      %v2599 = vunpack.c.h.b16 %v2334
      %v2600 = vunpack.c.l.b16 %v2335
      %v2601 = vunpack.c.h.b16 %v2335
      %v2602 = vunpack.c.l.b16 %v2336
      %v2603 = vunpack.c.h.b16 %v2336
      %v2604 = vunpack.c.l.b16 %v2337
      %v2605 = vunpack.c.h.b16 %v2337
      %v2606 = vunpack.c.l.b16 %v2338
      %v2607 = vunpack.c.h.b16 %v2338
      %v2608 = vunpack.c.l.b16 %v2339
      %v2609 = vunpack.c.h.b16 %v2339
      %v2610 = vunpack.c.l.b16 %v2340
      %v2611 = vunpack.c.h.b16 %v2340
      %v2612 = vunpack.c.l.b16 %v2341
      %v2613 = vunpack.c.h.b16 %v2341
      %v2614 = vunpack.c.l.b16 %v2342
      %v2615 = vunpack.c.h.b16 %v2342
      %v2616 = vunpack.c.l.b16 %v2343
      %v2617 = vunpack.c.h.b16 %v2343
      %v2618 = vunpack.c.l.b16 %v2344
      %v2619 = vunpack.c.h.b16 %v2344
      %v2620 = vunpack.c.l.b16 %v2345
      %v2621 = vunpack.c.h.b16 %v2345
      %v2622 = vunpack.c.l.b16 %v2346
      %v2623 = vunpack.c.h.b16 %v2346
      %v2624 = vunpack.c.l.b16 %v2347
      %v2625 = vunpack.c.h.b16 %v2347
      %v2626 = vunpack.c.l.b16 %v2348
      %v2627 = vunpack.c.h.b16 %v2348
      %v2628 = vunpack.c.l.b16 %v2349
      %v2629 = vunpack.c.h.b16 %v2349
      %v2630 = vunpack.c.l.b16 %v2350
      %v2631 = vunpack.c.h.b16 %v2350
      %v2632 = vunpack.c.l.b16 %v2351
      %v2633 = vunpack.c.h.b16 %v2351
      %v2634 = vunpack.c.l.b16 %v2352
      %v2635 = vunpack.c.h.b16 %v2352
      %v2636 = vunpack.c.l.b16 %v2353
      %v2637 = vunpack.c.h.b16 %v2353
      %v2638 = vunpack.c.l.b16 %v2354
      %v2639 = vunpack.c.h.b16 %v2354
      %v2640 = vunpack.c.l.b16 %v2355
      %v2641 = vunpack.c.h.b16 %v2355
      %v2642 = vunpack.c.l.b16 %v2356
      %v2643 = vunpack.c.h.b16 %v2356
      %v2644 = vunpack.c.l.b16 %v2357
      %v2645 = vunpack.c.h.b16 %v2357
      %v2646 = vunpack.c.l.b16 %v2358
      %v2647 = vunpack.c.h.b16 %v2358
      %v2648 = vunpack.c.l.b16 %v2359
      %v2649 = vunpack.c.h.b16 %v2359
      %v2650 = vunpack.c.l.b16 %v2360
      %v2651 = vunpack.c.h.b16 %v2360
      %v2652 = vunpack.c.l.b16 %v2361
      %v2653 = vunpack.c.h.b16 %v2361
      %v2654 = vunpack.c.l.b16 %v2362
      %v2655 = vunpack.c.h.b16 %v2362
      %v2656 = vunpack.c.l.b16 %v2363
      %v2657 = vunpack.c.h.b16 %v2363
      %v2658 = vunpack.c.l.b16 %v2364
      %v2659 = vunpack.c.h.b16 %v2364
      %v2660 = vunpack.c.l.b16 %v2365
      %v2661 = vunpack.c.h.b16 %v2365
      %v2662 = vunpack.c.l.b16 %v2366
      %v2663 = vunpack.c.h.b16 %v2366
      %v2664 = vunpack.c.l.b16 %v2367
      %v2665 = vunpack.c.h.b16 %v2367
      %v2666 = vunpack.c.l.b16 %v2368
      %v2667 = vunpack.c.h.b16 %v2368
      %v2668 = vunpack.c.l.b16 %v2369
      %v2669 = vunpack.c.h.b16 %v2369
      %v2670 = vunpack.c.l.b16 %v2370
      %v2671 = vunpack.c.h.b16 %v2370
      %v2672 = vunpack.c.l.b16 %v2371
      %v2673 = vunpack.c.h.b16 %v2371
      %v2674 = vunpack.c.l.b16 %v2372
      %v2675 = vunpack.c.h.b16 %v2372
      %v2676 = vunpack.c.l.b16 %v2373
      %v2677 = vunpack.c.h.b16 %v2373
      %v2678 = vunpack.c.l.b16 %v2374
      %v2679 = vunpack.c.h.b16 %v2374
      %v2680 = vunpack.c.l.b16 %v2375
      %v2681 = vunpack.c.h.b16 %v2375
      %v2682 = vunpack.c.l.b16 %v2376
      %v2683 = vunpack.c.h.b16 %v2376
      %v2684 = vunpack.c.l.b16 %v2377
      %v2685 = vunpack.c.h.b16 %v2377
      %v2686 = vunpack.c.l.b16 %v2378
      %v2687 = vunpack.c.h.b16 %v2378
      %v2688 = vunpack.c.l.b16 %v2379
      %v2689 = vunpack.c.h.b16 %v2379
      %v2690 = vunpack.c.l.b16 %v2380
      %v2691 = vunpack.c.h.b16 %v2380
      %v2692 = vunpack.c.l.b16 %v2381
      %v2693 = vunpack.c.h.b16 %v2381
      %v2694 = vunpack.c.l.b16 %v2382
      %v2695 = vunpack.c.h.b16 %v2382
      %v2696 = vunpack.c.l.b16 %v2383
      %v2697 = vunpack.c.h.b16 %v2383
      %v2698 = vunpack.c.l.b16 %v2384
      %v2699 = vunpack.c.h.b16 %v2384
      %v2700 = vunpack.c.l.b16 %v2385
      %v2701 = vunpack.c.h.b16 %v2385
      %v2702 = vunpack.c.l.b16 %v2386
      %v2703 = vunpack.c.h.b16 %v2386
      %v2704 = vunpack.c.l.b16 %v2387
      %v2705 = vunpack.c.h.b16 %v2387
      %v2706 = vunpack.c.l.b16 %v2388
      %v2707 = vunpack.c.h.b16 %v2388
      %v2708 = vunpack.c.l.b16 %v2389
      %v2709 = vunpack.c.h.b16 %v2389
      %v2710 = vunpack.c.l.b16 %v2390
      %v2711 = vunpack.c.h.b16 %v2390
      %v2712 = vunpack.c.l.b16 %v2391
      %v2713 = vunpack.c.h.b16 %v2391
      %v2714 = vunpack.c.l.b16 %v2392
      %v2715 = vunpack.c.h.b16 %v2392
      %v2716 = vunpack.c.l.b16 %v2393
      %v2717 = vunpack.c.h.b16 %v2393
      %v2718 = vunpack.c.l.b16 %v2394
      %v2719 = vunpack.c.h.b16 %v2394
      %v2720 = vpack.c.b16 %v2560, %v2558
      %v2721 = vpack.c.b16 %v2561, %v2559
      %v2722 = vpack.c.b16 %v2564, %v2562
      %v2723 = vpack.c.b16 %v2565, %v2563
      %v2724 = vpack.c.b16 %v2568, %v2566
      %v2725 = vpack.c.b16 %v2569, %v2567
      %v2726 = vpack.c.b16 %v2572, %v2570
      %v2727 = vpack.c.b16 %v2573, %v2571
      %v2728 = vpack.c.b16 %v2576, %v2574
      %v2729 = vpack.c.b16 %v2577, %v2575
      %v2730 = vpack.c.b16 %v2580, %v2578
      %v2731 = vpack.c.b16 %v2581, %v2579
      %v2732 = vpack.c.b16 %v2584, %v2582
      %v2733 = vpack.c.b16 %v2585, %v2583
      %v2734 = vpack.c.b16 %v2588, %v2586
      %v2735 = vpack.c.b16 %v2589, %v2587
      %v2736 = vpack.c.b16 %v2592, %v2590
      %v2737 = vpack.c.b16 %v2593, %v2591
      %v2738 = vpack.c.b16 %v2596, %v2594
      %v2739 = vpack.c.b16 %v2597, %v2595
      %v2740 = vpack.c.b16 %v2600, %v2598
      %v2741 = vpack.c.b16 %v2601, %v2599
      %v2742 = vpack.c.b16 %v2604, %v2602
      %v2743 = vpack.c.b16 %v2605, %v2603
      %v2744 = vpack.c.b16 %v2608, %v2606
      %v2745 = vpack.c.b16 %v2609, %v2607
      %v2746 = vpack.c.b16 %v2612, %v2610
      %v2747 = vpack.c.b16 %v2613, %v2611
      %v2748 = vpack.c.b16 %v2616, %v2614
      %v2749 = vpack.c.b16 %v2617, %v2615
      %v2750 = vpack.c.b16 %v2620, %v2618
      %v2751 = vpack.c.b16 %v2621, %v2619
      %v2752 = vpack.c.b16 %v2624, %v2622
      %v2753 = vpack.c.b16 %v2625, %v2623
      %v2754 = vpack.c.b16 %v2628, %v2626
      %v2755 = vpack.c.b16 %v2629, %v2627
      %v2756 = vpack.c.b16 %v2632, %v2630
      %v2757 = vpack.c.b16 %v2633, %v2631
      %v2758 = vpack.c.b16 %v2636, %v2634
      %v2759 = vpack.c.b16 %v2637, %v2635
      %v2760 = vpack.c.b16 %v2640, %v2638
      %v2761 = vpack.c.b16 %v2641, %v2639
      %v2762 = vpack.c.b16 %v2644, %v2642
      %v2763 = vpack.c.b16 %v2645, %v2643
      %v2764 = vpack.c.b16 %v2648, %v2646
      %v2765 = vpack.c.b16 %v2649, %v2647
      %v2766 = vpack.c.b16 %v2652, %v2650
      %v2767 = vpack.c.b16 %v2653, %v2651
      %v2768 = vpack.c.b16 %v2656, %v2654
      %v2769 = vpack.c.b16 %v2657, %v2655
      %v2770 = vpack.c.b16 %v2660, %v2658
      %v2771 = vpack.c.b16 %v2661, %v2659
      %v2772 = vpack.c.b16 %v2664, %v2662
      %v2773 = vpack.c.b16 %v2665, %v2663
      %v2774 = vpack.c.b16 %v2668, %v2666
      %v2775 = vpack.c.b16 %v2669, %v2667
      %v2776 = vpack.c.b16 %v2672, %v2670
      %v2777 = vpack.c.b16 %v2673, %v2671
      %v2778 = vpack.c.b16 %v2676, %v2674
      %v2779 = vpack.c.b16 %v2677, %v2675
      %v2780 = vpack.c.b16 %v2680, %v2678
      %v2781 = vpack.c.b16 %v2681, %v2679
      %v2782 = vpack.c.b16 %v2684, %v2682
      %v2783 = vpack.c.b16 %v2685, %v2683
      %v2784 = vpack.c.b16 %v2688, %v2686
      %v2785 = vpack.c.b16 %v2689, %v2687
      %v2786 = vpack.c.b16 %v2692, %v2690
      %v2787 = vpack.c.b16 %v2693, %v2691
      %v2788 = vpack.c.b16 %v2696, %v2694
      %v2789 = vpack.c.b16 %v2697, %v2695
      %v2790 = vpack.c.b16 %v2700, %v2698
      %v2791 = vpack.c.b16 %v2701, %v2699
      %v2792 = vpack.c.b16 %v2704, %v2702
      %v2793 = vpack.c.b16 %v2705, %v2703
      %v2794 = vpack.c.b16 %v2708, %v2706
      %v2795 = vpack.c.b16 %v2709, %v2707
      %v2796 = vpack.c.b16 %v2712, %v2710
      %v2797 = vpack.c.b16 %v2713, %v2711
      %v2798 = vpack.c.b16 %v2716, %v2714
      %v2799 = vpack.c.b16 %v2717, %v2715
      %v2800 = vpack.c.b16 %v2718, %v2718
      %v2801 = vpack.c.b16 %v2719, %v2719
      %vm2882 = vcmask 64512
      %v2884 = vsel %vm2882, %v2460, 0
      %v2887 = vsel %vm2882, %v2466, 0
      %v2890 = vsel %vm423, %v2800, 0
      %v2893 = vsel %vm423, %v2801, 0
      %2895 = vmatprep.subr.bf16.mxu0 %v2721
      %2896 = vmatpush1.bf16.msra.mxu0 %v2720
      %2897 = vmatprep.subr.bf16.mxu0 %v2723
      %2898 = vmatpush1.bf16.msra.mxu0 %v2722
      %2899 = vmatprep.subr.bf16.mxu0 %v2725
      %2900 = vmatpush1.bf16.msra.mxu0 %v2724
      %2901 = vmatprep.subr.bf16.mxu0 %v2727
      %2902 = vmatpush1.bf16.msra.mxu0 %v2726
      %2903 = vmatprep.subr.bf16.mxu0 %v2729
      %2904 = vmatpush1.bf16.msra.mxu0 %v2728
      %2905 = vmatprep.subr.bf16.mxu0 %v2731
      %2906 = vmatpush1.bf16.msra.mxu0 %v2730
      %2907 = vmatprep.subr.bf16.mxu0 %v2733
      %2908 = vmatpush1.bf16.msra.mxu0 %v2732
      %2909 = vmatprep.subr.bf16.mxu0 %v2735
      %2910 = vmatpush1.bf16.msra.mxu0 %v2734
      %2911 = vmatprep.subr.bf16.mxu0 %v2737
      %2912 = vmatpush1.bf16.msra.mxu0 %v2736
      %2913 = vmatprep.subr.bf16.mxu0 %v2739
      %2914 = vmatpush1.bf16.msra.mxu0 %v2738
      %2915 = vmatprep.subr.bf16.mxu0 %v2741
      %2916 = vmatpush1.bf16.msra.mxu0 %v2740
      %2917 = vmatprep.subr.bf16.mxu0 %v2743
      %2918 = vmatpush1.bf16.msra.mxu0 %v2742
      %2919 = vmatprep.subr.bf16.mxu0 %v2745
      %2920 = vmatpush1.bf16.msra.mxu0 %v2744
      %2921 = vmatprep.subr.bf16.mxu0 %v2747
      %2922 = vmatpush1.bf16.msra.mxu0 %v2746
      %2923 = vmatprep.subr.bf16.mxu0 %v2749
      %2924 = vmatpush1.bf16.msra.mxu0 %v2748
      %2925 = vmatprep.subr.bf16.mxu0 %v2751
      %2926 = vmatpush1.bf16.msra.mxu0 %v2750
      %2927 = vmatprep.mubr.bf16.mxu0 %v2456
      %2928 = vmatmul.mubr.bf16.gmra.mrb[0].mxu0 %v2455
      %v2929 = vpop.f32.mrb[0].mxu0
      %v2930 = vadd.f32 %v2402, %v2929
      %v2931 = vpop.f32.mrb[0].mxu0
      %v2932 = vadd.f32 %v2402, %v2931
      %v2933 = vpop.f32.mrb[0].mxu0
      %v2934 = vadd.f32 %v2407, %v2933
      %v2935 = vpop.f32.mrb[0].mxu0
      %v2936 = vadd.f32 %v2407, %v2935
      %2937 = vmatprep.mubr.bf16.mxu0 %v2462
      %2938 = vmatmul.mubr.bf16.gmra.mrb[0].mxu0 %v2461
      %v2939 = vpop.f32.mrb[0].mxu0
      %v2940 = vadd.f32 %v2412, %v2939
      %v2941 = vpop.f32.mrb[0].mxu0
      %v2942 = vadd.f32 %v2412, %v2941
      %v2943 = vpop.f32.mrb[0].mxu0
      %v2944 = vadd.f32 %v2417, %v2943
      %v2945 = vpop.f32.mrb[0].mxu0
      %v2946 = vadd.f32 %v2417, %v2945
      %2947 = vdwg.mxu0
      %2948 = vmatprep.subr.bf16.mxu0 %v2753
      %2949 = vmatpush1.bf16.msra.mxu0 %v2752
      %2950 = vmatprep.subr.bf16.mxu0 %v2755
      %2951 = vmatpush1.bf16.msra.mxu0 %v2754
      %2952 = vmatprep.subr.bf16.mxu0 %v2757
      %2953 = vmatpush1.bf16.msra.mxu0 %v2756
      %2954 = vmatprep.subr.bf16.mxu0 %v2759
      %2955 = vmatpush1.bf16.msra.mxu0 %v2758
      %2956 = vmatprep.subr.bf16.mxu0 %v2761
      %2957 = vmatpush1.bf16.msra.mxu0 %v2760
      %2958 = vmatprep.subr.bf16.mxu0 %v2763
      %2959 = vmatpush1.bf16.msra.mxu0 %v2762
      %2960 = vmatprep.subr.bf16.mxu0 %v2765
      %2961 = vmatpush1.bf16.msra.mxu0 %v2764
      %2962 = vmatprep.subr.bf16.mxu0 %v2767
      %2963 = vmatpush1.bf16.msra.mxu0 %v2766
      %2964 = vmatprep.subr.bf16.mxu0 %v2769
      %2965 = vmatpush1.bf16.msra.mxu0 %v2768
      %2966 = vmatprep.subr.bf16.mxu0 %v2771
      %2967 = vmatpush1.bf16.msra.mxu0 %v2770
      %2968 = vmatprep.subr.bf16.mxu0 %v2773
      %2969 = vmatpush1.bf16.msra.mxu0 %v2772
      %2970 = vmatprep.subr.bf16.mxu0 %v2775
      %2971 = vmatpush1.bf16.msra.mxu0 %v2774
      %2972 = vmatprep.subr.bf16.mxu0 %v2777
      %2973 = vmatpush1.bf16.msra.mxu0 %v2776
      %2974 = vmatprep.subr.bf16.mxu0 %v2779
      %2975 = vmatpush1.bf16.msra.mxu0 %v2778
      %2976 = vmatprep.subr.bf16.mxu0 %v2781
      %2977 = vmatpush1.bf16.msra.mxu0 %v2780
      %2978 = vmatprep.subr.bf16.mxu0 %v2783
      %2979 = vmatpush1.bf16.msra.mxu0 %v2782
      %2980 = vmatprep.mubr.bf16.mxu0 %v2458
      %2981 = vmatmul.mubr.bf16.gmra.mrb[0].mxu0 %v2457
      %v2982 = vpop.f32.mrb[0].mxu0
      %v2983 = vadd.f32 %v2930, %v2982
      %v2984 = vpop.f32.mrb[0].mxu0
      %v2985 = vadd.f32 %v2932, %v2984
      %v2986 = vpop.f32.mrb[0].mxu0
      %v2987 = vadd.f32 %v2934, %v2986
      %v2988 = vpop.f32.mrb[0].mxu0
      %v2989 = vadd.f32 %v2936, %v2988
      %2990 = vmatprep.mubr.bf16.mxu0 %v2464
      %2991 = vmatmul.mubr.bf16.gmra.mrb[0].mxu0 %v2463
      %v2992 = vpop.f32.mrb[0].mxu0
      %v2993 = vadd.f32 %v2940, %v2992
      %v2994 = vpop.f32.mrb[0].mxu0
      %v2995 = vadd.f32 %v2942, %v2994
      %v2996 = vpop.f32.mrb[0].mxu0
      %v2997 = vadd.f32 %v2944, %v2996
      %v2998 = vpop.f32.mrb[0].mxu0
      %v2999 = vadd.f32 %v2946, %v2998
      %3000 = vdwg.mxu0
      %3001 = vmatprep.subr.bf16.mxu0 %v2785
      %3002 = vmatpush1.bf16.msra.mxu0 %v2784
      %3003 = vmatprep.subr.bf16.mxu0 %v2787
      %3004 = vmatpush1.bf16.msra.mxu0 %v2786
      %3005 = vmatprep.subr.bf16.mxu0 %v2789
      %3006 = vmatpush1.bf16.msra.mxu0 %v2788
      %3007 = vmatprep.subr.bf16.mxu0 %v2791
      %3008 = vmatpush1.bf16.msra.mxu0 %v2790
      %3009 = vmatprep.subr.bf16.mxu0 %v2793
      %3010 = vmatpush1.bf16.msra.mxu0 %v2792
      %3011 = vmatprep.subr.bf16.mxu0 %v2795
      %3012 = vmatpush1.bf16.msra.mxu0 %v2794
      %3013 = vmatprep.subr.bf16.mxu0 %v2797
      %3014 = vmatpush1.bf16.msra.mxu0 %v2796
      %3015 = vmatprep.subr.bf16.mxu0 %v2799
      %3016 = vmatpush1.bf16.msra.mxu0 %v2798
      %3017 = vmatprep.subr.bf16.mxu0 %v2893
      %3018 = vmatpush1.bf16.msra.mxu0 %v2890
      %3019 = vmatprep.subr.bf16.mxu0 0
      %3020 = vmatpush1.bf16.msra.mxu0 0
      %3021 = vmatprep.subr.bf16.mxu0 0
      %3022 = vmatpush1.bf16.msra.mxu0 0
      %3023 = vmatprep.subr.bf16.mxu0 0
      %3024 = vmatpush1.bf16.msra.mxu0 0
      %3025 = vmatprep.subr.bf16.mxu0 0
      %3026 = vmatpush1.bf16.msra.mxu0 0
      %3027 = vmatprep.subr.bf16.mxu0 0
      %3028 = vmatpush1.bf16.msra.mxu0 0
      %3029 = vmatprep.subr.bf16.mxu0 0
      %3030 = vmatpush1.bf16.msra.mxu0 0
      %3031 = vmatprep.subr.bf16.mxu0 0
      %3032 = vmatpush1.bf16.msra.mxu0 0
      %3033 = vmatprep.mubr.bf16.mxu0 %v2884
      %3034 = vmatmul.mubr.bf16.gmra.mrb[0].mxu0 %v2459
      %v3035 = vpop.f32.mrb[0].mxu0
      %v3036 = vadd.f32 %v2983, %v3035
      %v3037 = vpop.f32.mrb[0].mxu0
      %v3038 = vadd.f32 %v2985, %v3037
      %v3039 = vpop.f32.mrb[0].mxu0
      %v3040 = vadd.f32 %v2987, %v3039
      %v3041 = vpop.f32.mrb[0].mxu0
      %v3042 = vadd.f32 %v2989, %v3041
      %3043 = vmatprep.mubr.bf16.mxu0 %v2887
      %3044 = vmatmul.mubr.bf16.gmra.mrb[0].mxu0 %v2465
      %v3045 = vpop.f32.mrb[0].mxu0
      %v3046 = vadd.f32 %v2993, %v3045
      %v3047 = vpop.f32.mrb[0].mxu0
      %v3048 = vadd.f32 %v2995, %v3047
      %v3049 = vpop.f32.mrb[0].mxu0
      %v3050 = vadd.f32 %v2997, %v3049
      %v3051 = vpop.f32.mrb[0].mxu0
      %v3052 = vadd.f32 %v2999, %v3051
      %3053 = vdwg.mxu0
      %v3054 = vmul.f32 %v3036, 0.2
      %v3055 = vmul.f32 %v3038, 0.2
      %v3056 = vmul.f32 %v3040, 0.2
      %v3057 = vmul.f32 %v3042, 0.2
      %v3058 = vmul.f32 %v3046, 0.2
      %v3059 = vmul.f32 %v3048, 0.2
      %v3060 = vmul.f32 %v3050, 0.2
      %v3061 = vmul.f32 %v3052, 0.2
      %v3062 = vmax.f32 %v3036, %v3054
      %v3063 = vmax.f32 %v3038, %v3055
      %v3064 = vmax.f32 %v3040, %v3056
      %v3065 = vmax.f32 %v3042, %v3057
      %v3066 = vmax.f32 %v3046, %v3058
      %v3067 = vmax.f32 %v3048, %v3059
      %v3068 = vmax.f32 %v3050, %v3060
      %v3069 = vmax.f32 %v3052, %v3061
      %3070 = vrot.lane.b32.xlu0 %v3062, 17
      %v3071 = vpop.permute.xlu0 %3070
      %3072 = vrot.lane.b32.xlu0 %v3064, 17
      %v3073 = vpop.permute.xlu0 %3072
      %3074 = vrot.lane.b32.xlu0 %v3066, 17
      %v3075 = vpop.permute.xlu0 %3074
      %3076 = vrot.lane.b32.xlu0 %v3068, 17
      %v3077 = vpop.permute.xlu0 %3076
      %3078 = vrot.lane.b32.xlu0 %v3063, 17
      %v3079 = vpop.permute.xlu0 %3078
      %3080 = vrot.lane.b32.xlu0 %v3065, 17
      %v3081 = vpop.permute.xlu0 %3080
      %3082 = vrot.lane.b32.xlu0 %v3067, 17
      %v3083 = vpop.permute.xlu0 %3082
      %3084 = vrot.lane.b32.xlu0 %v3069, 17
      %v3085 = vpop.permute.xlu0 %3084
      %v3086 = vsel %vm432, %v3071, %v3079
      %v3087 = vsel %vm432, %v3073, %v3081
      %v3088 = vsel %vm432, %v3075, %v3083
      %v3089 = vsel %vm432, %v3077, %v3085
      %v3090 = vsel %vm432, %v3079, %v3071
      %v3091 = vsel %vm432, %v3081, %v3073
      %v3092 = vsel %vm432, %v3083, %v3075
      %v3093 = vsel %vm432, %v3085, %v3077
      %v3094 = vmul.f32 %v3090, %v438
      %v3095 = vmul.f32 %v3086, %v442
      %v3096 = vmul.f32 %v3091, %v438
      %v3097 = vmul.f32 %v3087, %v442
      %v3098 = vmul.f32 %v3092, %v438
      %v3099 = vmul.f32 %v3088, %v442
      %v3100 = vmul.f32 %v3093, %v438
      %v3101 = vmul.f32 %v3089, %v442
      %v3102 = vpack.c.bf16 %v3096, %v3094
      %v3103 = vpack.c.bf16 %v3097, %v3095
      %v3104 = vpack.c.bf16 %v3100, %v3098
      %v3105 = vpack.c.bf16 %v3101, %v3099
      %v3110 = vunpack.c.l.b16 %v3102
      %v3111 = vunpack.c.l.b16 %v3103
      %v3112 = vunpack.c.h.b16 %v3102
      %v3113 = vunpack.c.h.b16 %v3103
      %v3114 = vunpack.c.l.b16 %v3104
      %v3115 = vunpack.c.l.b16 %v3105
      %v3116 = vunpack.c.h.b16 %v3104
      %v3117 = vunpack.c.h.b16 %v3105
      %v3118 = vpack.c.b16 %v3111, %v3110
      %v3119 = vpack.c.b16 %v3113, %v3112
      %v3120 = vpack.c.b16 %v3115, %v3114
      %v3121 = vpack.c.b16 %v3117, %v3116
      %3126 = vst [vmem:[#allocation2 + $0x288] sm:$0xff] %v3118
      %3127 = vst [vmem:[#allocation2 + $0x290] sm:$0xff] %v3119
      %3128 = vst [vmem:[#allocation2 + $0x298] sm:$0xff] %v3120
      %3129 = vst [vmem:[#allocation2 + $0x2a0] sm:$0xff] %v3121
      %3130 = vrot.lane.b32.xlu0 %v3062, 16
      %v3131 = vpop.permute.xlu0 %3130
      %3132 = vrot.lane.b32.xlu0 %v3064, 16
      %v3133 = vpop.permute.xlu0 %3132
      %3134 = vrot.lane.b32.xlu0 %v3066, 16
      %v3135 = vpop.permute.xlu0 %3134
      %3136 = vrot.lane.b32.xlu0 %v3068, 16
      %v3137 = vpop.permute.xlu0 %3136
      %3138 = vrot.lane.b32.xlu0 %v3063, 16
      %v3139 = vpop.permute.xlu0 %3138
      %3140 = vrot.lane.b32.xlu0 %v3065, 16
      %v3141 = vpop.permute.xlu0 %3140
      %3142 = vrot.lane.b32.xlu0 %v3067, 16
      %v3143 = vpop.permute.xlu0 %3142
      %3144 = vrot.lane.b32.xlu0 %v3069, 16
      %v3145 = vpop.permute.xlu0 %3144
      %v3146 = vsel %vm458, %v3131, %v3139
      %v3147 = vsel %vm458, %v3133, %v3141
      %v3148 = vsel %vm458, %v3135, %v3143
      %v3149 = vsel %vm458, %v3137, %v3145
      %v3150 = vsel %vm458, %v3139, %v3131
      %v3151 = vsel %vm458, %v3141, %v3133
      %v3152 = vsel %vm458, %v3143, %v3135
      %v3153 = vsel %vm458, %v3145, %v3137
      %v3154 = vmul.f32 %v3150, %v464
      %v3155 = vmul.f32 %v3146, %v468
      %v3156 = vmul.f32 %v3151, %v464
      %v3157 = vmul.f32 %v3147, %v468
      %v3158 = vmul.f32 %v3152, %v464
      %v3159 = vmul.f32 %v3148, %v468
      %v3160 = vmul.f32 %v3153, %v464
      %v3161 = vmul.f32 %v3149, %v468
      %v3162 = vpack.c.bf16 %v3156, %v3154
      %v3163 = vpack.c.bf16 %v3157, %v3155
      %v3164 = vpack.c.bf16 %v3160, %v3158
      %v3165 = vpack.c.bf16 %v3161, %v3159
      %v3170 = vunpack.c.l.b16 %v3162
      %v3171 = vunpack.c.l.b16 %v3163
      %v3172 = vunpack.c.h.b16 %v3162
      %v3173 = vunpack.c.h.b16 %v3163
      %v3174 = vunpack.c.l.b16 %v3164
      %v3175 = vunpack.c.l.b16 %v3165
      %v3176 = vunpack.c.h.b16 %v3164
      %v3177 = vunpack.c.h.b16 %v3165
      %v3178 = vpack.c.b16 %v3171, %v3170
      %v3179 = vpack.c.b16 %v3173, %v3172
      %v3180 = vpack.c.b16 %v3175, %v3174
      %v3181 = vpack.c.b16 %v3177, %v3176
      %3186 = vst [vmem:[#allocation2 + $0x2a8] sm:$0xff] %v3178
      %3187 = vst [vmem:[#allocation2 + $0x2b0] sm:$0xff] %v3179
      %3188 = vst [vmem:[#allocation2 + $0x2b8] sm:$0xff] %v3180
      %3189 = vst [vmem:[#allocation2 + $0x2c0] sm:$0xff] %v3181
      %3190 = vrot.lane.b32.xlu0 %v3062, 15
      %v3191 = vpop.permute.xlu0 %3190
      %3192 = vrot.lane.b32.xlu0 %v3064, 15
      %v3193 = vpop.permute.xlu0 %3192
      %3194 = vrot.lane.b32.xlu0 %v3066, 15
      %v3195 = vpop.permute.xlu0 %3194
      %3196 = vrot.lane.b32.xlu0 %v3068, 15
      %v3197 = vpop.permute.xlu0 %3196
      %3198 = vrot.lane.b32.xlu0 %v3063, 15
      %v3199 = vpop.permute.xlu0 %3198
      %3200 = vrot.lane.b32.xlu0 %v3065, 15
      %v3201 = vpop.permute.xlu0 %3200
      %3202 = vrot.lane.b32.xlu0 %v3067, 15
      %v3203 = vpop.permute.xlu0 %3202
      %3204 = vrot.lane.b32.xlu0 %v3069, 15
      %v3205 = vpop.permute.xlu0 %3204
      %v3206 = vsel %vm484, %v3191, %v3199
      %v3207 = vsel %vm484, %v3193, %v3201
      %v3208 = vsel %vm484, %v3195, %v3203
      %v3209 = vsel %vm484, %v3197, %v3205
      %v3210 = vsel %vm484, %v3199, %v3191
      %v3211 = vsel %vm484, %v3201, %v3193
      %v3212 = vsel %vm484, %v3203, %v3195
      %v3213 = vsel %vm484, %v3205, %v3197
      %v3214 = vmul.f32 %v3210, %v490
      %v3215 = vmul.f32 %v3206, %v494
      %v3216 = vmul.f32 %v3211, %v490
      %v3217 = vmul.f32 %v3207, %v494
      %v3218 = vmul.f32 %v3212, %v490
      %v3219 = vmul.f32 %v3208, %v494
      %v3220 = vmul.f32 %v3213, %v490
      %v3221 = vmul.f32 %v3209, %v494
      %v3222 = vpack.c.bf16 %v3216, %v3214
      %v3223 = vpack.c.bf16 %v3217, %v3215
      %v3224 = vpack.c.bf16 %v3220, %v3218
      %v3225 = vpack.c.bf16 %v3221, %v3219
      %v3230 = vunpack.c.l.b16 %v3222
      %v3231 = vunpack.c.l.b16 %v3223
      %v3232 = vunpack.c.h.b16 %v3222
      %v3233 = vunpack.c.h.b16 %v3223
      %v3234 = vunpack.c.l.b16 %v3224
      %v3235 = vunpack.c.l.b16 %v3225
      %v3236 = vunpack.c.h.b16 %v3224
      %v3237 = vunpack.c.h.b16 %v3225
      %v3238 = vpack.c.b16 %v3231, %v3230
      %v3239 = vpack.c.b16 %v3233, %v3232
      %v3240 = vpack.c.b16 %v3235, %v3234
      %v3241 = vpack.c.b16 %v3237, %v3236
      %3246 = vst [vmem:[#allocation2 + $0x2c8] sm:$0xff] %v3238
      %3247 = vst [vmem:[#allocation2 + $0x2d0] sm:$0xff] %v3239
      %3248 = vst [vmem:[#allocation2 + $0x2d8] sm:$0xff] %v3240
      %3249 = vst [vmem:[#allocation2 + $0x2e0] sm:$0xff] %v3241
      %3250 = vrot.lane.b32.xlu0 %v3062, 1
      %v3251 = vpop.permute.xlu0 %3250
      %3252 = vrot.lane.b32.xlu0 %v3064, 1
      %v3253 = vpop.permute.xlu0 %3252
      %3254 = vrot.lane.b32.xlu0 %v3066, 1
      %v3255 = vpop.permute.xlu0 %3254
      %3256 = vrot.lane.b32.xlu0 %v3068, 1
      %v3257 = vpop.permute.xlu0 %3256
      %3258 = vrot.lane.b32.xlu0 %v3063, 1
      %v3259 = vpop.permute.xlu0 %3258
      %3260 = vrot.lane.b32.xlu0 %v3065, 1
      %v3261 = vpop.permute.xlu0 %3260
      %3262 = vrot.lane.b32.xlu0 %v3067, 1
      %v3263 = vpop.permute.xlu0 %3262
      %3264 = vrot.lane.b32.xlu0 %v3069, 1
      %v3265 = vpop.permute.xlu0 %3264
      %v3266 = vsel %vm510, %v3251, %v3259
      %v3267 = vsel %vm510, %v3253, %v3261
      %v3268 = vsel %vm510, %v3255, %v3263
      %v3269 = vsel %vm510, %v3257, %v3265
      %v3270 = vsel %vm510, %v3259, %v3251
      %v3271 = vsel %vm510, %v3261, %v3253
      %v3272 = vsel %vm510, %v3263, %v3255
      %v3273 = vsel %vm510, %v3265, %v3257
      %v3274 = vmul.f32 %v3270, %v516
      %v3275 = vmul.f32 %v3266, %v520
      %v3276 = vmul.f32 %v3271, %v516
      %v3277 = vmul.f32 %v3267, %v520
      %v3278 = vmul.f32 %v3272, %v516
      %v3279 = vmul.f32 %v3268, %v520
      %v3280 = vmul.f32 %v3273, %v516
      %v3281 = vmul.f32 %v3269, %v520
      %v3282 = vpack.c.bf16 %v3276, %v3274
      %v3283 = vpack.c.bf16 %v3277, %v3275
      %v3284 = vpack.c.bf16 %v3280, %v3278
      %v3285 = vpack.c.bf16 %v3281, %v3279
      %v3290 = vunpack.c.l.b16 %v3282
      %v3291 = vunpack.c.l.b16 %v3283
      %v3292 = vunpack.c.h.b16 %v3282
      %v3293 = vunpack.c.h.b16 %v3283
      %v3294 = vunpack.c.l.b16 %v3284
      %v3295 = vunpack.c.l.b16 %v3285
      %v3296 = vunpack.c.h.b16 %v3284
      %v3297 = vunpack.c.h.b16 %v3285
      %v3298 = vpack.c.b16 %v3291, %v3290
      %v3299 = vpack.c.b16 %v3293, %v3292
      %v3300 = vpack.c.b16 %v3295, %v3294
      %v3301 = vpack.c.b16 %v3297, %v3296
      %3306 = vst [vmem:[#allocation2 + $0x2e8] sm:$0xff] %v3298
      %3307 = vst [vmem:[#allocation2 + $0x2f0] sm:$0xff] %v3299
      %3308 = vst [vmem:[#allocation2 + $0x2f8] sm:$0xff] %v3300
      %3309 = vst [vmem:[#allocation2 + $0x300] sm:$0xff] %v3301
      %v3310 = vpack.c.bf16 %v3064, %v3062
      %v3311 = vpack.c.bf16 %v3065, %v3063
      %v3312 = vpack.c.bf16 %v3068, %v3066
      %v3313 = vpack.c.bf16 %v3069, %v3067
      %v3318 = vunpack.c.l.b16 %v3310
      %v3319 = vunpack.c.l.b16 %v3311
      %v3320 = vunpack.c.h.b16 %v3310
      %v3321 = vunpack.c.h.b16 %v3311
      %v3322 = vunpack.c.l.b16 %v3312
      %v3323 = vunpack.c.l.b16 %v3313
      %v3324 = vunpack.c.h.b16 %v3312
      %v3325 = vunpack.c.h.b16 %v3313
      %v3326 = vpack.c.b16 %v3319, %v3318
      %v3327 = vpack.c.b16 %v3321, %v3320
      %v3328 = vpack.c.b16 %v3323, %v3322
      %v3329 = vpack.c.b16 %v3325, %v3324
      %3334 = vst [vmem:[#allocation2 + $0x308] sm:$0xff] %v3326
      %3335 = vst [vmem:[#allocation2 + $0x310] sm:$0xff] %v3327
      %3336 = vst [vmem:[#allocation2 + $0x318] sm:$0xff] %v3328
      %3337 = vst [vmem:[#allocation2 + $0x320] sm:$0xff] %v3329
      %3338 = vrot.lane.b32.xlu0 %v3062, 127
      %v3339 = vpop.permute.xlu0 %3338
      %3340 = vrot.lane.b32.xlu0 %v3064, 127
      %v3341 = vpop.permute.xlu0 %3340
      %3342 = vrot.lane.b32.xlu0 %v3066, 127
      %v3343 = vpop.permute.xlu0 %3342
      %3344 = vrot.lane.b32.xlu0 %v3068, 127
      %v3345 = vpop.permute.xlu0 %3344
      %3346 = vrot.lane.b32.xlu0 %v3063, 127
      %v3347 = vpop.permute.xlu0 %3346
      %3348 = vrot.lane.b32.xlu0 %v3065, 127
      %v3349 = vpop.permute.xlu0 %3348
      %3350 = vrot.lane.b32.xlu0 %v3067, 127
      %v3351 = vpop.permute.xlu0 %3350
      %3352 = vrot.lane.b32.xlu0 %v3069, 127
      %v3353 = vpop.permute.xlu0 %3352
      %v3354 = vsel %vm545, %v3339, %v3347
      %v3355 = vsel %vm545, %v3341, %v3349
      %v3356 = vsel %vm545, %v3343, %v3351
      %v3357 = vsel %vm545, %v3345, %v3353
      %v3358 = vsel %vm545, %v3347, %v3339
      %v3359 = vsel %vm545, %v3349, %v3341
      %v3360 = vsel %vm545, %v3351, %v3343
      %v3361 = vsel %vm545, %v3353, %v3345
      %v3362 = vmul.f32 %v3354, %v551
      %v3363 = vmul.f32 %v3358, %v555
      %v3364 = vmul.f32 %v3355, %v551
      %v3365 = vmul.f32 %v3359, %v555
      %v3366 = vmul.f32 %v3356, %v551
      %v3367 = vmul.f32 %v3360, %v555
      %v3368 = vmul.f32 %v3357, %v551
      %v3369 = vmul.f32 %v3361, %v555
      %v3370 = vpack.c.bf16 %v3364, %v3362
      %v3371 = vpack.c.bf16 %v3365, %v3363
      %v3372 = vpack.c.bf16 %v3368, %v3366
      %v3373 = vpack.c.bf16 %v3369, %v3367
      %v3378 = vunpack.c.l.b16 %v3370
      %v3379 = vunpack.c.l.b16 %v3371
      %v3380 = vunpack.c.h.b16 %v3370
      %v3381 = vunpack.c.h.b16 %v3371
      %v3382 = vunpack.c.l.b16 %v3372
      %v3383 = vunpack.c.l.b16 %v3373
      %v3384 = vunpack.c.h.b16 %v3372
      %v3385 = vunpack.c.h.b16 %v3373
      %v3386 = vpack.c.b16 %v3379, %v3378
      %v3387 = vpack.c.b16 %v3381, %v3380
      %v3388 = vpack.c.b16 %v3383, %v3382
      %v3389 = vpack.c.b16 %v3385, %v3384
      %3394 = vst [vmem:[#allocation2 + $0x328] sm:$0xff] %v3386
      %3395 = vst [vmem:[#allocation2 + $0x330] sm:$0xff] %v3387
      %3396 = vst [vmem:[#allocation2 + $0x338] sm:$0xff] %v3388
      %3397 = vst [vmem:[#allocation2 + $0x340] sm:$0xff] %v3389
      %3398 = vrot.lane.b32.xlu0 %v3062, 113
      %v3399 = vpop.permute.xlu0 %3398
      %3400 = vrot.lane.b32.xlu0 %v3064, 113
      %v3401 = vpop.permute.xlu0 %3400
      %3402 = vrot.lane.b32.xlu0 %v3066, 113
      %v3403 = vpop.permute.xlu0 %3402
      %3404 = vrot.lane.b32.xlu0 %v3068, 113
      %v3405 = vpop.permute.xlu0 %3404
      %3406 = vrot.lane.b32.xlu0 %v3063, 113
      %v3407 = vpop.permute.xlu0 %3406
      %3408 = vrot.lane.b32.xlu0 %v3065, 113
      %v3409 = vpop.permute.xlu0 %3408
      %3410 = vrot.lane.b32.xlu0 %v3067, 113
      %v3411 = vpop.permute.xlu0 %3410
      %3412 = vrot.lane.b32.xlu0 %v3069, 113
      %v3413 = vpop.permute.xlu0 %3412
      %v3414 = vsel %vm571, %v3399, %v3407
      %v3415 = vsel %vm571, %v3401, %v3409
      %v3416 = vsel %vm571, %v3403, %v3411
      %v3417 = vsel %vm571, %v3405, %v3413
      %v3418 = vsel %vm571, %v3407, %v3399
      %v3419 = vsel %vm571, %v3409, %v3401
      %v3420 = vsel %vm571, %v3411, %v3403
      %v3421 = vsel %vm571, %v3413, %v3405
      %v3422 = vmul.f32 %v3414, %v577
      %v3423 = vmul.f32 %v3418, %v581
      %v3424 = vmul.f32 %v3415, %v577
      %v3425 = vmul.f32 %v3419, %v581
      %v3426 = vmul.f32 %v3416, %v577
      %v3427 = vmul.f32 %v3420, %v581
      %v3428 = vmul.f32 %v3417, %v577
      %v3429 = vmul.f32 %v3421, %v581
      %v3430 = vpack.c.bf16 %v3424, %v3422
      %v3431 = vpack.c.bf16 %v3425, %v3423
      %v3432 = vpack.c.bf16 %v3428, %v3426
      %v3433 = vpack.c.bf16 %v3429, %v3427
      %v3438 = vunpack.c.l.b16 %v3430
      %v3439 = vunpack.c.l.b16 %v3431
      %v3440 = vunpack.c.h.b16 %v3430
      %v3441 = vunpack.c.h.b16 %v3431
      %v3442 = vunpack.c.l.b16 %v3432
      %v3443 = vunpack.c.l.b16 %v3433
      %v3444 = vunpack.c.h.b16 %v3432
      %v3445 = vunpack.c.h.b16 %v3433
      %v3446 = vpack.c.b16 %v3439, %v3438
      %v3447 = vpack.c.b16 %v3441, %v3440
      %v3448 = vpack.c.b16 %v3443, %v3442
      %v3449 = vpack.c.b16 %v3445, %v3444
      %3454 = vst [vmem:[#allocation2 + $0x348] sm:$0xff] %v3446
      %3455 = vst [vmem:[#allocation2 + $0x350] sm:$0xff] %v3447
      %3456 = vst [vmem:[#allocation2 + $0x358] sm:$0xff] %v3448
      %3457 = vst [vmem:[#allocation2 + $0x360] sm:$0xff] %v3449
      %3458 = vrot.lane.b32.xlu0 %v3062, 112
      %v3459 = vpop.permute.xlu0 %3458
      %3460 = vrot.lane.b32.xlu0 %v3064, 112
      %v3461 = vpop.permute.xlu0 %3460
      %3462 = vrot.lane.b32.xlu0 %v3066, 112
      %v3463 = vpop.permute.xlu0 %3462
      %3464 = vrot.lane.b32.xlu0 %v3068, 112
      %v3465 = vpop.permute.xlu0 %3464
      %3466 = vrot.lane.b32.xlu0 %v3063, 112
      %v3467 = vpop.permute.xlu0 %3466
      %3468 = vrot.lane.b32.xlu0 %v3065, 112
      %v3469 = vpop.permute.xlu0 %3468
      %3470 = vrot.lane.b32.xlu0 %v3067, 112
      %v3471 = vpop.permute.xlu0 %3470
      %3472 = vrot.lane.b32.xlu0 %v3069, 112
      %v3473 = vpop.permute.xlu0 %3472
      %v3474 = vsel %vm597, %v3459, %v3467
      %v3475 = vsel %vm597, %v3461, %v3469
      %v3476 = vsel %vm597, %v3463, %v3471
      %v3477 = vsel %vm597, %v3465, %v3473
      %v3478 = vsel %vm597, %v3467, %v3459
      %v3479 = vsel %vm597, %v3469, %v3461
      %v3480 = vsel %vm597, %v3471, %v3463
      %v3481 = vsel %vm597, %v3473, %v3465
      %v3482 = vmul.f32 %v3474, %v603
      %v3483 = vmul.f32 %v3478, %v607
      %v3484 = vmul.f32 %v3475, %v603
      %v3485 = vmul.f32 %v3479, %v607
      %v3486 = vmul.f32 %v3476, %v603
      %v3487 = vmul.f32 %v3480, %v607
      %v3488 = vmul.f32 %v3477, %v603
      %v3489 = vmul.f32 %v3481, %v607
      %v3490 = vpack.c.bf16 %v3484, %v3482
      %v3491 = vpack.c.bf16 %v3485, %v3483
      %v3492 = vpack.c.bf16 %v3488, %v3486
      %v3493 = vpack.c.bf16 %v3489, %v3487
      %v3498 = vunpack.c.l.b16 %v3490
      %v3499 = vunpack.c.l.b16 %v3491
      %v3500 = vunpack.c.h.b16 %v3490
      %v3501 = vunpack.c.h.b16 %v3491
      %v3502 = vunpack.c.l.b16 %v3492
      %v3503 = vunpack.c.l.b16 %v3493
      %v3504 = vunpack.c.h.b16 %v3492
      %v3505 = vunpack.c.h.b16 %v3493
      %v3506 = vpack.c.b16 %v3499, %v3498
      %v3507 = vpack.c.b16 %v3501, %v3500
      %v3508 = vpack.c.b16 %v3503, %v3502
      %v3509 = vpack.c.b16 %v3505, %v3504
      %3514 = vst [vmem:[#allocation2 + $0x368] sm:$0xff] %v3506
      %3515 = vst [vmem:[#allocation2 + $0x370] sm:$0xff] %v3507
      %3516 = vst [vmem:[#allocation2 + $0x378] sm:$0xff] %v3508
      %3517 = vst [vmem:[#allocation2 + $0x380] sm:$0xff] %v3509
      %3518 = vrot.lane.b32.xlu0 %v3062, 111
      %v3519 = vpop.permute.xlu0 %3518
      %3520 = vrot.lane.b32.xlu0 %v3064, 111
      %v3521 = vpop.permute.xlu0 %3520
      %3522 = vrot.lane.b32.xlu0 %v3066, 111
      %v3523 = vpop.permute.xlu0 %3522
      %3524 = vrot.lane.b32.xlu0 %v3068, 111
      %v3525 = vpop.permute.xlu0 %3524
      %3526 = vrot.lane.b32.xlu0 %v3063, 111
      %v3527 = vpop.permute.xlu0 %3526
      %3528 = vrot.lane.b32.xlu0 %v3065, 111
      %v3529 = vpop.permute.xlu0 %3528
      %3530 = vrot.lane.b32.xlu0 %v3067, 111
      %v3531 = vpop.permute.xlu0 %3530
      %3532 = vrot.lane.b32.xlu0 %v3069, 111
      %v3533 = vpop.permute.xlu0 %3532
      %v3534 = vsel %vm623, %v3519, %v3527
      %v3535 = vsel %vm623, %v3521, %v3529
      %v3536 = vsel %vm623, %v3523, %v3531
      %v3537 = vsel %vm623, %v3525, %v3533
      %v3538 = vsel %vm623, %v3527, %v3519
      %v3539 = vsel %vm623, %v3529, %v3521
      %v3540 = vsel %vm623, %v3531, %v3523
      %v3541 = vsel %vm623, %v3533, %v3525
      %v3542 = vmul.f32 %v3534, %v629
      %v3543 = vmul.f32 %v3538, %v633
      %v3544 = vmul.f32 %v3535, %v629
      %v3545 = vmul.f32 %v3539, %v633
      %v3546 = vmul.f32 %v3536, %v629
      %v3547 = vmul.f32 %v3540, %v633
      %v3548 = vmul.f32 %v3537, %v629
      %v3549 = vmul.f32 %v3541, %v633
      %v3550 = vpack.c.bf16 %v3544, %v3542
      %v3551 = vpack.c.bf16 %v3545, %v3543
      %v3552 = vpack.c.bf16 %v3548, %v3546
      %v3553 = vpack.c.bf16 %v3549, %v3547
      %v3558 = vunpack.c.l.b16 %v3550
      %v3559 = vunpack.c.l.b16 %v3551
      %v3560 = vunpack.c.h.b16 %v3550
      %v3561 = vunpack.c.h.b16 %v3551
      %v3562 = vunpack.c.l.b16 %v3552
      %v3563 = vunpack.c.l.b16 %v3553
      %v3564 = vunpack.c.h.b16 %v3552
      %v3565 = vunpack.c.h.b16 %v3553
      %v3566 = vpack.c.b16 %v3559, %v3558
      %v3567 = vpack.c.b16 %v3561, %v3560
      %v3568 = vpack.c.b16 %v3563, %v3562
      %v3569 = vpack.c.b16 %v3565, %v3564
      %3574 = vst [vmem:[#allocation2 + $0x388] sm:$0xff] %v3566
      %3575 = vst [vmem:[#allocation2 + $0x390] sm:$0xff] %v3567
      %3576 = vst [vmem:[#allocation2 + $0x398] sm:$0xff] %v3568
      %3577 = vst [vmem:[#allocation2 + $0x3a0] sm:$0xff] %v3569
      %v3578 = vld [vmem:[%s5] sm:$0xff]
      %v3579 = vld [vmem:[%s5 + $0x8] sm:$0xff]
      %v3580 = vld [vmem:[%s5 + $0x10] sm:$0xff]
      %v3581 = vld [vmem:[%s5 + $0x18] sm:$0xff]
      %v3582 = vld [vmem:[%s5 + $0x20] sm:$0xff]
      %v3583 = vld [vmem:[%s5 + $0x28] sm:$0xff]
      %v3584 = vld [vmem:[%s5 + $0x30] sm:$0xff]
      %v3585 = vld [vmem:[%s5 + $0x38] sm:$0xff]
      %v3586 = vld [vmem:[%s5 + $0x40] sm:$0xff]
      %v3587 = vld [vmem:[%s5 + $0x48] sm:$0xff]
      %v3588 = vld [vmem:[%s5 + $0x50] sm:$0xff]
      %v3589 = vld [vmem:[%s5 + $0x58] sm:$0xff]
      %v3590 = vld [vmem:[%s5 + $0x60] sm:$0xff]
      %v3591 = vld [vmem:[%s5 + $0x68] sm:$0xff]
      %v3592 = vld [vmem:[%s5 + $0x70] sm:$0xff]
      %v3593 = vld [vmem:[%s5 + $0x78] sm:$0xff]
      %v3594 = vld [vmem:[#allocation2] sm:$0xff]
      %v3595 = vld [vmem:[#allocation2 + $0x8] sm:$0xff]
      %v3596 = vld [vmem:[#allocation2 + $0x10] sm:$0xff]
      %v3597 = vld [vmem:[#allocation2 + $0x18] sm:$0xff]
      %v3598 = vld [vmem:[#allocation2 + $0x20] sm:$0xff]
      %v3599 = vld [vmem:[#allocation2 + $0x28] sm:$0xff]
      %v3600 = vld [vmem:[#allocation2 + $0x30] sm:$0xff]
      %v3601 = vld [vmem:[#allocation2 + $0x38] sm:$0xff]
      %v3602 = vld [vmem:[#allocation2 + $0x40] sm:$0xff]
      %v3603 = vld [vmem:[#allocation2 + $0x48] sm:$0xff]
      %v3604 = vld [vmem:[#allocation2 + $0x50] sm:$0xff]
      %v3605 = vld [vmem:[#allocation2 + $0x58] sm:$0xff]
      %v3606 = vld [vmem:[#allocation2 + $0x60] sm:$0xff]
      %v3607 = vld [vmem:[#allocation2 + $0x68] sm:$0xff]
      %v3608 = vld [vmem:[#allocation2 + $0x70] sm:$0xff]
      %v3609 = vld [vmem:[#allocation2 + $0x78] sm:$0xff]
      %v3610 = vld [vmem:[#allocation2 + $0x80] sm:$0xff]
      %v3611 = vld [vmem:[#allocation2 + $0x88] sm:$0xff]
      %v3612 = vld [vmem:[#allocation2 + $0x90] sm:$0xff]
      %v3613 = vld [vmem:[#allocation2 + $0x98] sm:$0xff]
      %v3614 = vld [vmem:[#allocation2 + $0xa0] sm:$0xff]
      %v3615 = vld [vmem:[#allocation2 + $0xa8] sm:$0xff]
      %v3616 = vld [vmem:[#allocation2 + $0xb0] sm:$0xff]
      %v3617 = vld [vmem:[#allocation2 + $0xb8] sm:$0xff]
      %v3618 = vld [vmem:[#allocation2 + $0xc0] sm:$0xff]
      %v3619 = vld [vmem:[#allocation2 + $0xc8] sm:$0xff]
      %v3620 = vld [vmem:[#allocation2 + $0xd0] sm:$0xff]
      %v3621 = vld [vmem:[#allocation2 + $0xd8] sm:$0xff]
      %v3622 = vld [vmem:[#allocation2 + $0xe0] sm:$0xff]
      %v3623 = vld [vmem:[#allocation2 + $0xe8] sm:$0xff]
      %v3624 = vld [vmem:[#allocation2 + $0xf0] sm:$0xff]
      %v3625 = vld [vmem:[#allocation2 + $0xf8] sm:$0xff]
      %v3626 = vld [vmem:[#allocation2 + $0x100] sm:$0xff]
      %v3627 = vld [vmem:[#allocation2 + $0x108] sm:$0xff]
      %v3628 = vld [vmem:[#allocation2 + $0x110] sm:$0xff]
      %v3629 = vld [vmem:[#allocation2 + $0x118] sm:$0xff]
      %v3630 = vld [vmem:[#allocation2 + $0x120] sm:$0xff]
      %v3631 = vld [vmem:[#allocation2 + $0x128] sm:$0xff]
      %v3632 = vld [vmem:[#allocation2 + $0x130] sm:$0xff]
      %v3633 = vld [vmem:[#allocation2 + $0x138] sm:$0xff]
      %v3634 = vld [vmem:[#allocation2 + $0x140] sm:$0xff]
      %v3635 = vld [vmem:[#allocation2 + $0x148] sm:$0xff]
      %v3636 = vld [vmem:[#allocation2 + $0x150] sm:$0xff]
      %v3637 = vld [vmem:[#allocation2 + $0x158] sm:$0xff]
      %v3638 = vld [vmem:[#allocation2 + $0x160] sm:$0xff]
      %v3639 = vld [vmem:[#allocation2 + $0x168] sm:$0xff]
      %v3640 = vld [vmem:[#allocation2 + $0x170] sm:$0xff]
      %v3641 = vld [vmem:[#allocation2 + $0x178] sm:$0xff]
      %v3642 = vld [vmem:[#allocation2 + $0x180] sm:$0xff]
      %v3643 = vld [vmem:[#allocation2 + $0x188] sm:$0xff]
      %v3644 = vld [vmem:[#allocation2 + $0x190] sm:$0xff]
      %v3645 = vld [vmem:[#allocation2 + $0x198] sm:$0xff]
      %v3646 = vld [vmem:[#allocation2 + $0x1a0] sm:$0xff]
      %v3647 = vld [vmem:[#allocation2 + $0x1a8] sm:$0xff]
      %v3648 = vld [vmem:[#allocation2 + $0x1b0] sm:$0xff]
      %v3649 = vld [vmem:[#allocation2 + $0x1b8] sm:$0xff]
      %v3650 = vld [vmem:[#allocation2 + $0x1c0] sm:$0xff]
      %v3651 = vld [vmem:[#allocation2 + $0x1c8] sm:$0xff]
      %v3652 = vld [vmem:[#allocation2 + $0x1d0] sm:$0xff]
      %v3653 = vld [vmem:[#allocation2 + $0x1d8] sm:$0xff]
      %v3654 = vld [vmem:[#allocation2 + $0x1e0] sm:$0xff]
      %v3655 = vld [vmem:[#allocation2 + $0x1e8] sm:$0xff]
      %v3656 = vld [vmem:[#allocation2 + $0x1f0] sm:$0xff]
      %v3657 = vld [vmem:[#allocation2 + $0x1f8] sm:$0xff]
      %v3658 = vld [vmem:[#allocation2 + $0x200] sm:$0xff]
      %v3659 = vld [vmem:[#allocation2 + $0x208] sm:$0xff]
      %v3660 = vld [vmem:[#allocation2 + $0x210] sm:$0xff]
      %v3661 = vld [vmem:[#allocation2 + $0x218] sm:$0xff]
      %v3662 = vld [vmem:[#allocation2 + $0x220] sm:$0xff]
      %v3663 = vld [vmem:[#allocation2 + $0x228] sm:$0xff]
      %v3664 = vld [vmem:[#allocation2 + $0x230] sm:$0xff]
      %v3665 = vld [vmem:[#allocation2 + $0x238] sm:$0xff]
      %v3666 = vld [vmem:[#allocation2 + $0x240] sm:$0xff]
      %v3667 = vld [vmem:[#allocation2 + $0x248] sm:$0xff]
      %v3668 = vld [vmem:[#allocation2 + $0x250] sm:$0xff]
      %v3669 = vld [vmem:[#allocation2 + $0x258] sm:$0xff]
      %v3670 = vld [vmem:[#allocation2 + $0x260] sm:$0xff]
      %v3671 = vld [vmem:[#allocation2 + $0x268] sm:$0xff]
      %v3672 = vld [vmem:[#allocation2 + $0x270] sm:$0xff]
      %v3673 = vld [vmem:[#allocation2 + $0x278] sm:$0xff]
      %v3674 = vld [vmem:[#allocation2 + $0x280] sm:$0xff]
      %v3675 = vld [vmem:[#allocation2 + $0x288] sm:$0xff]
      %v3676 = vld [vmem:[#allocation2 + $0x290] sm:$0xff]
      %v3677 = vld [vmem:[#allocation2 + $0x298] sm:$0xff]
      %v3678 = vld [vmem:[#allocation2 + $0x2a0] sm:$0xff]
      %v3679 = vld [vmem:[#allocation2 + $0x2a8] sm:$0xff]
      %v3680 = vld [vmem:[#allocation2 + $0x2b0] sm:$0xff]
      %v3681 = vld [vmem:[#allocation2 + $0x2b8] sm:$0xff]
      %v3682 = vld [vmem:[#allocation2 + $0x2c0] sm:$0xff]
      %v3683 = vld [vmem:[#allocation2 + $0x2c8] sm:$0xff]
      %v3684 = vld [vmem:[#allocation2 + $0x2d0] sm:$0xff]
      %v3685 = vld [vmem:[#allocation2 + $0x2d8] sm:$0xff]
      %v3686 = vld [vmem:[#allocation2 + $0x2e0] sm:$0xff]
      %v3687 = vld [vmem:[#allocation2 + $0x2e8] sm:$0xff]
      %v3688 = vld [vmem:[#allocation2 + $0x2f0] sm:$0xff]
      %v3689 = vld [vmem:[#allocation2 + $0x2f8] sm:$0xff]
      %v3690 = vld [vmem:[#allocation2 + $0x300] sm:$0xff]
      %v3691 = vld [vmem:[#allocation2 + $0x308] sm:$0xff]
      %v3692 = vld [vmem:[#allocation2 + $0x310] sm:$0xff]
      %v3693 = vld [vmem:[#allocation2 + $0x318] sm:$0xff]
      %v3694 = vld [vmem:[#allocation2 + $0x320] sm:$0xff]
      %v3695 = vld [vmem:[#allocation2 + $0x328] sm:$0xff]
      %v3696 = vld [vmem:[#allocation2 + $0x330] sm:$0xff]
      %v3697 = vld [vmem:[#allocation2 + $0x338] sm:$0xff]
      %v3698 = vld [vmem:[#allocation2 + $0x340] sm:$0xff]
      %v3699 = vld [vmem:[#allocation2 + $0x348] sm:$0xff]
      %v3700 = vld [vmem:[#allocation2 + $0x350] sm:$0xff]
      %v3701 = vld [vmem:[#allocation2 + $0x358] sm:$0xff]
      %v3702 = vld [vmem:[#allocation2 + $0x360] sm:$0xff]
      %v3703 = vld [vmem:[#allocation2 + $0x368] sm:$0xff]
      %v3704 = vld [vmem:[#allocation2 + $0x370] sm:$0xff]
      %v3705 = vld [vmem:[#allocation2 + $0x378] sm:$0xff]
      %v3706 = vld [vmem:[#allocation2 + $0x380] sm:$0xff]
      %v3707 = vld [vmem:[#allocation2 + $0x388] sm:$0xff]
      %v3708 = vld [vmem:[#allocation2 + $0x390] sm:$0xff]
      %v3709 = vld [vmem:[#allocation2 + $0x398] sm:$0xff]
      %v3710 = vld [vmem:[#allocation2 + $0x3a0] sm:$0xff]
      %v3711 = vld [vmem:[%s10] sm:$0xff]
      %v3712 = vld [vmem:[%s10 + $0x8] sm:$0xff]
      %v3713 = vld [vmem:[%s10 + $0x10] sm:$0xff]
      %v3714 = vld [vmem:[%s10 + $0x18] sm:$0xff]
      %3716 = vset.pattern.permute.xlu0 0
      %3717 = vperm.xlu0 %3716, %v3711
      %v3718 = vpop.permute.xlu0 %3717
      %3721 = vset.pattern.permute.xlu0 0
      %3722 = vperm.xlu0 %3721, %v3712
      %v3723 = vpop.permute.xlu0 %3722
      %3726 = vset.pattern.permute.xlu0 0
      %3727 = vperm.xlu0 %3726, %v3713
      %v3728 = vpop.permute.xlu0 %3727
      %3731 = vset.pattern.permute.xlu0 0
      %3732 = vperm.xlu0 %3731, %v3714
      %v3733 = vpop.permute.xlu0 %3732
      %v3751 = vunpack.c.l.b16 %v3578
      %v3752 = vunpack.c.h.b16 %v3578
      %v3753 = vunpack.c.l.b16 %v3579
      %v3754 = vunpack.c.h.b16 %v3579
      %v3755 = vunpack.c.l.b16 %v3580
      %v3756 = vunpack.c.h.b16 %v3580
      %v3757 = vunpack.c.l.b16 %v3581
      %v3758 = vunpack.c.h.b16 %v3581
      %v3759 = vunpack.c.l.b16 %v3582
      %v3760 = vunpack.c.h.b16 %v3582
      %v3761 = vunpack.c.l.b16 %v3583
      %v3762 = vunpack.c.h.b16 %v3583
      %v3763 = vunpack.c.l.b16 %v3584
      %v3764 = vunpack.c.h.b16 %v3584
      %v3765 = vunpack.c.l.b16 %v3585
      %v3766 = vunpack.c.h.b16 %v3585
      %v3767 = vunpack.c.l.b16 %v3586
      %v3768 = vunpack.c.h.b16 %v3586
      %v3769 = vunpack.c.l.b16 %v3587
      %v3770 = vunpack.c.h.b16 %v3587
      %v3771 = vunpack.c.l.b16 %v3588
      %v3772 = vunpack.c.h.b16 %v3588
      %v3773 = vunpack.c.l.b16 %v3589
      %v3774 = vunpack.c.h.b16 %v3589
      %v3775 = vunpack.c.l.b16 %v3590
      %v3776 = vunpack.c.h.b16 %v3590
      %v3777 = vunpack.c.l.b16 %v3591
      %v3778 = vunpack.c.h.b16 %v3591
      %v3779 = vunpack.c.l.b16 %v3592
      %v3780 = vunpack.c.h.b16 %v3592
      %v3781 = vunpack.c.l.b16 %v3593
      %v3782 = vunpack.c.h.b16 %v3593
      %v3783 = vpack.c.b16 %v3759, %v3751
      %v3784 = vpack.c.b16 %v3760, %v3752
      %v3785 = vpack.c.b16 %v3761, %v3753
      %v3786 = vpack.c.b16 %v3762, %v3754
      %v3787 = vpack.c.b16 %v3763, %v3755
      %v3788 = vpack.c.b16 %v3764, %v3756
      %v3789 = vpack.c.b16 %v3765, %v3757
      %v3790 = vpack.c.b16 %v3766, %v3758
      %v3791 = vpack.c.b16 %v3775, %v3767
      %v3792 = vpack.c.b16 %v3776, %v3768
      %v3793 = vpack.c.b16 %v3777, %v3769
      %v3794 = vpack.c.b16 %v3778, %v3770
      %v3795 = vpack.c.b16 %v3779, %v3771
      %v3796 = vpack.c.b16 %v3780, %v3772
      %v3797 = vpack.c.b16 %v3781, %v3773
      %v3798 = vpack.c.b16 %v3782, %v3774
      %v3930 = vunpack.c.l.b16 %v3594
      %v3931 = vunpack.c.h.b16 %v3594
      %v3932 = vunpack.c.l.b16 %v3595
      %v3933 = vunpack.c.h.b16 %v3595
      %v3934 = vunpack.c.l.b16 %v3596
      %v3935 = vunpack.c.h.b16 %v3596
      %v3936 = vunpack.c.l.b16 %v3597
      %v3937 = vunpack.c.h.b16 %v3597
      %v3938 = vunpack.c.l.b16 %v3598
      %v3939 = vunpack.c.h.b16 %v3598
      %v3940 = vunpack.c.l.b16 %v3599
      %v3941 = vunpack.c.h.b16 %v3599
      %v3942 = vunpack.c.l.b16 %v3600
      %v3943 = vunpack.c.h.b16 %v3600
      %v3944 = vunpack.c.l.b16 %v3601
      %v3945 = vunpack.c.h.b16 %v3601
      %v3946 = vunpack.c.l.b16 %v3602
      %v3947 = vunpack.c.h.b16 %v3602
      %v3948 = vunpack.c.l.b16 %v3603
      %v3949 = vunpack.c.h.b16 %v3603
      %v3950 = vunpack.c.l.b16 %v3604
      %v3951 = vunpack.c.h.b16 %v3604
      %v3952 = vunpack.c.l.b16 %v3605
      %v3953 = vunpack.c.h.b16 %v3605
      %v3954 = vunpack.c.l.b16 %v3606
      %v3955 = vunpack.c.h.b16 %v3606
      %v3956 = vunpack.c.l.b16 %v3607
      %v3957 = vunpack.c.h.b16 %v3607
      %v3958 = vunpack.c.l.b16 %v3608
      %v3959 = vunpack.c.h.b16 %v3608
      %v3960 = vunpack.c.l.b16 %v3609
      %v3961 = vunpack.c.h.b16 %v3609
      %v3962 = vunpack.c.l.b16 %v3610
      %v3963 = vunpack.c.h.b16 %v3610
      %v3964 = vunpack.c.l.b16 %v3611
      %v3965 = vunpack.c.h.b16 %v3611
      %v3966 = vunpack.c.l.b16 %v3612
      %v3967 = vunpack.c.h.b16 %v3612
      %v3968 = vunpack.c.l.b16 %v3613
      %v3969 = vunpack.c.h.b16 %v3613
      %v3970 = vunpack.c.l.b16 %v3614
      %v3971 = vunpack.c.h.b16 %v3614
      %v3972 = vunpack.c.l.b16 %v3615
      %v3973 = vunpack.c.h.b16 %v3615
      %v3974 = vunpack.c.l.b16 %v3616
      %v3975 = vunpack.c.h.b16 %v3616
      %v3976 = vunpack.c.l.b16 %v3617
      %v3977 = vunpack.c.h.b16 %v3617
      %v3978 = vunpack.c.l.b16 %v3618
      %v3979 = vunpack.c.h.b16 %v3618
      %v3980 = vunpack.c.l.b16 %v3619
      %v3981 = vunpack.c.h.b16 %v3619
      %v3982 = vunpack.c.l.b16 %v3620
      %v3983 = vunpack.c.h.b16 %v3620
      %v3984 = vunpack.c.l.b16 %v3621
      %v3985 = vunpack.c.h.b16 %v3621
      %v3986 = vunpack.c.l.b16 %v3622
      %v3987 = vunpack.c.h.b16 %v3622
      %v3988 = vunpack.c.l.b16 %v3623
      %v3989 = vunpack.c.h.b16 %v3623
      %v3990 = vunpack.c.l.b16 %v3624
      %v3991 = vunpack.c.h.b16 %v3624
      %v3992 = vunpack.c.l.b16 %v3625
      %v3993 = vunpack.c.h.b16 %v3625
      %v3994 = vunpack.c.l.b16 %v3626
      %v3995 = vunpack.c.h.b16 %v3626
      %v3996 = vunpack.c.l.b16 %v3627
      %v3997 = vunpack.c.h.b16 %v3627
      %v3998 = vunpack.c.l.b16 %v3628
      %v3999 = vunpack.c.h.b16 %v3628
      %v4000 = vunpack.c.l.b16 %v3629
      %v4001 = vunpack.c.h.b16 %v3629
      %v4002 = vunpack.c.l.b16 %v3630
      %v4003 = vunpack.c.h.b16 %v3630
      %v4004 = vunpack.c.l.b16 %v3631
      %v4005 = vunpack.c.h.b16 %v3631
      %v4006 = vunpack.c.l.b16 %v3632
      %v4007 = vunpack.c.h.b16 %v3632
      %v4008 = vunpack.c.l.b16 %v3633
      %v4009 = vunpack.c.h.b16 %v3633
      %v4010 = vunpack.c.l.b16 %v3634
      %v4011 = vunpack.c.h.b16 %v3634
      %v4012 = vunpack.c.l.b16 %v3635
      %v4013 = vunpack.c.h.b16 %v3635
      %v4014 = vunpack.c.l.b16 %v3636
      %v4015 = vunpack.c.h.b16 %v3636
      %v4016 = vunpack.c.l.b16 %v3637
      %v4017 = vunpack.c.h.b16 %v3637
      %v4018 = vunpack.c.l.b16 %v3638
      %v4019 = vunpack.c.h.b16 %v3638
      %v4020 = vunpack.c.l.b16 %v3639
      %v4021 = vunpack.c.h.b16 %v3639
      %v4022 = vunpack.c.l.b16 %v3640
      %v4023 = vunpack.c.h.b16 %v3640
      %v4024 = vunpack.c.l.b16 %v3641
      %v4025 = vunpack.c.h.b16 %v3641
      %v4026 = vunpack.c.l.b16 %v3642
      %v4027 = vunpack.c.h.b16 %v3642
      %v4028 = vunpack.c.l.b16 %v3643
      %v4029 = vunpack.c.h.b16 %v3643
      %v4030 = vunpack.c.l.b16 %v3644
      %v4031 = vunpack.c.h.b16 %v3644
      %v4032 = vunpack.c.l.b16 %v3645
      %v4033 = vunpack.c.h.b16 %v3645
      %v4034 = vunpack.c.l.b16 %v3646
      %v4035 = vunpack.c.h.b16 %v3646
      %v4036 = vunpack.c.l.b16 %v3647
      %v4037 = vunpack.c.h.b16 %v3647
      %v4038 = vunpack.c.l.b16 %v3648
      %v4039 = vunpack.c.h.b16 %v3648
      %v4040 = vunpack.c.l.b16 %v3649
      %v4041 = vunpack.c.h.b16 %v3649
      %v4042 = vunpack.c.l.b16 %v3650
      %v4043 = vunpack.c.h.b16 %v3650
      %v4044 = vunpack.c.l.b16 %v3651
      %v4045 = vunpack.c.h.b16 %v3651
      %v4046 = vunpack.c.l.b16 %v3652
      %v4047 = vunpack.c.h.b16 %v3652
      %v4048 = vunpack.c.l.b16 %v3653
      %v4049 = vunpack.c.h.b16 %v3653
      %v4050 = vunpack.c.l.b16 %v3654
      %v4051 = vunpack.c.h.b16 %v3654
      %v4052 = vunpack.c.l.b16 %v3655
      %v4053 = vunpack.c.h.b16 %v3655
      %v4054 = vunpack.c.l.b16 %v3656
      %v4055 = vunpack.c.h.b16 %v3656
      %v4056 = vunpack.c.l.b16 %v3657
      %v4057 = vunpack.c.h.b16 %v3657
      %v4058 = vunpack.c.l.b16 %v3658
      %v4059 = vunpack.c.h.b16 %v3658
      %v4060 = vunpack.c.l.b16 %v3659
      %v4061 = vunpack.c.h.b16 %v3659
      %v4062 = vunpack.c.l.b16 %v3660
      %v4063 = vunpack.c.h.b16 %v3660
      %v4064 = vunpack.c.l.b16 %v3661
      %v4065 = vunpack.c.h.b16 %v3661
      %v4066 = vunpack.c.l.b16 %v3662
      %v4067 = vunpack.c.h.b16 %v3662
      %v4068 = vunpack.c.l.b16 %v3663
      %v4069 = vunpack.c.h.b16 %v3663
      %v4070 = vunpack.c.l.b16 %v3664
      %v4071 = vunpack.c.h.b16 %v3664
      %v4072 = vunpack.c.l.b16 %v3665
      %v4073 = vunpack.c.h.b16 %v3665
      %v4074 = vunpack.c.l.b16 %v3666
      %v4075 = vunpack.c.h.b16 %v3666
      %v4076 = vunpack.c.l.b16 %v3667
      %v4077 = vunpack.c.h.b16 %v3667
      %v4078 = vunpack.c.l.b16 %v3668
      %v4079 = vunpack.c.h.b16 %v3668
      %v4080 = vunpack.c.l.b16 %v3669
      %v4081 = vunpack.c.h.b16 %v3669
      %v4082 = vunpack.c.l.b16 %v3670
      %v4083 = vunpack.c.h.b16 %v3670
      %v4084 = vunpack.c.l.b16 %v3671
      %v4085 = vunpack.c.h.b16 %v3671
      %v4086 = vunpack.c.l.b16 %v3672
      %v4087 = vunpack.c.h.b16 %v3672
      %v4088 = vunpack.c.l.b16 %v3673
      %v4089 = vunpack.c.h.b16 %v3673
      %v4090 = vunpack.c.l.b16 %v3674
      %v4091 = vunpack.c.h.b16 %v3674
      %v4092 = vunpack.c.l.b16 %v3675
      %v4093 = vunpack.c.h.b16 %v3675
      %v4094 = vunpack.c.l.b16 %v3676
      %v4095 = vunpack.c.h.b16 %v3676
      %v4096 = vunpack.c.l.b16 %v3677
      %v4097 = vunpack.c.h.b16 %v3677
      %v4098 = vunpack.c.l.b16 %v3678
      %v4099 = vunpack.c.h.b16 %v3678
      %v4100 = vunpack.c.l.b16 %v3679
      %v4101 = vunpack.c.h.b16 %v3679
      %v4102 = vunpack.c.l.b16 %v3680
      %v4103 = vunpack.c.h.b16 %v3680
      %v4104 = vunpack.c.l.b16 %v3681
      %v4105 = vunpack.c.h.b16 %v3681
      %v4106 = vunpack.c.l.b16 %v3682
      %v4107 = vunpack.c.h.b16 %v3682
      %v4108 = vunpack.c.l.b16 %v3683
      %v4109 = vunpack.c.h.b16 %v3683
      %v4110 = vunpack.c.l.b16 %v3684
      %v4111 = vunpack.c.h.b16 %v3684
      %v4112 = vunpack.c.l.b16 %v3685
      %v4113 = vunpack.c.h.b16 %v3685
      %v4114 = vunpack.c.l.b16 %v3686
      %v4115 = vunpack.c.h.b16 %v3686
      %v4116 = vunpack.c.l.b16 %v3687
      %v4117 = vunpack.c.h.b16 %v3687
      %v4118 = vunpack.c.l.b16 %v3688
      %v4119 = vunpack.c.h.b16 %v3688
      %v4120 = vunpack.c.l.b16 %v3689
      %v4121 = vunpack.c.h.b16 %v3689
      %v4122 = vunpack.c.l.b16 %v3690
      %v4123 = vunpack.c.h.b16 %v3690
      %v4124 = vunpack.c.l.b16 %v3691
      %v4125 = vunpack.c.h.b16 %v3691
      %v4126 = vunpack.c.l.b16 %v3692
      %v4127 = vunpack.c.h.b16 %v3692
      %v4128 = vunpack.c.l.b16 %v3693
      %v4129 = vunpack.c.h.b16 %v3693
      %v4130 = vunpack.c.l.b16 %v3694
      %v4131 = vunpack.c.h.b16 %v3694
      %v4132 = vunpack.c.l.b16 %v3695
      %v4133 = vunpack.c.h.b16 %v3695
      %v4134 = vunpack.c.l.b16 %v3696
      %v4135 = vunpack.c.h.b16 %v3696
      %v4136 = vunpack.c.l.b16 %v3697
      %v4137 = vunpack.c.h.b16 %v3697
      %v4138 = vunpack.c.l.b16 %v3698
      %v4139 = vunpack.c.h.b16 %v3698
      %v4140 = vunpack.c.l.b16 %v3699
      %v4141 = vunpack.c.h.b16 %v3699
      %v4142 = vunpack.c.l.b16 %v3700
      %v4143 = vunpack.c.h.b16 %v3700
      %v4144 = vunpack.c.l.b16 %v3701
      %v4145 = vunpack.c.h.b16 %v3701
      %v4146 = vunpack.c.l.b16 %v3702
      %v4147 = vunpack.c.h.b16 %v3702
      %v4148 = vunpack.c.l.b16 %v3703
      %v4149 = vunpack.c.h.b16 %v3703
      %v4150 = vunpack.c.l.b16 %v3704
      %v4151 = vunpack.c.h.b16 %v3704
      %v4152 = vunpack.c.l.b16 %v3705
      %v4153 = vunpack.c.h.b16 %v3705
      %v4154 = vunpack.c.l.b16 %v3706
      %v4155 = vunpack.c.h.b16 %v3706
      %v4156 = vunpack.c.l.b16 %v3707
      %v4157 = vunpack.c.h.b16 %v3707
      %v4158 = vunpack.c.l.b16 %v3708
      %v4159 = vunpack.c.h.b16 %v3708
      %v4160 = vunpack.c.l.b16 %v3709
      %v4161 = vunpack.c.h.b16 %v3709
      %v4162 = vunpack.c.l.b16 %v3710
      %v4163 = vunpack.c.h.b16 %v3710
      %v4164 = vpack.c.b16 %v3932, %v3930
      %v4165 = vpack.c.b16 %v3933, %v3931
      %v4166 = vpack.c.b16 %v3936, %v3934
      %v4167 = vpack.c.b16 %v3937, %v3935
      %v4168 = vpack.c.b16 %v3940, %v3938
      %v4169 = vpack.c.b16 %v3941, %v3939
      %v4170 = vpack.c.b16 %v3944, %v3942
      %v4171 = vpack.c.b16 %v3945, %v3943
      %v4172 = vpack.c.b16 %v3948, %v3946
      %v4173 = vpack.c.b16 %v3949, %v3947
      %v4174 = vpack.c.b16 %v3952, %v3950
      %v4175 = vpack.c.b16 %v3953, %v3951
      %v4176 = vpack.c.b16 %v3956, %v3954
      %v4177 = vpack.c.b16 %v3957, %v3955
      %v4178 = vpack.c.b16 %v3960, %v3958
      %v4179 = vpack.c.b16 %v3961, %v3959
      %v4180 = vpack.c.b16 %v3964, %v3962
      %v4181 = vpack.c.b16 %v3965, %v3963
      %v4182 = vpack.c.b16 %v3968, %v3966
      %v4183 = vpack.c.b16 %v3969, %v3967
      %v4184 = vpack.c.b16 %v3972, %v3970
      %v4185 = vpack.c.b16 %v3973, %v3971
      %v4186 = vpack.c.b16 %v3976, %v3974
      %v4187 = vpack.c.b16 %v3977, %v3975
      %v4188 = vpack.c.b16 %v3980, %v3978
      %v4189 = vpack.c.b16 %v3981, %v3979
      %v4190 = vpack.c.b16 %v3984, %v3982
      %v4191 = vpack.c.b16 %v3985, %v3983
      %v4192 = vpack.c.b16 %v3988, %v3986
      %v4193 = vpack.c.b16 %v3989, %v3987
      %v4194 = vpack.c.b16 %v3992, %v3990
      %v4195 = vpack.c.b16 %v3993, %v3991
      %v4196 = vpack.c.b16 %v3996, %v3994
      %v4197 = vpack.c.b16 %v3997, %v3995
      %v4198 = vpack.c.b16 %v4000, %v3998
      %v4199 = vpack.c.b16 %v4001, %v3999
      %v4200 = vpack.c.b16 %v4004, %v4002
      %v4201 = vpack.c.b16 %v4005, %v4003
      %v4202 = vpack.c.b16 %v4008, %v4006
      %v4203 = vpack.c.b16 %v4009, %v4007
      %v4204 = vpack.c.b16 %v4012, %v4010
      %v4205 = vpack.c.b16 %v4013, %v4011
      %v4206 = vpack.c.b16 %v4016, %v4014
      %v4207 = vpack.c.b16 %v4017, %v4015
      %v4208 = vpack.c.b16 %v4020, %v4018
      %v4209 = vpack.c.b16 %v4021, %v4019
      %v4210 = vpack.c.b16 %v4024, %v4022
      %v4211 = vpack.c.b16 %v4025, %v4023
      %v4212 = vpack.c.b16 %v4028, %v4026
      %v4213 = vpack.c.b16 %v4029, %v4027
      %v4214 = vpack.c.b16 %v4032, %v4030
      %v4215 = vpack.c.b16 %v4033, %v4031
      %v4216 = vpack.c.b16 %v4036, %v4034
      %v4217 = vpack.c.b16 %v4037, %v4035
      %v4218 = vpack.c.b16 %v4040, %v4038
      %v4219 = vpack.c.b16 %v4041, %v4039
      %v4220 = vpack.c.b16 %v4044, %v4042
      %v4221 = vpack.c.b16 %v4045, %v4043
      %v4222 = vpack.c.b16 %v4048, %v4046
      %v4223 = vpack.c.b16 %v4049, %v4047
      %v4224 = vpack.c.b16 %v4052, %v4050
      %v4225 = vpack.c.b16 %v4053, %v4051
      %v4226 = vpack.c.b16 %v4056, %v4054
      %v4227 = vpack.c.b16 %v4057, %v4055
      %v4228 = vpack.c.b16 %v4060, %v4058
      %v4229 = vpack.c.b16 %v4061, %v4059
      %v4230 = vpack.c.b16 %v4064, %v4062
      %v4231 = vpack.c.b16 %v4065, %v4063
      %v4232 = vpack.c.b16 %v4068, %v4066
      %v4233 = vpack.c.b16 %v4069, %v4067
      %v4234 = vpack.c.b16 %v4072, %v4070
      %v4235 = vpack.c.b16 %v4073, %v4071
      %v4236 = vpack.c.b16 %v4076, %v4074
      %v4237 = vpack.c.b16 %v4077, %v4075
      %v4238 = vpack.c.b16 %v4080, %v4078
      %v4239 = vpack.c.b16 %v4081, %v4079
      %v4240 = vpack.c.b16 %v4084, %v4082
      %v4241 = vpack.c.b16 %v4085, %v4083
      %v4242 = vpack.c.b16 %v4088, %v4086
      %v4243 = vpack.c.b16 %v4089, %v4087
      %v4244 = vpack.c.b16 %v4092, %v4090
      %v4245 = vpack.c.b16 %v4093, %v4091
      %v4246 = vpack.c.b16 %v4096, %v4094
      %v4247 = vpack.c.b16 %v4097, %v4095
      %v4248 = vpack.c.b16 %v4100, %v4098
      %v4249 = vpack.c.b16 %v4101, %v4099
      %v4250 = vpack.c.b16 %v4104, %v4102
      %v4251 = vpack.c.b16 %v4105, %v4103
      %v4252 = vpack.c.b16 %v4108, %v4106
      %v4253 = vpack.c.b16 %v4109, %v4107
      %v4254 = vpack.c.b16 %v4112, %v4110
      %v4255 = vpack.c.b16 %v4113, %v4111
      %v4256 = vpack.c.b16 %v4116, %v4114
      %v4257 = vpack.c.b16 %v4117, %v4115
      %v4258 = vpack.c.b16 %v4120, %v4118
      %v4259 = vpack.c.b16 %v4121, %v4119
      %v4260 = vpack.c.b16 %v4124, %v4122
      %v4261 = vpack.c.b16 %v4125, %v4123
      %v4262 = vpack.c.b16 %v4128, %v4126
      %v4263 = vpack.c.b16 %v4129, %v4127
      %v4264 = vpack.c.b16 %v4132, %v4130
      %v4265 = vpack.c.b16 %v4133, %v4131
      %v4266 = vpack.c.b16 %v4136, %v4134
      %v4267 = vpack.c.b16 %v4137, %v4135
      %v4268 = vpack.c.b16 %v4140, %v4138
      %v4269 = vpack.c.b16 %v4141, %v4139
      %v4270 = vpack.c.b16 %v4144, %v4142
      %v4271 = vpack.c.b16 %v4145, %v4143
      %v4272 = vpack.c.b16 %v4148, %v4146
      %v4273 = vpack.c.b16 %v4149, %v4147
      %v4274 = vpack.c.b16 %v4152, %v4150
      %v4275 = vpack.c.b16 %v4153, %v4151
      %v4276 = vpack.c.b16 %v4156, %v4154
      %v4277 = vpack.c.b16 %v4157, %v4155
      %v4278 = vpack.c.b16 %v4160, %v4158
      %v4279 = vpack.c.b16 %v4161, %v4159
      %v4280 = vpack.c.b16 %v4162, %v4162
      %v4281 = vpack.c.b16 %v4163, %v4163
      %vm4398 = vcmask 326656
      %v4400 = vsel %vm4398, %v3790, 0
      %v4403 = vsel %vm4398, %v3798, 0
      %v4406 = vsel %vm423, %v4280, 0
      %v4409 = vsel %vm423, %v4281, 0
      %4411 = vmatprep.subr.bf16.mxu0 %v4165
      %4412 = vmatpush1.bf16.msra.mxu0 %v4164
      %4413 = vmatprep.subr.bf16.mxu0 %v4167
      %4414 = vmatpush1.bf16.msra.mxu0 %v4166
      %4415 = vmatprep.subr.bf16.mxu0 %v4169
      %4416 = vmatpush1.bf16.msra.mxu0 %v4168
      %4417 = vmatprep.subr.bf16.mxu0 %v4171
      %4418 = vmatpush1.bf16.msra.mxu0 %v4170
      %4419 = vmatprep.subr.bf16.mxu0 %v4173
      %4420 = vmatpush1.bf16.msra.mxu0 %v4172
      %4421 = vmatprep.subr.bf16.mxu0 %v4175
      %4422 = vmatpush1.bf16.msra.mxu0 %v4174
      %4423 = vmatprep.subr.bf16.mxu0 %v4177
      %4424 = vmatpush1.bf16.msra.mxu0 %v4176
      %4425 = vmatprep.subr.bf16.mxu0 %v4179
      %4426 = vmatpush1.bf16.msra.mxu0 %v4178
      %4427 = vmatprep.subr.bf16.mxu0 %v4181
      %4428 = vmatpush1.bf16.msra.mxu0 %v4180
      %4429 = vmatprep.subr.bf16.mxu0 %v4183
      %4430 = vmatpush1.bf16.msra.mxu0 %v4182
      %4431 = vmatprep.subr.bf16.mxu0 %v4185
      %4432 = vmatpush1.bf16.msra.mxu0 %v4184
      %4433 = vmatprep.subr.bf16.mxu0 %v4187
      %4434 = vmatpush1.bf16.msra.mxu0 %v4186
      %4435 = vmatprep.subr.bf16.mxu0 %v4189
      %4436 = vmatpush1.bf16.msra.mxu0 %v4188
      %4437 = vmatprep.subr.bf16.mxu0 %v4191
      %4438 = vmatpush1.bf16.msra.mxu0 %v4190
      %4439 = vmatprep.subr.bf16.mxu0 %v4193
      %4440 = vmatpush1.bf16.msra.mxu0 %v4192
      %4441 = vmatprep.subr.bf16.mxu0 %v4195
      %4442 = vmatpush1.bf16.msra.mxu0 %v4194
      %4443 = vmatprep.mubr.bf16.mxu0 %v3784
      %4444 = vmatmul.mubr.bf16.gmra.mrb[0].mxu0 %v3783
      %v4445 = vpop.f32.mrb[0].mxu0
      %v4446 = vadd.f32 %v3718, %v4445
      %v4447 = vpop.f32.mrb[0].mxu0
      %v4448 = vadd.f32 %v3718, %v4447
      %v4449 = vpop.f32.mrb[0].mxu0
      %v4450 = vadd.f32 %v3723, %v4449
      %v4451 = vpop.f32.mrb[0].mxu0
      %v4452 = vadd.f32 %v3723, %v4451
      %4453 = vmatprep.mubr.bf16.mxu0 %v3792
      %4454 = vmatmul.mubr.bf16.gmra.mrb[0].mxu0 %v3791
      %v4455 = vpop.f32.mrb[0].mxu0
      %v4456 = vadd.f32 %v3728, %v4455
      %v4457 = vpop.f32.mrb[0].mxu0
      %v4458 = vadd.f32 %v3728, %v4457
      %v4459 = vpop.f32.mrb[0].mxu0
      %v4460 = vadd.f32 %v3733, %v4459
      %v4461 = vpop.f32.mrb[0].mxu0
      %v4462 = vadd.f32 %v3733, %v4461
      %4463 = vdwg.mxu0
      %4464 = vmatprep.subr.bf16.mxu0 %v4197
      %4465 = vmatpush1.bf16.msra.mxu0 %v4196
      %4466 = vmatprep.subr.bf16.mxu0 %v4199
      %4467 = vmatpush1.bf16.msra.mxu0 %v4198
      %4468 = vmatprep.subr.bf16.mxu0 %v4201
      %4469 = vmatpush1.bf16.msra.mxu0 %v4200
      %4470 = vmatprep.subr.bf16.mxu0 %v4203
      %4471 = vmatpush1.bf16.msra.mxu0 %v4202
      %4472 = vmatprep.subr.bf16.mxu0 %v4205
      %4473 = vmatpush1.bf16.msra.mxu0 %v4204
      %4474 = vmatprep.subr.bf16.mxu0 %v4207
      %4475 = vmatpush1.bf16.msra.mxu0 %v4206
      %4476 = vmatprep.subr.bf16.mxu0 %v4209
      %4477 = vmatpush1.bf16.msra.mxu0 %v4208
      %4478 = vmatprep.subr.bf16.mxu0 %v4211
      %4479 = vmatpush1.bf16.msra.mxu0 %v4210
      %4480 = vmatprep.subr.bf16.mxu0 %v4213
      %4481 = vmatpush1.bf16.msra.mxu0 %v4212
      %4482 = vmatprep.subr.bf16.mxu0 %v4215
      %4483 = vmatpush1.bf16.msra.mxu0 %v4214
      %4484 = vmatprep.subr.bf16.mxu0 %v4217
      %4485 = vmatpush1.bf16.msra.mxu0 %v4216
      %4486 = vmatprep.subr.bf16.mxu0 %v4219
      %4487 = vmatpush1.bf16.msra.mxu0 %v4218
      %4488 = vmatprep.subr.bf16.mxu0 %v4221
      %4489 = vmatpush1.bf16.msra.mxu0 %v4220
      %4490 = vmatprep.subr.bf16.mxu0 %v4223
      %4491 = vmatpush1.bf16.msra.mxu0 %v4222
      %4492 = vmatprep.subr.bf16.mxu0 %v4225
      %4493 = vmatpush1.bf16.msra.mxu0 %v4224
      %4494 = vmatprep.subr.bf16.mxu0 %v4227
      %4495 = vmatpush1.bf16.msra.mxu0 %v4226
      %4496 = vmatprep.mubr.bf16.mxu0 %v3786
      %4497 = vmatmul.mubr.bf16.gmra.mrb[0].mxu0 %v3785
      %v4498 = vpop.f32.mrb[0].mxu0
      %v4499 = vadd.f32 %v4446, %v4498
      %v4500 = vpop.f32.mrb[0].mxu0
      %v4501 = vadd.f32 %v4448, %v4500
      %v4502 = vpop.f32.mrb[0].mxu0
      %v4503 = vadd.f32 %v4450, %v4502
      %v4504 = vpop.f32.mrb[0].mxu0
      %v4505 = vadd.f32 %v4452, %v4504
      %4506 = vmatprep.mubr.bf16.mxu0 %v3794
      %4507 = vmatmul.mubr.bf16.gmra.mrb[0].mxu0 %v3793
      %v4508 = vpop.f32.mrb[0].mxu0
      %v4509 = vadd.f32 %v4456, %v4508
      %v4510 = vpop.f32.mrb[0].mxu0
      %v4511 = vadd.f32 %v4458, %v4510
      %v4512 = vpop.f32.mrb[0].mxu0
      %v4513 = vadd.f32 %v4460, %v4512
      %v4514 = vpop.f32.mrb[0].mxu0
      %v4515 = vadd.f32 %v4462, %v4514
      %4516 = vdwg.mxu0
      %4517 = vmatprep.subr.bf16.mxu0 %v4229
      %4518 = vmatpush1.bf16.msra.mxu0 %v4228
      %4519 = vmatprep.subr.bf16.mxu0 %v4231
      %4520 = vmatpush1.bf16.msra.mxu0 %v4230
      %4521 = vmatprep.subr.bf16.mxu0 %v4233
      %4522 = vmatpush1.bf16.msra.mxu0 %v4232
      %4523 = vmatprep.subr.bf16.mxu0 %v4235
      %4524 = vmatpush1.bf16.msra.mxu0 %v4234
      %4525 = vmatprep.subr.bf16.mxu0 %v4237
      %4526 = vmatpush1.bf16.msra.mxu0 %v4236
      %4527 = vmatprep.subr.bf16.mxu0 %v4239
      %4528 = vmatpush1.bf16.msra.mxu0 %v4238
      %4529 = vmatprep.subr.bf16.mxu0 %v4241
      %4530 = vmatpush1.bf16.msra.mxu0 %v4240
      %4531 = vmatprep.subr.bf16.mxu0 %v4243
      %4532 = vmatpush1.bf16.msra.mxu0 %v4242
      %4533 = vmatprep.subr.bf16.mxu0 %v4245
      %4534 = vmatpush1.bf16.msra.mxu0 %v4244
      %4535 = vmatprep.subr.bf16.mxu0 %v4247
      %4536 = vmatpush1.bf16.msra.mxu0 %v4246
      %4537 = vmatprep.subr.bf16.mxu0 %v4249
      %4538 = vmatpush1.bf16.msra.mxu0 %v4248
      %4539 = vmatprep.subr.bf16.mxu0 %v4251
      %4540 = vmatpush1.bf16.msra.mxu0 %v4250
      %4541 = vmatprep.subr.bf16.mxu0 %v4253
      %4542 = vmatpush1.bf16.msra.mxu0 %v4252
      %4543 = vmatprep.subr.bf16.mxu0 %v4255
      %4544 = vmatpush1.bf16.msra.mxu0 %v4254
      %4545 = vmatprep.subr.bf16.mxu0 %v4257
      %4546 = vmatpush1.bf16.msra.mxu0 %v4256
      %4547 = vmatprep.subr.bf16.mxu0 %v4259
      %4548 = vmatpush1.bf16.msra.mxu0 %v4258
      %4549 = vmatprep.mubr.bf16.mxu0 %v3788
      %4550 = vmatmul.mubr.bf16.gmra.mrb[0].mxu0 %v3787
      %v4551 = vpop.f32.mrb[0].mxu0
      %v4552 = vadd.f32 %v4499, %v4551
      %v4553 = vpop.f32.mrb[0].mxu0
      %v4554 = vadd.f32 %v4501, %v4553
      %v4555 = vpop.f32.mrb[0].mxu0
      %v4556 = vadd.f32 %v4503, %v4555
      %v4557 = vpop.f32.mrb[0].mxu0
      %v4558 = vadd.f32 %v4505, %v4557
      %4559 = vmatprep.mubr.bf16.mxu0 %v3796
      %4560 = vmatmul.mubr.bf16.gmra.mrb[0].mxu0 %v3795
      %v4561 = vpop.f32.mrb[0].mxu0
      %v4562 = vadd.f32 %v4509, %v4561
      %v4563 = vpop.f32.mrb[0].mxu0
      %v4564 = vadd.f32 %v4511, %v4563
      %v4565 = vpop.f32.mrb[0].mxu0
      %v4566 = vadd.f32 %v4513, %v4565
      %v4567 = vpop.f32.mrb[0].mxu0
      %v4568 = vadd.f32 %v4515, %v4567
      %4569 = vdwg.mxu0
      %4570 = vmatprep.subr.bf16.mxu0 %v4261
      %4571 = vmatpush1.bf16.msra.mxu0 %v4260
      %4572 = vmatprep.subr.bf16.mxu0 %v4263
      %4573 = vmatpush1.bf16.msra.mxu0 %v4262
      %4574 = vmatprep.subr.bf16.mxu0 %v4265
      %4575 = vmatpush1.bf16.msra.mxu0 %v4264
      %4576 = vmatprep.subr.bf16.mxu0 %v4267
      %4577 = vmatpush1.bf16.msra.mxu0 %v4266
      %4578 = vmatprep.subr.bf16.mxu0 %v4269
      %4579 = vmatpush1.bf16.msra.mxu0 %v4268
      %4580 = vmatprep.subr.bf16.mxu0 %v4271
      %4581 = vmatpush1.bf16.msra.mxu0 %v4270
      %4582 = vmatprep.subr.bf16.mxu0 %v4273
      %4583 = vmatpush1.bf16.msra.mxu0 %v4272
      %4584 = vmatprep.subr.bf16.mxu0 %v4275
      %4585 = vmatpush1.bf16.msra.mxu0 %v4274
      %4586 = vmatprep.subr.bf16.mxu0 %v4277
      %4587 = vmatpush1.bf16.msra.mxu0 %v4276
      %4588 = vmatprep.subr.bf16.mxu0 %v4279
      %4589 = vmatpush1.bf16.msra.mxu0 %v4278
      %4590 = vmatprep.subr.bf16.mxu0 %v4409
      %4591 = vmatpush1.bf16.msra.mxu0 %v4406
      %4592 = vmatprep.subr.bf16.mxu0 0
      %4593 = vmatpush1.bf16.msra.mxu0 0
      %4594 = vmatprep.subr.bf16.mxu0 0
      %4595 = vmatpush1.bf16.msra.mxu0 0
      %4596 = vmatprep.subr.bf16.mxu0 0
      %4597 = vmatpush1.bf16.msra.mxu0 0
      %4598 = vmatprep.subr.bf16.mxu0 0
      %4599 = vmatpush1.bf16.msra.mxu0 0
      %4600 = vmatprep.subr.bf16.mxu0 0
      %4601 = vmatpush1.bf16.msra.mxu0 0
      %4602 = vmatprep.mubr.bf16.mxu0 %v4400
      %4603 = vmatmul.mubr.bf16.gmra.mrb[0].mxu0 %v3789
      %v4604 = vpop.f32.mrb[0].mxu0
      %v4605 = vadd.f32 %v4552, %v4604
      %v4606 = vpop.f32.mrb[0].mxu0
      %v4607 = vadd.f32 %v4554, %v4606
      %v4608 = vpop.f32.mrb[0].mxu0
      %v4609 = vadd.f32 %v4556, %v4608
      %v4610 = vpop.f32.mrb[0].mxu0
      %v4611 = vadd.f32 %v4558, %v4610
      %4612 = vmatprep.mubr.bf16.mxu0 %v4403
      %4613 = vmatmul.mubr.bf16.gmra.mrb[0].mxu0 %v3797
      %v4614 = vpop.f32.mrb[0].mxu0
      %v4615 = vadd.f32 %v4562, %v4614
      %v4616 = vpop.f32.mrb[0].mxu0
      %v4617 = vadd.f32 %v4564, %v4616
      %v4618 = vpop.f32.mrb[0].mxu0
      %v4619 = vadd.f32 %v4566, %v4618
      %v4620 = vpop.f32.mrb[0].mxu0
      %v4621 = vadd.f32 %v4568, %v4620
      %4622 = vdwg.mxu0
      %v4623 = vmul.f32 %v4605, 0.2
      %v4624 = vmul.f32 %v4607, 0.2
      %v4625 = vmul.f32 %v4609, 0.2
      %v4626 = vmul.f32 %v4611, 0.2
      %v4627 = vmul.f32 %v4615, 0.2
      %v4628 = vmul.f32 %v4617, 0.2
      %v4629 = vmul.f32 %v4619, 0.2
      %v4630 = vmul.f32 %v4621, 0.2
      %v4631 = vmax.f32 %v4605, %v4623
      %v4632 = vmax.f32 %v4607, %v4624
      %v4633 = vmax.f32 %v4609, %v4625
      %v4634 = vmax.f32 %v4611, %v4626
      %v4635 = vmax.f32 %v4615, %v4627
      %v4636 = vmax.f32 %v4617, %v4628
      %v4637 = vmax.f32 %v4619, %v4629
      %v4638 = vmax.f32 %v4621, %v4630
      %4639 = vrot.lane.b32.xlu0 %v4631, 17
      %v4640 = vpop.permute.xlu0 %4639
      %4641 = vrot.lane.b32.xlu0 %v4633, 17
      %v4642 = vpop.permute.xlu0 %4641
      %4643 = vrot.lane.b32.xlu0 %v4635, 17
      %v4644 = vpop.permute.xlu0 %4643
      %4645 = vrot.lane.b32.xlu0 %v4637, 17
      %v4646 = vpop.permute.xlu0 %4645
      %4647 = vrot.lane.b32.xlu0 %v4632, 17
      %v4648 = vpop.permute.xlu0 %4647
      %4649 = vrot.lane.b32.xlu0 %v4634, 17
      %v4650 = vpop.permute.xlu0 %4649
      %4651 = vrot.lane.b32.xlu0 %v4636, 17
      %v4652 = vpop.permute.xlu0 %4651
      %4653 = vrot.lane.b32.xlu0 %v4638, 17
      %v4654 = vpop.permute.xlu0 %4653
      %v4655 = vsel %vm432, %v4640, %v4648
      %v4656 = vsel %vm432, %v4642, %v4650
      %v4657 = vsel %vm432, %v4644, %v4652
      %v4658 = vsel %vm432, %v4646, %v4654
      %v4659 = vsel %vm432, %v4648, %v4640
      %v4660 = vsel %vm432, %v4650, %v4642
      %v4661 = vsel %vm432, %v4652, %v4644
      %v4662 = vsel %vm432, %v4654, %v4646
      %v4663 = vmul.f32 %v4659, %v438
      %v4664 = vmul.f32 %v4655, %v442
      %v4665 = vmul.f32 %v4660, %v438
      %v4666 = vmul.f32 %v4656, %v442
      %v4667 = vmul.f32 %v4661, %v438
      %v4668 = vmul.f32 %v4657, %v442
      %v4669 = vmul.f32 %v4662, %v438
      %v4670 = vmul.f32 %v4658, %v442
      %v4671 = vpack.c.bf16 %v4665, %v4663
      %v4672 = vpack.c.bf16 %v4666, %v4664
      %v4673 = vpack.c.bf16 %v4669, %v4667
      %v4674 = vpack.c.bf16 %v4670, %v4668
      %v4679 = vunpack.c.l.b16 %v4671
      %v4680 = vunpack.c.l.b16 %v4672
      %v4681 = vunpack.c.h.b16 %v4671
      %v4682 = vunpack.c.h.b16 %v4672
      %v4683 = vunpack.c.l.b16 %v4673
      %v4684 = vunpack.c.l.b16 %v4674
      %v4685 = vunpack.c.h.b16 %v4673
      %v4686 = vunpack.c.h.b16 %v4674
      %v4687 = vpack.c.b16 %v4680, %v4679
      %v4688 = vpack.c.b16 %v4682, %v4681
      %v4689 = vpack.c.b16 %v4684, %v4683
      %v4690 = vpack.c.b16 %v4686, %v4685
      %4695 = vst [vmem:[#allocation2 + $0x3a8] sm:$0xff] %v4687
      %4696 = vst [vmem:[#allocation2 + $0x3b0] sm:$0xff] %v4688
      %4697 = vst [vmem:[#allocation2 + $0x3b8] sm:$0xff] %v4689
      %4698 = vst [vmem:[#allocation2 + $0x3c0] sm:$0xff] %v4690
      %4699 = vrot.lane.b32.xlu0 %v4631, 16
      %v4700 = vpop.permute.xlu0 %4699
      %4701 = vrot.lane.b32.xlu0 %v4633, 16
      %v4702 = vpop.permute.xlu0 %4701
      %4703 = vrot.lane.b32.xlu0 %v4635, 16
      %v4704 = vpop.permute.xlu0 %4703
      %4705 = vrot.lane.b32.xlu0 %v4637, 16
      %v4706 = vpop.permute.xlu0 %4705
      %4707 = vrot.lane.b32.xlu0 %v4632, 16
      %v4708 = vpop.permute.xlu0 %4707
      %4709 = vrot.lane.b32.xlu0 %v4634, 16
      %v4710 = vpop.permute.xlu0 %4709
      %4711 = vrot.lane.b32.xlu0 %v4636, 16
      %v4712 = vpop.permute.xlu0 %4711
      %4713 = vrot.lane.b32.xlu0 %v4638, 16
      %v4714 = vpop.permute.xlu0 %4713
      %v4715 = vsel %vm458, %v4700, %v4708
      %v4716 = vsel %vm458, %v4702, %v4710
      %v4717 = vsel %vm458, %v4704, %v4712
      %v4718 = vsel %vm458, %v4706, %v4714
      %v4719 = vsel %vm458, %v4708, %v4700
      %v4720 = vsel %vm458, %v4710, %v4702
      %v4721 = vsel %vm458, %v4712, %v4704
      %v4722 = vsel %vm458, %v4714, %v4706
      %v4723 = vmul.f32 %v4719, %v464
      %v4724 = vmul.f32 %v4715, %v468
      %v4725 = vmul.f32 %v4720, %v464
      %v4726 = vmul.f32 %v4716, %v468
      %v4727 = vmul.f32 %v4721, %v464
      %v4728 = vmul.f32 %v4717, %v468
      %v4729 = vmul.f32 %v4722, %v464
      %v4730 = vmul.f32 %v4718, %v468
      %v4731 = vpack.c.bf16 %v4725, %v4723
      %v4732 = vpack.c.bf16 %v4726, %v4724
      %v4733 = vpack.c.bf16 %v4729, %v4727
      %v4734 = vpack.c.bf16 %v4730, %v4728
      %v4739 = vunpack.c.l.b16 %v4731
      %v4740 = vunpack.c.l.b16 %v4732
      %v4741 = vunpack.c.h.b16 %v4731
      %v4742 = vunpack.c.h.b16 %v4732
      %v4743 = vunpack.c.l.b16 %v4733
      %v4744 = vunpack.c.l.b16 %v4734
      %v4745 = vunpack.c.h.b16 %v4733
      %v4746 = vunpack.c.h.b16 %v4734
      %v4747 = vpack.c.b16 %v4740, %v4739
      %v4748 = vpack.c.b16 %v4742, %v4741
      %v4749 = vpack.c.b16 %v4744, %v4743
      %v4750 = vpack.c.b16 %v4746, %v4745
      %4755 = vst [vmem:[#allocation2 + $0x3c8] sm:$0xff] %v4747
      %4756 = vst [vmem:[#allocation2 + $0x3d0] sm:$0xff] %v4748
      %4757 = vst [vmem:[#allocation2 + $0x3d8] sm:$0xff] %v4749
      %4758 = vst [vmem:[#allocation2 + $0x3e0] sm:$0xff] %v4750
      %4759 = vrot.lane.b32.xlu0 %v4631, 15
      %v4760 = vpop.permute.xlu0 %4759
      %4761 = vrot.lane.b32.xlu0 %v4633, 15
      %v4762 = vpop.permute.xlu0 %4761
      %4763 = vrot.lane.b32.xlu0 %v4635, 15
      %v4764 = vpop.permute.xlu0 %4763
      %4765 = vrot.lane.b32.xlu0 %v4637, 15
      %v4766 = vpop.permute.xlu0 %4765
      %4767 = vrot.lane.b32.xlu0 %v4632, 15
      %v4768 = vpop.permute.xlu0 %4767
      %4769 = vrot.lane.b32.xlu0 %v4634, 15
      %v4770 = vpop.permute.xlu0 %4769
      %4771 = vrot.lane.b32.xlu0 %v4636, 15
      %v4772 = vpop.permute.xlu0 %4771
      %4773 = vrot.lane.b32.xlu0 %v4638, 15
      %v4774 = vpop.permute.xlu0 %4773
      %v4775 = vsel %vm484, %v4760, %v4768
      %v4776 = vsel %vm484, %v4762, %v4770
      %v4777 = vsel %vm484, %v4764, %v4772
      %v4778 = vsel %vm484, %v4766, %v4774
      %v4779 = vsel %vm484, %v4768, %v4760
      %v4780 = vsel %vm484, %v4770, %v4762
      %v4781 = vsel %vm484, %v4772, %v4764
      %v4782 = vsel %vm484, %v4774, %v4766
      %v4783 = vmul.f32 %v4779, %v490
      %v4784 = vmul.f32 %v4775, %v494
      %v4785 = vmul.f32 %v4780, %v490
      %v4786 = vmul.f32 %v4776, %v494
      %v4787 = vmul.f32 %v4781, %v490
      %v4788 = vmul.f32 %v4777, %v494
      %v4789 = vmul.f32 %v4782, %v490
      %v4790 = vmul.f32 %v4778, %v494
      %v4791 = vpack.c.bf16 %v4785, %v4783
      %v4792 = vpack.c.bf16 %v4786, %v4784
      %v4793 = vpack.c.bf16 %v4789, %v4787
      %v4794 = vpack.c.bf16 %v4790, %v4788
      %v4799 = vunpack.c.l.b16 %v4791
      %v4800 = vunpack.c.l.b16 %v4792
      %v4801 = vunpack.c.h.b16 %v4791
      %v4802 = vunpack.c.h.b16 %v4792
      %v4803 = vunpack.c.l.b16 %v4793
      %v4804 = vunpack.c.l.b16 %v4794
      %v4805 = vunpack.c.h.b16 %v4793
      %v4806 = vunpack.c.h.b16 %v4794
      %v4807 = vpack.c.b16 %v4800, %v4799
      %v4808 = vpack.c.b16 %v4802, %v4801
      %v4809 = vpack.c.b16 %v4804, %v4803
      %v4810 = vpack.c.b16 %v4806, %v4805
      %4815 = vst [vmem:[#allocation2 + $0x3e8] sm:$0xff] %v4807
      %4816 = vst [vmem:[#allocation2 + $0x3f0] sm:$0xff] %v4808
      %4817 = vst [vmem:[#allocation2 + $0x3f8] sm:$0xff] %v4809
      %4818 = vst [vmem:[#allocation2 + $0x400] sm:$0xff] %v4810
      %4819 = vrot.lane.b32.xlu0 %v4631, 1
      %v4820 = vpop.permute.xlu0 %4819
      %4821 = vrot.lane.b32.xlu0 %v4633, 1
      %v4822 = vpop.permute.xlu0 %4821
      %4823 = vrot.lane.b32.xlu0 %v4635, 1
      %v4824 = vpop.permute.xlu0 %4823
      %4825 = vrot.lane.b32.xlu0 %v4637, 1
      %v4826 = vpop.permute.xlu0 %4825
      %4827 = vrot.lane.b32.xlu0 %v4632, 1
      %v4828 = vpop.permute.xlu0 %4827
      %4829 = vrot.lane.b32.xlu0 %v4634, 1
      %v4830 = vpop.permute.xlu0 %4829
      %4831 = vrot.lane.b32.xlu0 %v4636, 1
      %v4832 = vpop.permute.xlu0 %4831
      %4833 = vrot.lane.b32.xlu0 %v4638, 1
      %v4834 = vpop.permute.xlu0 %4833
      %v4835 = vsel %vm510, %v4820, %v4828
      %v4836 = vsel %vm510, %v4822, %v4830
      %v4837 = vsel %vm510, %v4824, %v4832
      %v4838 = vsel %vm510, %v4826, %v4834
      %v4839 = vsel %vm510, %v4828, %v4820
      %v4840 = vsel %vm510, %v4830, %v4822
      %v4841 = vsel %vm510, %v4832, %v4824
      %v4842 = vsel %vm510, %v4834, %v4826
      %v4843 = vmul.f32 %v4839, %v516
      %v4844 = vmul.f32 %v4835, %v520
      %v4845 = vmul.f32 %v4840, %v516
      %v4846 = vmul.f32 %v4836, %v520
      %v4847 = vmul.f32 %v4841, %v516
      %v4848 = vmul.f32 %v4837, %v520
      %v4849 = vmul.f32 %v4842, %v516
      %v4850 = vmul.f32 %v4838, %v520
      %v4851 = vpack.c.bf16 %v4845, %v4843
      %v4852 = vpack.c.bf16 %v4846, %v4844
      %v4853 = vpack.c.bf16 %v4849, %v4847
      %v4854 = vpack.c.bf16 %v4850, %v4848
      %v4859 = vunpack.c.l.b16 %v4851
      %v4860 = vunpack.c.l.b16 %v4852
      %v4861 = vunpack.c.h.b16 %v4851
      %v4862 = vunpack.c.h.b16 %v4852
      %v4863 = vunpack.c.l.b16 %v4853
      %v4864 = vunpack.c.l.b16 %v4854
      %v4865 = vunpack.c.h.b16 %v4853
      %v4866 = vunpack.c.h.b16 %v4854
      %v4867 = vpack.c.b16 %v4860, %v4859
      %v4868 = vpack.c.b16 %v4862, %v4861
      %v4869 = vpack.c.b16 %v4864, %v4863
      %v4870 = vpack.c.b16 %v4866, %v4865
      %4875 = vst [vmem:[#allocation2 + $0x408] sm:$0xff] %v4867
      %4876 = vst [vmem:[#allocation2 + $0x410] sm:$0xff] %v4868
      %4877 = vst [vmem:[#allocation2 + $0x418] sm:$0xff] %v4869
      %4878 = vst [vmem:[#allocation2 + $0x420] sm:$0xff] %v4870
      %v4879 = vpack.c.bf16 %v4633, %v4631
      %v4880 = vpack.c.bf16 %v4634, %v4632
      %v4881 = vpack.c.bf16 %v4637, %v4635
      %v4882 = vpack.c.bf16 %v4638, %v4636
      %v4887 = vunpack.c.l.b16 %v4879
      %v4888 = vunpack.c.l.b16 %v4880
      %v4889 = vunpack.c.h.b16 %v4879
      %v4890 = vunpack.c.h.b16 %v4880
      %v4891 = vunpack.c.l.b16 %v4881
      %v4892 = vunpack.c.l.b16 %v4882
      %v4893 = vunpack.c.h.b16 %v4881
      %v4894 = vunpack.c.h.b16 %v4882
      %v4895 = vpack.c.b16 %v4888, %v4887
      %v4896 = vpack.c.b16 %v4890, %v4889
      %v4897 = vpack.c.b16 %v4892, %v4891
      %v4898 = vpack.c.b16 %v4894, %v4893
      %4903 = vst [vmem:[#allocation2 + $0x428] sm:$0xff] %v4895
      %4904 = vst [vmem:[#allocation2 + $0x430] sm:$0xff] %v4896
      %4905 = vst [vmem:[#allocation2 + $0x438] sm:$0xff] %v4897
      %4906 = vst [vmem:[#allocation2 + $0x440] sm:$0xff] %v4898
      %4907 = vrot.lane.b32.xlu0 %v4631, 127
      %v4908 = vpop.permute.xlu0 %4907
      %4909 = vrot.lane.b32.xlu0 %v4633, 127
      %v4910 = vpop.permute.xlu0 %4909
      %4911 = vrot.lane.b32.xlu0 %v4635, 127
      %v4912 = vpop.permute.xlu0 %4911
      %4913 = vrot.lane.b32.xlu0 %v4637, 127
      %v4914 = vpop.permute.xlu0 %4913
      %4915 = vrot.lane.b32.xlu0 %v4632, 127
      %v4916 = vpop.permute.xlu0 %4915
      %4917 = vrot.lane.b32.xlu0 %v4634, 127
      %v4918 = vpop.permute.xlu0 %4917
      %4919 = vrot.lane.b32.xlu0 %v4636, 127
      %v4920 = vpop.permute.xlu0 %4919
      %4921 = vrot.lane.b32.xlu0 %v4638, 127
      %v4922 = vpop.permute.xlu0 %4921
      %v4923 = vsel %vm545, %v4908, %v4916
      %v4924 = vsel %vm545, %v4910, %v4918
      %v4925 = vsel %vm545, %v4912, %v4920
      %v4926 = vsel %vm545, %v4914, %v4922
      %v4927 = vsel %vm545, %v4916, %v4908
      %v4928 = vsel %vm545, %v4918, %v4910
      %v4929 = vsel %vm545, %v4920, %v4912
      %v4930 = vsel %vm545, %v4922, %v4914
      %v4931 = vmul.f32 %v4923, %v551
      %v4932 = vmul.f32 %v4927, %v555
      %v4933 = vmul.f32 %v4924, %v551
      %v4934 = vmul.f32 %v4928, %v555
      %v4935 = vmul.f32 %v4925, %v551
      %v4936 = vmul.f32 %v4929, %v555
      %v4937 = vmul.f32 %v4926, %v551
      %v4938 = vmul.f32 %v4930, %v555
      %v4939 = vpack.c.bf16 %v4933, %v4931
      %v4940 = vpack.c.bf16 %v4934, %v4932
      %v4941 = vpack.c.bf16 %v4937, %v4935
      %v4942 = vpack.c.bf16 %v4938, %v4936
      %v4947 = vunpack.c.l.b16 %v4939
      %v4948 = vunpack.c.l.b16 %v4940
      %v4949 = vunpack.c.h.b16 %v4939
      %v4950 = vunpack.c.h.b16 %v4940
      %v4951 = vunpack.c.l.b16 %v4941
      %v4952 = vunpack.c.l.b16 %v4942
      %v4953 = vunpack.c.h.b16 %v4941
      %v4954 = vunpack.c.h.b16 %v4942
      %v4955 = vpack.c.b16 %v4948, %v4947
      %v4956 = vpack.c.b16 %v4950, %v4949
      %v4957 = vpack.c.b16 %v4952, %v4951
      %v4958 = vpack.c.b16 %v4954, %v4953
      %4963 = vst [vmem:[#allocation2 + $0x448] sm:$0xff] %v4955
      %4964 = vst [vmem:[#allocation2 + $0x450] sm:$0xff] %v4956
      %4965 = vst [vmem:[#allocation2 + $0x458] sm:$0xff] %v4957
      %4966 = vst [vmem:[#allocation2 + $0x460] sm:$0xff] %v4958
      %4967 = vrot.lane.b32.xlu0 %v4631, 113
      %v4968 = vpop.permute.xlu0 %4967
      %4969 = vrot.lane.b32.xlu0 %v4633, 113
      %v4970 = vpop.permute.xlu0 %4969
      %4971 = vrot.lane.b32.xlu0 %v4635, 113
      %v4972 = vpop.permute.xlu0 %4971
      %4973 = vrot.lane.b32.xlu0 %v4637, 113
      %v4974 = vpop.permute.xlu0 %4973
      %4975 = vrot.lane.b32.xlu0 %v4632, 113
      %v4976 = vpop.permute.xlu0 %4975
      %4977 = vrot.lane.b32.xlu0 %v4634, 113
      %v4978 = vpop.permute.xlu0 %4977
      %4979 = vrot.lane.b32.xlu0 %v4636, 113
      %v4980 = vpop.permute.xlu0 %4979
      %4981 = vrot.lane.b32.xlu0 %v4638, 113
      %v4982 = vpop.permute.xlu0 %4981
      %v4983 = vsel %vm571, %v4968, %v4976
      %v4984 = vsel %vm571, %v4970, %v4978
      %v4985 = vsel %vm571, %v4972, %v4980
      %v4986 = vsel %vm571, %v4974, %v4982
      %v4987 = vsel %vm571, %v4976, %v4968
      %v4988 = vsel %vm571, %v4978, %v4970
      %v4989 = vsel %vm571, %v4980, %v4972
      %v4990 = vsel %vm571, %v4982, %v4974
      %v4991 = vmul.f32 %v4983, %v577
      %v4992 = vmul.f32 %v4987, %v581
      %v4993 = vmul.f32 %v4984, %v577
      %v4994 = vmul.f32 %v4988, %v581
      %v4995 = vmul.f32 %v4985, %v577
      %v4996 = vmul.f32 %v4989, %v581
      %v4997 = vmul.f32 %v4986, %v577
      %v4998 = vmul.f32 %v4990, %v581
      %v4999 = vpack.c.bf16 %v4993, %v4991
      %v5000 = vpack.c.bf16 %v4994, %v4992
      %v5001 = vpack.c.bf16 %v4997, %v4995
      %v5002 = vpack.c.bf16 %v4998, %v4996
      %v5007 = vunpack.c.l.b16 %v4999
      %v5008 = vunpack.c.l.b16 %v5000
      %v5009 = vunpack.c.h.b16 %v4999
      %v5010 = vunpack.c.h.b16 %v5000
      %v5011 = vunpack.c.l.b16 %v5001
      %v5012 = vunpack.c.l.b16 %v5002
      %v5013 = vunpack.c.h.b16 %v5001
      %v5014 = vunpack.c.h.b16 %v5002
      %v5015 = vpack.c.b16 %v5008, %v5007
      %v5016 = vpack.c.b16 %v5010, %v5009
      %v5017 = vpack.c.b16 %v5012, %v5011
      %v5018 = vpack.c.b16 %v5014, %v5013
      %5023 = vst [vmem:[#allocation2 + $0x468] sm:$0xff] %v5015
      %5024 = vst [vmem:[#allocation2 + $0x470] sm:$0xff] %v5016
      %5025 = vst [vmem:[#allocation2 + $0x478] sm:$0xff] %v5017
      %5026 = vst [vmem:[#allocation2 + $0x480] sm:$0xff] %v5018
      %5027 = vrot.lane.b32.xlu0 %v4631, 112
      %v5028 = vpop.permute.xlu0 %5027
      %5029 = vrot.lane.b32.xlu0 %v4633, 112
      %v5030 = vpop.permute.xlu0 %5029
      %5031 = vrot.lane.b32.xlu0 %v4635, 112
      %v5032 = vpop.permute.xlu0 %5031
      %5033 = vrot.lane.b32.xlu0 %v4637, 112
      %v5034 = vpop.permute.xlu0 %5033
      %5035 = vrot.lane.b32.xlu0 %v4632, 112
      %v5036 = vpop.permute.xlu0 %5035
      %5037 = vrot.lane.b32.xlu0 %v4634, 112
      %v5038 = vpop.permute.xlu0 %5037
      %5039 = vrot.lane.b32.xlu0 %v4636, 112
      %v5040 = vpop.permute.xlu0 %5039
      %5041 = vrot.lane.b32.xlu0 %v4638, 112
      %v5042 = vpop.permute.xlu0 %5041
      %v5043 = vsel %vm597, %v5028, %v5036
      %v5044 = vsel %vm597, %v5030, %v5038
      %v5045 = vsel %vm597, %v5032, %v5040
      %v5046 = vsel %vm597, %v5034, %v5042
      %v5047 = vsel %vm597, %v5036, %v5028
      %v5048 = vsel %vm597, %v5038, %v5030
      %v5049 = vsel %vm597, %v5040, %v5032
      %v5050 = vsel %vm597, %v5042, %v5034
      %v5051 = vmul.f32 %v5043, %v603
      %v5052 = vmul.f32 %v5047, %v607
      %v5053 = vmul.f32 %v5044, %v603
      %v5054 = vmul.f32 %v5048, %v607
      %v5055 = vmul.f32 %v5045, %v603
      %v5056 = vmul.f32 %v5049, %v607
      %v5057 = vmul.f32 %v5046, %v603
      %v5058 = vmul.f32 %v5050, %v607
      %v5059 = vpack.c.bf16 %v5053, %v5051
      %v5060 = vpack.c.bf16 %v5054, %v5052
      %v5061 = vpack.c.bf16 %v5057, %v5055
      %v5062 = vpack.c.bf16 %v5058, %v5056
      %v5067 = vunpack.c.l.b16 %v5059
      %v5068 = vunpack.c.l.b16 %v5060
      %v5069 = vunpack.c.h.b16 %v5059
      %v5070 = vunpack.c.h.b16 %v5060
      %v5071 = vunpack.c.l.b16 %v5061
      %v5072 = vunpack.c.l.b16 %v5062
      %v5073 = vunpack.c.h.b16 %v5061
      %v5074 = vunpack.c.h.b16 %v5062
      %v5075 = vpack.c.b16 %v5068, %v5067
      %v5076 = vpack.c.b16 %v5070, %v5069
      %v5077 = vpack.c.b16 %v5072, %v5071
      %v5078 = vpack.c.b16 %v5074, %v5073
      %5083 = vst [vmem:[#allocation2 + $0x488] sm:$0xff] %v5075
      %5084 = vst [vmem:[#allocation2 + $0x490] sm:$0xff] %v5076
      %5085 = vst [vmem:[#allocation2 + $0x498] sm:$0xff] %v5077
      %5086 = vst [vmem:[#allocation2 + $0x4a0] sm:$0xff] %v5078
      %5087 = vrot.lane.b32.xlu0 %v4631, 111
      %v5088 = vpop.permute.xlu0 %5087
      %5089 = vrot.lane.b32.xlu0 %v4633, 111
      %v5090 = vpop.permute.xlu0 %5089
      %5091 = vrot.lane.b32.xlu0 %v4635, 111
      %v5092 = vpop.permute.xlu0 %5091
      %5093 = vrot.lane.b32.xlu0 %v4637, 111
      %v5094 = vpop.permute.xlu0 %5093
      %5095 = vrot.lane.b32.xlu0 %v4632, 111
      %v5096 = vpop.permute.xlu0 %5095
      %5097 = vrot.lane.b32.xlu0 %v4634, 111
      %v5098 = vpop.permute.xlu0 %5097
      %5099 = vrot.lane.b32.xlu0 %v4636, 111
      %v5100 = vpop.permute.xlu0 %5099
      %5101 = vrot.lane.b32.xlu0 %v4638, 111
      %v5102 = vpop.permute.xlu0 %5101
      %v5103 = vsel %vm623, %v5088, %v5096
      %v5104 = vsel %vm623, %v5090, %v5098
      %v5105 = vsel %vm623, %v5092, %v5100
      %v5106 = vsel %vm623, %v5094, %v5102
      %v5107 = vsel %vm623, %v5096, %v5088
      %v5108 = vsel %vm623, %v5098, %v5090
      %v5109 = vsel %vm623, %v5100, %v5092
      %v5110 = vsel %vm623, %v5102, %v5094
      %v5111 = vmul.f32 %v5103, %v629
      %v5112 = vmul.f32 %v5107, %v633
      %v5113 = vmul.f32 %v5104, %v629
      %v5114 = vmul.f32 %v5108, %v633
      %v5115 = vmul.f32 %v5105, %v629
      %v5116 = vmul.f32 %v5109, %v633
      %v5117 = vmul.f32 %v5106, %v629
      %v5118 = vmul.f32 %v5110, %v633
      %v5119 = vpack.c.bf16 %v5113, %v5111
      %v5120 = vpack.c.bf16 %v5114, %v5112
      %v5121 = vpack.c.bf16 %v5117, %v5115
      %v5122 = vpack.c.bf16 %v5118, %v5116
      %v5127 = vunpack.c.l.b16 %v5119
      %v5128 = vunpack.c.l.b16 %v5120
      %v5129 = vunpack.c.h.b16 %v5119
      %v5130 = vunpack.c.h.b16 %v5120
      %v5131 = vunpack.c.l.b16 %v5121
      %v5132 = vunpack.c.l.b16 %v5122
      %v5133 = vunpack.c.h.b16 %v5121
      %v5134 = vunpack.c.h.b16 %v5122
      %v5135 = vpack.c.b16 %v5128, %v5127
      %v5136 = vpack.c.b16 %v5130, %v5129
      %v5137 = vpack.c.b16 %v5132, %v5131
      %v5138 = vpack.c.b16 %v5134, %v5133
      %5143 = vst [vmem:[#allocation2 + $0x4a8] sm:$0xff] %v5135
      %5144 = vst [vmem:[#allocation2 + $0x4b0] sm:$0xff] %v5136
      %5145 = vst [vmem:[#allocation2 + $0x4b8] sm:$0xff] %v5137
      %5146 = vst [vmem:[#allocation2 + $0x4c0] sm:$0xff] %v5138
      %v5147 = vld [vmem:[%s6] sm:$0xff]
      %v5148 = vld [vmem:[%s6 + $0x8] sm:$0xff]
      %v5149 = vld [vmem:[%s6 + $0x10] sm:$0xf]
      %v5150 = vld [vmem:[#allocation2] sm:$0xff]
      %v5151 = vld [vmem:[#allocation2 + $0x8] sm:$0xff]
      %v5152 = vld [vmem:[#allocation2 + $0x10] sm:$0xff]
      %v5153 = vld [vmem:[#allocation2 + $0x18] sm:$0xff]
      %v5154 = vld [vmem:[#allocation2 + $0x20] sm:$0xff]
      %v5155 = vld [vmem:[#allocation2 + $0x28] sm:$0xff]
      %v5156 = vld [vmem:[#allocation2 + $0x30] sm:$0xff]
      %v5157 = vld [vmem:[#allocation2 + $0x38] sm:$0xff]
      %v5158 = vld [vmem:[#allocation2 + $0x40] sm:$0xff]
      %v5159 = vld [vmem:[#allocation2 + $0x48] sm:$0xff]
      %v5160 = vld [vmem:[#allocation2 + $0x50] sm:$0xff]
      %v5161 = vld [vmem:[#allocation2 + $0x58] sm:$0xff]
      %v5162 = vld [vmem:[#allocation2 + $0x60] sm:$0xff]
      %v5163 = vld [vmem:[#allocation2 + $0x68] sm:$0xff]
      %v5164 = vld [vmem:[#allocation2 + $0x70] sm:$0xff]
      %v5165 = vld [vmem:[#allocation2 + $0x78] sm:$0xff]
      %v5166 = vld [vmem:[#allocation2 + $0x80] sm:$0xff]
      %v5167 = vld [vmem:[#allocation2 + $0x88] sm:$0xff]
      %v5168 = vld [vmem:[#allocation2 + $0x90] sm:$0xff]
      %v5169 = vld [vmem:[#allocation2 + $0x98] sm:$0xff]
      %v5170 = vld [vmem:[#allocation2 + $0xa0] sm:$0xff]
      %v5171 = vld [vmem:[#allocation2 + $0xa8] sm:$0xff]
      %v5172 = vld [vmem:[#allocation2 + $0xb0] sm:$0xff]
      %v5173 = vld [vmem:[#allocation2 + $0xb8] sm:$0xff]
      %v5174 = vld [vmem:[#allocation2 + $0xc0] sm:$0xff]
      %v5175 = vld [vmem:[#allocation2 + $0xc8] sm:$0xff]
      %v5176 = vld [vmem:[#allocation2 + $0xd0] sm:$0xff]
      %v5177 = vld [vmem:[#allocation2 + $0xd8] sm:$0xff]
      %v5178 = vld [vmem:[#allocation2 + $0xe0] sm:$0xff]
      %v5179 = vld [vmem:[#allocation2 + $0xe8] sm:$0xff]
      %v5180 = vld [vmem:[#allocation2 + $0xf0] sm:$0xff]
      %v5181 = vld [vmem:[#allocation2 + $0xf8] sm:$0xff]
      %v5182 = vld [vmem:[#allocation2 + $0x100] sm:$0xff]
      %v5183 = vld [vmem:[#allocation2 + $0x108] sm:$0xff]
      %v5184 = vld [vmem:[#allocation2 + $0x110] sm:$0xff]
      %v5185 = vld [vmem:[#allocation2 + $0x118] sm:$0xff]
      %v5186 = vld [vmem:[#allocation2 + $0x120] sm:$0xff]
      %v5187 = vld [vmem:[#allocation2 + $0x128] sm:$0xff]
      %v5188 = vld [vmem:[#allocation2 + $0x130] sm:$0xff]
      %v5189 = vld [vmem:[#allocation2 + $0x138] sm:$0xff]
      %v5190 = vld [vmem:[#allocation2 + $0x140] sm:$0xff]
      %v5191 = vld [vmem:[#allocation2 + $0x148] sm:$0xff]
      %v5192 = vld [vmem:[#allocation2 + $0x150] sm:$0xff]
      %v5193 = vld [vmem:[#allocation2 + $0x158] sm:$0xff]
      %v5194 = vld [vmem:[#allocation2 + $0x160] sm:$0xff]
      %v5195 = vld [vmem:[#allocation2 + $0x168] sm:$0xff]
      %v5196 = vld [vmem:[#allocation2 + $0x170] sm:$0xff]
      %v5197 = vld [vmem:[#allocation2 + $0x178] sm:$0xff]
      %v5198 = vld [vmem:[#allocation2 + $0x180] sm:$0xff]
      %v5199 = vld [vmem:[#allocation2 + $0x188] sm:$0xff]
      %v5200 = vld [vmem:[#allocation2 + $0x190] sm:$0xff]
      %v5201 = vld [vmem:[#allocation2 + $0x198] sm:$0xff]
      %v5202 = vld [vmem:[#allocation2 + $0x1a0] sm:$0xff]
      %v5203 = vld [vmem:[#allocation2 + $0x1a8] sm:$0xff]
      %v5204 = vld [vmem:[#allocation2 + $0x1b0] sm:$0xff]
      %v5205 = vld [vmem:[#allocation2 + $0x1b8] sm:$0xff]
      %v5206 = vld [vmem:[#allocation2 + $0x1c0] sm:$0xff]
      %v5207 = vld [vmem:[#allocation2 + $0x1c8] sm:$0xff]
      %v5208 = vld [vmem:[#allocation2 + $0x1d0] sm:$0xff]
      %v5209 = vld [vmem:[#allocation2 + $0x1d8] sm:$0xff]
      %v5210 = vld [vmem:[#allocation2 + $0x1e0] sm:$0xff]
      %v5211 = vld [vmem:[#allocation2 + $0x1e8] sm:$0xff]
      %v5212 = vld [vmem:[#allocation2 + $0x1f0] sm:$0xff]
      %v5213 = vld [vmem:[#allocation2 + $0x1f8] sm:$0xff]
      %v5214 = vld [vmem:[#allocation2 + $0x200] sm:$0xff]
      %v5215 = vld [vmem:[#allocation2 + $0x208] sm:$0xff]
      %v5216 = vld [vmem:[#allocation2 + $0x210] sm:$0xff]
      %v5217 = vld [vmem:[#allocation2 + $0x218] sm:$0xff]
      %v5218 = vld [vmem:[#allocation2 + $0x220] sm:$0xff]
      %v5219 = vld [vmem:[#allocation2 + $0x228] sm:$0xff]
      %v5220 = vld [vmem:[#allocation2 + $0x230] sm:$0xff]
      %v5221 = vld [vmem:[#allocation2 + $0x238] sm:$0xff]
      %v5222 = vld [vmem:[#allocation2 + $0x240] sm:$0xff]
      %v5223 = vld [vmem:[#allocation2 + $0x248] sm:$0xff]
      %v5224 = vld [vmem:[#allocation2 + $0x250] sm:$0xff]
      %v5225 = vld [vmem:[#allocation2 + $0x258] sm:$0xff]
      %v5226 = vld [vmem:[#allocation2 + $0x260] sm:$0xff]
      %v5227 = vld [vmem:[#allocation2 + $0x268] sm:$0xff]
      %v5228 = vld [vmem:[#allocation2 + $0x270] sm:$0xff]
      %v5229 = vld [vmem:[#allocation2 + $0x278] sm:$0xff]
      %v5230 = vld [vmem:[#allocation2 + $0x280] sm:$0xff]
      %v5231 = vld [vmem:[#allocation2 + $0x288] sm:$0xff]
      %v5232 = vld [vmem:[#allocation2 + $0x290] sm:$0xff]
      %v5233 = vld [vmem:[#allocation2 + $0x298] sm:$0xff]
      %v5234 = vld [vmem:[#allocation2 + $0x2a0] sm:$0xff]
      %v5235 = vld [vmem:[#allocation2 + $0x2a8] sm:$0xff]
      %v5236 = vld [vmem:[#allocation2 + $0x2b0] sm:$0xff]
      %v5237 = vld [vmem:[#allocation2 + $0x2b8] sm:$0xff]
      %v5238 = vld [vmem:[#allocation2 + $0x2c0] sm:$0xff]
      %v5239 = vld [vmem:[#allocation2 + $0x2c8] sm:$0xff]
      %v5240 = vld [vmem:[#allocation2 + $0x2d0] sm:$0xff]
      %v5241 = vld [vmem:[#allocation2 + $0x2d8] sm:$0xff]
      %v5242 = vld [vmem:[#allocation2 + $0x2e0] sm:$0xff]
      %v5243 = vld [vmem:[#allocation2 + $0x2e8] sm:$0xff]
      %v5244 = vld [vmem:[#allocation2 + $0x2f0] sm:$0xff]
      %v5245 = vld [vmem:[#allocation2 + $0x2f8] sm:$0xff]
      %v5246 = vld [vmem:[#allocation2 + $0x300] sm:$0xff]
      %v5247 = vld [vmem:[#allocation2 + $0x308] sm:$0xff]
      %v5248 = vld [vmem:[#allocation2 + $0x310] sm:$0xff]
      %v5249 = vld [vmem:[#allocation2 + $0x318] sm:$0xff]
      %v5250 = vld [vmem:[#allocation2 + $0x320] sm:$0xff]
      %v5251 = vld [vmem:[#allocation2 + $0x328] sm:$0xff]
      %v5252 = vld [vmem:[#allocation2 + $0x330] sm:$0xff]
      %v5253 = vld [vmem:[#allocation2 + $0x338] sm:$0xff]
      %v5254 = vld [vmem:[#allocation2 + $0x340] sm:$0xff]
      %v5255 = vld [vmem:[#allocation2 + $0x348] sm:$0xff]
      %v5256 = vld [vmem:[#allocation2 + $0x350] sm:$0xff]
      %v5257 = vld [vmem:[#allocation2 + $0x358] sm:$0xff]
      %v5258 = vld [vmem:[#allocation2 + $0x360] sm:$0xff]
      %v5259 = vld [vmem:[#allocation2 + $0x368] sm:$0xff]
      %v5260 = vld [vmem:[#allocation2 + $0x370] sm:$0xff]
      %v5261 = vld [vmem:[#allocation2 + $0x378] sm:$0xff]
      %v5262 = vld [vmem:[#allocation2 + $0x380] sm:$0xff]
      %v5263 = vld [vmem:[#allocation2 + $0x388] sm:$0xff]
      %v5264 = vld [vmem:[#allocation2 + $0x390] sm:$0xff]
      %v5265 = vld [vmem:[#allocation2 + $0x398] sm:$0xff]
      %v5266 = vld [vmem:[#allocation2 + $0x3a0] sm:$0xff]
      %v5267 = vld [vmem:[#allocation2 + $0x3a8] sm:$0xff]
      %v5268 = vld [vmem:[#allocation2 + $0x3b0] sm:$0xff]
      %v5269 = vld [vmem:[#allocation2 + $0x3b8] sm:$0xff]
      %v5270 = vld [vmem:[#allocation2 + $0x3c0] sm:$0xff]
      %v5271 = vld [vmem:[#allocation2 + $0x3c8] sm:$0xff]
      %v5272 = vld [vmem:[#allocation2 + $0x3d0] sm:$0xff]
      %v5273 = vld [vmem:[#allocation2 + $0x3d8] sm:$0xff]
      %v5274 = vld [vmem:[#allocation2 + $0x3e0] sm:$0xff]
      %v5275 = vld [vmem:[#allocation2 + $0x3e8] sm:$0xff]
      %v5276 = vld [vmem:[#allocation2 + $0x3f0] sm:$0xff]
      %v5277 = vld [vmem:[#allocation2 + $0x3f8] sm:$0xff]
      %v5278 = vld [vmem:[#allocation2 + $0x400] sm:$0xff]
      %v5279 = vld [vmem:[#allocation2 + $0x408] sm:$0xff]
      %v5280 = vld [vmem:[#allocation2 + $0x410] sm:$0xff]
      %v5281 = vld [vmem:[#allocation2 + $0x418] sm:$0xff]
      %v5282 = vld [vmem:[#allocation2 + $0x420] sm:$0xff]
      %v5283 = vld [vmem:[#allocation2 + $0x428] sm:$0xff]
      %v5284 = vld [vmem:[#allocation2 + $0x430] sm:$0xff]
      %v5285 = vld [vmem:[#allocation2 + $0x438] sm:$0xff]
      %v5286 = vld [vmem:[#allocation2 + $0x440] sm:$0xff]
      %v5287 = vld [vmem:[#allocation2 + $0x448] sm:$0xff]
      %v5288 = vld [vmem:[#allocation2 + $0x450] sm:$0xff]
      %v5289 = vld [vmem:[#allocation2 + $0x458] sm:$0xff]
      %v5290 = vld [vmem:[#allocation2 + $0x460] sm:$0xff]
      %v5291 = vld [vmem:[#allocation2 + $0x468] sm:$0xff]
      %v5292 = vld [vmem:[#allocation2 + $0x470] sm:$0xff]
      %v5293 = vld [vmem:[#allocation2 + $0x478] sm:$0xff]
      %v5294 = vld [vmem:[#allocation2 + $0x480] sm:$0xff]
      %v5295 = vld [vmem:[#allocation2 + $0x488] sm:$0xff]
      %v5296 = vld [vmem:[#allocation2 + $0x490] sm:$0xff]
      %v5297 = vld [vmem:[#allocation2 + $0x498] sm:$0xff]
      %v5298 = vld [vmem:[#allocation2 + $0x4a0] sm:$0xff]
      %v5299 = vld [vmem:[#allocation2 + $0x4a8] sm:$0xff]
      %v5300 = vld [vmem:[#allocation2 + $0x4b0] sm:$0xff]
      %v5301 = vld [vmem:[#allocation2 + $0x4b8] sm:$0xff]
      %v5302 = vld [vmem:[#allocation2 + $0x4c0] sm:$0xff]
      %v5303 = vld [vmem:[%s11] sm:$0xf]
      %5305 = vset.pattern.permute.xlu0 0
      %5306 = vperm.xlu0 %5305, %v5303
      %v5307 = vpop.permute.xlu0 %5306
      %v5312 = vcombine.high %v5147, %v5147
      %v5314 = vunpack.c.l.s4 1983009808
      %v5315 = vunpack.c.0.s8 %v5314
      %v5316 = vlaneseq
      %v5317 = vshrl.u32 %v5316, 7
      %v5318 = vsub.s32 %v5315, %v5317
      %v5319 = vrot.slane %v5147, %v5318
      %v5321 = vunpack.c.l.s4 1983009808
      %v5322 = vunpack.c.0.s8 %v5321
      %v5323 = vlaneseq
      %v5324 = vshrl.u32 %v5323, 7
      %v5325 = vsub.s32 %v5322, %v5324
      %v5326 = vrot.slane %v5312, %v5325
      %v5327 = vcombine.high %v5319, %v5319
      %v5328 = vcombine.high %v5326, %v5326
      %v5329 = vcombine.high %v5148, %v5148
      %v5331 = vunpack.c.l.s4 1983009808
      %v5332 = vunpack.c.0.s8 %v5331
      %v5333 = vlaneseq
      %v5334 = vshrl.u32 %v5333, 7
      %v5335 = vsub.s32 %v5332, %v5334
      %v5336 = vrot.slane %v5148, %v5335
      %v5338 = vunpack.c.l.s4 1983009808
      %v5339 = vunpack.c.0.s8 %v5338
      %v5340 = vlaneseq
      %v5341 = vshrl.u32 %v5340, 7
      %v5342 = vsub.s32 %v5339, %v5341
      %v5343 = vrot.slane %v5329, %v5342
      %v5344 = vcombine.high %v5336, %v5336
      %v5345 = vcombine.high %v5343, %v5343
      %v5347 = vunpack.c.l.s4 1983009808
      %v5348 = vunpack.c.0.s8 %v5347
      %v5349 = vlaneseq
      %v5350 = vshrl.u32 %v5349, 7
      %v5351 = vsub.s32 %v5348, %v5350
      %v5352 = vrot.slane %v5149, %v5351
      %v5353 = vcombine.high %v5352, %v5352
      %v5516 = vunpack.c.l.b16 %v5150
      %v5517 = vunpack.c.h.b16 %v5150
      %v5518 = vunpack.c.l.b16 %v5151
      %v5519 = vunpack.c.h.b16 %v5151
      %v5520 = vunpack.c.l.b16 %v5152
      %v5521 = vunpack.c.h.b16 %v5152
      %v5522 = vunpack.c.l.b16 %v5153
      %v5523 = vunpack.c.h.b16 %v5153
      %v5524 = vunpack.c.l.b16 %v5154
      %v5525 = vunpack.c.h.b16 %v5154
      %v5526 = vunpack.c.l.b16 %v5155
      %v5527 = vunpack.c.h.b16 %v5155
      %v5528 = vunpack.c.l.b16 %v5156
      %v5529 = vunpack.c.h.b16 %v5156
      %v5530 = vunpack.c.l.b16 %v5157
      %v5531 = vunpack.c.h.b16 %v5157
      %v5532 = vunpack.c.l.b16 %v5158
      %v5533 = vunpack.c.h.b16 %v5158
      %v5534 = vunpack.c.l.b16 %v5159
      %v5535 = vunpack.c.h.b16 %v5159
      %v5536 = vunpack.c.l.b16 %v5160
      %v5537 = vunpack.c.h.b16 %v5160
      %v5538 = vunpack.c.l.b16 %v5161
      %v5539 = vunpack.c.h.b16 %v5161
      %v5540 = vunpack.c.l.b16 %v5162
      %v5541 = vunpack.c.h.b16 %v5162
      %v5542 = vunpack.c.l.b16 %v5163
      %v5543 = vunpack.c.h.b16 %v5163
      %v5544 = vunpack.c.l.b16 %v5164
      %v5545 = vunpack.c.h.b16 %v5164
      %v5546 = vunpack.c.l.b16 %v5165
      %v5547 = vunpack.c.h.b16 %v5165
      %v5548 = vunpack.c.l.b16 %v5166
      %v5549 = vunpack.c.h.b16 %v5166
      %v5550 = vunpack.c.l.b16 %v5167
      %v5551 = vunpack.c.h.b16 %v5167
      %v5552 = vunpack.c.l.b16 %v5168
      %v5553 = vunpack.c.h.b16 %v5168
      %v5554 = vunpack.c.l.b16 %v5169
      %v5555 = vunpack.c.h.b16 %v5169
      %v5556 = vunpack.c.l.b16 %v5170
      %v5557 = vunpack.c.h.b16 %v5170
      %v5558 = vunpack.c.l.b16 %v5171
      %v5559 = vunpack.c.h.b16 %v5171
      %v5560 = vunpack.c.l.b16 %v5172
      %v5561 = vunpack.c.h.b16 %v5172
      %v5562 = vunpack.c.l.b16 %v5173
      %v5563 = vunpack.c.h.b16 %v5173
      %v5564 = vunpack.c.l.b16 %v5174
      %v5565 = vunpack.c.h.b16 %v5174
      %v5566 = vunpack.c.l.b16 %v5175
      %v5567 = vunpack.c.h.b16 %v5175
      %v5568 = vunpack.c.l.b16 %v5176
      %v5569 = vunpack.c.h.b16 %v5176
      %v5570 = vunpack.c.l.b16 %v5177
      %v5571 = vunpack.c.h.b16 %v5177
      %v5572 = vunpack.c.l.b16 %v5178
      %v5573 = vunpack.c.h.b16 %v5178
      %v5574 = vunpack.c.l.b16 %v5179
      %v5575 = vunpack.c.h.b16 %v5179
      %v5576 = vunpack.c.l.b16 %v5180
      %v5577 = vunpack.c.h.b16 %v5180
      %v5578 = vunpack.c.l.b16 %v5181
      %v5579 = vunpack.c.h.b16 %v5181
      %v5580 = vunpack.c.l.b16 %v5182
      %v5581 = vunpack.c.h.b16 %v5182
      %v5582 = vunpack.c.l.b16 %v5183
      %v5583 = vunpack.c.h.b16 %v5183
      %v5584 = vunpack.c.l.b16 %v5184
      %v5585 = vunpack.c.h.b16 %v5184
      %v5586 = vunpack.c.l.b16 %v5185
      %v5587 = vunpack.c.h.b16 %v5185
      %v5588 = vunpack.c.l.b16 %v5186
      %v5589 = vunpack.c.h.b16 %v5186
      %v5590 = vunpack.c.l.b16 %v5187
      %v5591 = vunpack.c.h.b16 %v5187
      %v5592 = vunpack.c.l.b16 %v5188
      %v5593 = vunpack.c.h.b16 %v5188
      %v5594 = vunpack.c.l.b16 %v5189
      %v5595 = vunpack.c.h.b16 %v5189
      %v5596 = vunpack.c.l.b16 %v5190
      %v5597 = vunpack.c.h.b16 %v5190
      %v5598 = vunpack.c.l.b16 %v5191
      %v5599 = vunpack.c.h.b16 %v5191
      %v5600 = vunpack.c.l.b16 %v5192
      %v5601 = vunpack.c.h.b16 %v5192
      %v5602 = vunpack.c.l.b16 %v5193
      %v5603 = vunpack.c.h.b16 %v5193
      %v5604 = vunpack.c.l.b16 %v5194
      %v5605 = vunpack.c.h.b16 %v5194
      %v5606 = vunpack.c.l.b16 %v5195
      %v5607 = vunpack.c.h.b16 %v5195
      %v5608 = vunpack.c.l.b16 %v5196
      %v5609 = vunpack.c.h.b16 %v5196
      %v5610 = vunpack.c.l.b16 %v5197
      %v5611 = vunpack.c.h.b16 %v5197
      %v5612 = vunpack.c.l.b16 %v5198
      %v5613 = vunpack.c.h.b16 %v5198
      %v5614 = vunpack.c.l.b16 %v5199
      %v5615 = vunpack.c.h.b16 %v5199
      %v5616 = vunpack.c.l.b16 %v5200
      %v5617 = vunpack.c.h.b16 %v5200
      %v5618 = vunpack.c.l.b16 %v5201
      %v5619 = vunpack.c.h.b16 %v5201
      %v5620 = vunpack.c.l.b16 %v5202
      %v5621 = vunpack.c.h.b16 %v5202
      %v5622 = vunpack.c.l.b16 %v5203
      %v5623 = vunpack.c.h.b16 %v5203
      %v5624 = vunpack.c.l.b16 %v5204
      %v5625 = vunpack.c.h.b16 %v5204
      %v5626 = vunpack.c.l.b16 %v5205
      %v5627 = vunpack.c.h.b16 %v5205
      %v5628 = vunpack.c.l.b16 %v5206
      %v5629 = vunpack.c.h.b16 %v5206
      %v5630 = vunpack.c.l.b16 %v5207
      %v5631 = vunpack.c.h.b16 %v5207
      %v5632 = vunpack.c.l.b16 %v5208
      %v5633 = vunpack.c.h.b16 %v5208
      %v5634 = vunpack.c.l.b16 %v5209
      %v5635 = vunpack.c.h.b16 %v5209
      %v5636 = vunpack.c.l.b16 %v5210
      %v5637 = vunpack.c.h.b16 %v5210
      %v5638 = vunpack.c.l.b16 %v5211
      %v5639 = vunpack.c.h.b16 %v5211
      %v5640 = vunpack.c.l.b16 %v5212
      %v5641 = vunpack.c.h.b16 %v5212
      %v5642 = vunpack.c.l.b16 %v5213
      %v5643 = vunpack.c.h.b16 %v5213
      %v5644 = vunpack.c.l.b16 %v5214
      %v5645 = vunpack.c.h.b16 %v5214
      %v5646 = vunpack.c.l.b16 %v5215
      %v5647 = vunpack.c.h.b16 %v5215
      %v5648 = vunpack.c.l.b16 %v5216
      %v5649 = vunpack.c.h.b16 %v5216
      %v5650 = vunpack.c.l.b16 %v5217
      %v5651 = vunpack.c.h.b16 %v5217
      %v5652 = vunpack.c.l.b16 %v5218
      %v5653 = vunpack.c.h.b16 %v5218
      %v5654 = vunpack.c.l.b16 %v5219
      %v5655 = vunpack.c.h.b16 %v5219
      %v5656 = vunpack.c.l.b16 %v5220
      %v5657 = vunpack.c.h.b16 %v5220
      %v5658 = vunpack.c.l.b16 %v5221
      %v5659 = vunpack.c.h.b16 %v5221
      %v5660 = vunpack.c.l.b16 %v5222
      %v5661 = vunpack.c.h.b16 %v5222
      %v5662 = vunpack.c.l.b16 %v5223
      %v5663 = vunpack.c.h.b16 %v5223
      %v5664 = vunpack.c.l.b16 %v5224
      %v5665 = vunpack.c.h.b16 %v5224
      %v5666 = vunpack.c.l.b16 %v5225
      %v5667 = vunpack.c.h.b16 %v5225
      %v5668 = vunpack.c.l.b16 %v5226
      %v5669 = vunpack.c.h.b16 %v5226
      %v5670 = vunpack.c.l.b16 %v5227
      %v5671 = vunpack.c.h.b16 %v5227
      %v5672 = vunpack.c.l.b16 %v5228
      %v5673 = vunpack.c.h.b16 %v5228
      %v5674 = vunpack.c.l.b16 %v5229
      %v5675 = vunpack.c.h.b16 %v5229
      %v5676 = vunpack.c.l.b16 %v5230
      %v5677 = vunpack.c.h.b16 %v5230
      %v5678 = vunpack.c.l.b16 %v5231
      %v5679 = vunpack.c.h.b16 %v5231
      %v5680 = vunpack.c.l.b16 %v5232
      %v5681 = vunpack.c.h.b16 %v5232
      %v5682 = vunpack.c.l.b16 %v5233
      %v5683 = vunpack.c.h.b16 %v5233
      %v5684 = vunpack.c.l.b16 %v5234
      %v5685 = vunpack.c.h.b16 %v5234
      %v5686 = vunpack.c.l.b16 %v5235
      %v5687 = vunpack.c.h.b16 %v5235
      %v5688 = vunpack.c.l.b16 %v5236
      %v5689 = vunpack.c.h.b16 %v5236
      %v5690 = vunpack.c.l.b16 %v5237
      %v5691 = vunpack.c.h.b16 %v5237
      %v5692 = vunpack.c.l.b16 %v5238
      %v5693 = vunpack.c.h.b16 %v5238
      %v5694 = vunpack.c.l.b16 %v5239
      %v5695 = vunpack.c.h.b16 %v5239
      %v5696 = vunpack.c.l.b16 %v5240
      %v5697 = vunpack.c.h.b16 %v5240
      %v5698 = vunpack.c.l.b16 %v5241
      %v5699 = vunpack.c.h.b16 %v5241
      %v5700 = vunpack.c.l.b16 %v5242
      %v5701 = vunpack.c.h.b16 %v5242
      %v5702 = vunpack.c.l.b16 %v5243
      %v5703 = vunpack.c.h.b16 %v5243
      %v5704 = vunpack.c.l.b16 %v5244
      %v5705 = vunpack.c.h.b16 %v5244
      %v5706 = vunpack.c.l.b16 %v5245
      %v5707 = vunpack.c.h.b16 %v5245
      %v5708 = vunpack.c.l.b16 %v5246
      %v5709 = vunpack.c.h.b16 %v5246
      %v5710 = vunpack.c.l.b16 %v5247
      %v5711 = vunpack.c.h.b16 %v5247
      %v5712 = vunpack.c.l.b16 %v5248
      %v5713 = vunpack.c.h.b16 %v5248
      %v5714 = vunpack.c.l.b16 %v5249
      %v5715 = vunpack.c.h.b16 %v5249
      %v5716 = vunpack.c.l.b16 %v5250
      %v5717 = vunpack.c.h.b16 %v5250
      %v5718 = vunpack.c.l.b16 %v5251
      %v5719 = vunpack.c.h.b16 %v5251
      %v5720 = vunpack.c.l.b16 %v5252
      %v5721 = vunpack.c.h.b16 %v5252
      %v5722 = vunpack.c.l.b16 %v5253
      %v5723 = vunpack.c.h.b16 %v5253
      %v5724 = vunpack.c.l.b16 %v5254
      %v5725 = vunpack.c.h.b16 %v5254
      %v5726 = vunpack.c.l.b16 %v5255
      %v5727 = vunpack.c.h.b16 %v5255
      %v5728 = vunpack.c.l.b16 %v5256
      %v5729 = vunpack.c.h.b16 %v5256
      %v5730 = vunpack.c.l.b16 %v5257
      %v5731 = vunpack.c.h.b16 %v5257
      %v5732 = vunpack.c.l.b16 %v5258
      %v5733 = vunpack.c.h.b16 %v5258
      %v5734 = vunpack.c.l.b16 %v5259
      %v5735 = vunpack.c.h.b16 %v5259
      %v5736 = vunpack.c.l.b16 %v5260
      %v5737 = vunpack.c.h.b16 %v5260
      %v5738 = vunpack.c.l.b16 %v5261
      %v5739 = vunpack.c.h.b16 %v5261
      %v5740 = vunpack.c.l.b16 %v5262
      %v5741 = vunpack.c.h.b16 %v5262
      %v5742 = vunpack.c.l.b16 %v5263
      %v5743 = vunpack.c.h.b16 %v5263
      %v5744 = vunpack.c.l.b16 %v5264
      %v5745 = vunpack.c.h.b16 %v5264
      %v5746 = vunpack.c.l.b16 %v5265
      %v5747 = vunpack.c.h.b16 %v5265
      %v5748 = vunpack.c.l.b16 %v5266
      %v5749 = vunpack.c.h.b16 %v5266
      %v5750 = vunpack.c.l.b16 %v5267
      %v5751 = vunpack.c.h.b16 %v5267
      %v5752 = vunpack.c.l.b16 %v5268
      %v5753 = vunpack.c.h.b16 %v5268
      %v5754 = vunpack.c.l.b16 %v5269
      %v5755 = vunpack.c.h.b16 %v5269
      %v5756 = vunpack.c.l.b16 %v5270
      %v5757 = vunpack.c.h.b16 %v5270
      %v5758 = vunpack.c.l.b16 %v5271
      %v5759 = vunpack.c.h.b16 %v5271
      %v5760 = vunpack.c.l.b16 %v5272
      %v5761 = vunpack.c.h.b16 %v5272
      %v5762 = vunpack.c.l.b16 %v5273
      %v5763 = vunpack.c.h.b16 %v5273
      %v5764 = vunpack.c.l.b16 %v5274
      %v5765 = vunpack.c.h.b16 %v5274
      %v5766 = vunpack.c.l.b16 %v5275
      %v5767 = vunpack.c.h.b16 %v5275
      %v5768 = vunpack.c.l.b16 %v5276
      %v5769 = vunpack.c.h.b16 %v5276
      %v5770 = vunpack.c.l.b16 %v5277
      %v5771 = vunpack.c.h.b16 %v5277
      %v5772 = vunpack.c.l.b16 %v5278
      %v5773 = vunpack.c.h.b16 %v5278
      %v5774 = vunpack.c.l.b16 %v5279
      %v5775 = vunpack.c.h.b16 %v5279
      %v5776 = vunpack.c.l.b16 %v5280
      %v5777 = vunpack.c.h.b16 %v5280
      %v5778 = vunpack.c.l.b16 %v5281
      %v5779 = vunpack.c.h.b16 %v5281
      %v5780 = vunpack.c.l.b16 %v5282
      %v5781 = vunpack.c.h.b16 %v5282
      %v5782 = vunpack.c.l.b16 %v5283
      %v5783 = vunpack.c.h.b16 %v5283
      %v5784 = vunpack.c.l.b16 %v5284
      %v5785 = vunpack.c.h.b16 %v5284
      %v5786 = vunpack.c.l.b16 %v5285
      %v5787 = vunpack.c.h.b16 %v5285
      %v5788 = vunpack.c.l.b16 %v5286
      %v5789 = vunpack.c.h.b16 %v5286
      %v5790 = vunpack.c.l.b16 %v5287
      %v5791 = vunpack.c.h.b16 %v5287
      %v5792 = vunpack.c.l.b16 %v5288
      %v5793 = vunpack.c.h.b16 %v5288
      %v5794 = vunpack.c.l.b16 %v5289
      %v5795 = vunpack.c.h.b16 %v5289
      %v5796 = vunpack.c.l.b16 %v5290
      %v5797 = vunpack.c.h.b16 %v5290
      %v5798 = vunpack.c.l.b16 %v5291
      %v5799 = vunpack.c.h.b16 %v5291
      %v5800 = vunpack.c.l.b16 %v5292
      %v5801 = vunpack.c.h.b16 %v5292
      %v5802 = vunpack.c.l.b16 %v5293
      %v5803 = vunpack.c.h.b16 %v5293
      %v5804 = vunpack.c.l.b16 %v5294
      %v5805 = vunpack.c.h.b16 %v5294
      %v5806 = vunpack.c.l.b16 %v5295
      %v5807 = vunpack.c.h.b16 %v5295
      %v5808 = vunpack.c.l.b16 %v5296
      %v5809 = vunpack.c.h.b16 %v5296
      %v5810 = vunpack.c.l.b16 %v5297
      %v5811 = vunpack.c.h.b16 %v5297
      %v5812 = vunpack.c.l.b16 %v5298
      %v5813 = vunpack.c.h.b16 %v5298
      %v5814 = vunpack.c.l.b16 %v5299
      %v5815 = vunpack.c.h.b16 %v5299
      %v5816 = vunpack.c.l.b16 %v5300
      %v5817 = vunpack.c.h.b16 %v5300
      %v5818 = vunpack.c.l.b16 %v5301
      %v5819 = vunpack.c.h.b16 %v5301
      %v5820 = vunpack.c.l.b16 %v5302
      %v5821 = vunpack.c.h.b16 %v5302
      %v5822 = vpack.c.b16 %v5518, %v5516
      %v5823 = vpack.c.b16 %v5519, %v5517
      %v5824 = vpack.c.b16 %v5522, %v5520
      %v5825 = vpack.c.b16 %v5523, %v5521
      %v5826 = vpack.c.b16 %v5526, %v5524
      %v5827 = vpack.c.b16 %v5527, %v5525
      %v5828 = vpack.c.b16 %v5530, %v5528
      %v5829 = vpack.c.b16 %v5531, %v5529
      %v5830 = vpack.c.b16 %v5534, %v5532
      %v5831 = vpack.c.b16 %v5535, %v5533
      %v5832 = vpack.c.b16 %v5538, %v5536
      %v5833 = vpack.c.b16 %v5539, %v5537
      %v5834 = vpack.c.b16 %v5542, %v5540
      %v5835 = vpack.c.b16 %v5543, %v5541
      %v5836 = vpack.c.b16 %v5546, %v5544
      %v5837 = vpack.c.b16 %v5547, %v5545
      %v5838 = vpack.c.b16 %v5550, %v5548
      %v5839 = vpack.c.b16 %v5551, %v5549
      %v5840 = vpack.c.b16 %v5554, %v5552
      %v5841 = vpack.c.b16 %v5555, %v5553
      %v5842 = vpack.c.b16 %v5558, %v5556
      %v5843 = vpack.c.b16 %v5559, %v5557
      %v5844 = vpack.c.b16 %v5562, %v5560
      %v5845 = vpack.c.b16 %v5563, %v5561
      %v5846 = vpack.c.b16 %v5566, %v5564
      %v5847 = vpack.c.b16 %v5567, %v5565
      %v5848 = vpack.c.b16 %v5570, %v5568
      %v5849 = vpack.c.b16 %v5571, %v5569
      %v5850 = vpack.c.b16 %v5574, %v5572
      %v5851 = vpack.c.b16 %v5575, %v5573
      %v5852 = vpack.c.b16 %v5578, %v5576
      %v5853 = vpack.c.b16 %v5579, %v5577
      %v5854 = vpack.c.b16 %v5582, %v5580
      %v5855 = vpack.c.b16 %v5583, %v5581
      %v5856 = vpack.c.b16 %v5586, %v5584
      %v5857 = vpack.c.b16 %v5587, %v5585
      %v5858 = vpack.c.b16 %v5590, %v5588
      %v5859 = vpack.c.b16 %v5591, %v5589
      %v5860 = vpack.c.b16 %v5594, %v5592
      %v5861 = vpack.c.b16 %v5595, %v5593
      %v5862 = vpack.c.b16 %v5598, %v5596
      %v5863 = vpack.c.b16 %v5599, %v5597
      %v5864 = vpack.c.b16 %v5602, %v5600
      %v5865 = vpack.c.b16 %v5603, %v5601
      %v5866 = vpack.c.b16 %v5606, %v5604
      %v5867 = vpack.c.b16 %v5607, %v5605
      %v5868 = vpack.c.b16 %v5610, %v5608
      %v5869 = vpack.c.b16 %v5611, %v5609
      %v5870 = vpack.c.b16 %v5614, %v5612
      %v5871 = vpack.c.b16 %v5615, %v5613
      %v5872 = vpack.c.b16 %v5618, %v5616
      %v5873 = vpack.c.b16 %v5619, %v5617
      %v5874 = vpack.c.b16 %v5622, %v5620
      %v5875 = vpack.c.b16 %v5623, %v5621
      %v5876 = vpack.c.b16 %v5626, %v5624
      %v5877 = vpack.c.b16 %v5627, %v5625
      %v5878 = vpack.c.b16 %v5630, %v5628
      %v5879 = vpack.c.b16 %v5631, %v5629
      %v5880 = vpack.c.b16 %v5634, %v5632
      %v5881 = vpack.c.b16 %v5635, %v5633
      %v5882 = vpack.c.b16 %v5638, %v5636
      %v5883 = vpack.c.b16 %v5639, %v5637
      %v5884 = vpack.c.b16 %v5642, %v5640
      %v5885 = vpack.c.b16 %v5643, %v5641
      %v5886 = vpack.c.b16 %v5646, %v5644
      %v5887 = vpack.c.b16 %v5647, %v5645
      %v5888 = vpack.c.b16 %v5650, %v5648
      %v5889 = vpack.c.b16 %v5651, %v5649
      %v5890 = vpack.c.b16 %v5654, %v5652
      %v5891 = vpack.c.b16 %v5655, %v5653
      %v5892 = vpack.c.b16 %v5658, %v5656
      %v5893 = vpack.c.b16 %v5659, %v5657
      %v5894 = vpack.c.b16 %v5662, %v5660
      %v5895 = vpack.c.b16 %v5663, %v5661
      %v5896 = vpack.c.b16 %v5666, %v5664
      %v5897 = vpack.c.b16 %v5667, %v5665
      %v5898 = vpack.c.b16 %v5670, %v5668
      %v5899 = vpack.c.b16 %v5671, %v5669
      %v5900 = vpack.c.b16 %v5674, %v5672
      %v5901 = vpack.c.b16 %v5675, %v5673
      %v5902 = vpack.c.b16 %v5678, %v5676
      %v5903 = vpack.c.b16 %v5679, %v5677
      %v5904 = vpack.c.b16 %v5682, %v5680
      %v5905 = vpack.c.b16 %v5683, %v5681
      %v5906 = vpack.c.b16 %v5686, %v5684
      %v5907 = vpack.c.b16 %v5687, %v5685
      %v5908 = vpack.c.b16 %v5690, %v5688
      %v5909 = vpack.c.b16 %v5691, %v5689
      %v5910 = vpack.c.b16 %v5694, %v5692
      %v5911 = vpack.c.b16 %v5695, %v5693
      %v5912 = vpack.c.b16 %v5698, %v5696
      %v5913 = vpack.c.b16 %v5699, %v5697
      %v5914 = vpack.c.b16 %v5702, %v5700
      %v5915 = vpack.c.b16 %v5703, %v5701
      %v5916 = vpack.c.b16 %v5706, %v5704
      %v5917 = vpack.c.b16 %v5707, %v5705
      %v5918 = vpack.c.b16 %v5710, %v5708
      %v5919 = vpack.c.b16 %v5711, %v5709
      %v5920 = vpack.c.b16 %v5714, %v5712
      %v5921 = vpack.c.b16 %v5715, %v5713
      %v5922 = vpack.c.b16 %v5718, %v5716
      %v5923 = vpack.c.b16 %v5719, %v5717
      %v5924 = vpack.c.b16 %v5722, %v5720
      %v5925 = vpack.c.b16 %v5723, %v5721
      %v5926 = vpack.c.b16 %v5726, %v5724
      %v5927 = vpack.c.b16 %v5727, %v5725
      %v5928 = vpack.c.b16 %v5730, %v5728
      %v5929 = vpack.c.b16 %v5731, %v5729
      %v5930 = vpack.c.b16 %v5734, %v5732
      %v5931 = vpack.c.b16 %v5735, %v5733
      %v5932 = vpack.c.b16 %v5738, %v5736
      %v5933 = vpack.c.b16 %v5739, %v5737
      %v5934 = vpack.c.b16 %v5742, %v5740
      %v5935 = vpack.c.b16 %v5743, %v5741
      %v5936 = vpack.c.b16 %v5746, %v5744
      %v5937 = vpack.c.b16 %v5747, %v5745
      %v5938 = vpack.c.b16 %v5750, %v5748
      %v5939 = vpack.c.b16 %v5751, %v5749
      %v5940 = vpack.c.b16 %v5754, %v5752
      %v5941 = vpack.c.b16 %v5755, %v5753
      %v5942 = vpack.c.b16 %v5758, %v5756
      %v5943 = vpack.c.b16 %v5759, %v5757
      %v5944 = vpack.c.b16 %v5762, %v5760
      %v5945 = vpack.c.b16 %v5763, %v5761
      %v5946 = vpack.c.b16 %v5766, %v5764
      %v5947 = vpack.c.b16 %v5767, %v5765
      %v5948 = vpack.c.b16 %v5770, %v5768
      %v5949 = vpack.c.b16 %v5771, %v5769
      %v5950 = vpack.c.b16 %v5774, %v5772
      %v5951 = vpack.c.b16 %v5775, %v5773
      %v5952 = vpack.c.b16 %v5778, %v5776
      %v5953 = vpack.c.b16 %v5779, %v5777
      %v5954 = vpack.c.b16 %v5782, %v5780
      %v5955 = vpack.c.b16 %v5783, %v5781
      %v5956 = vpack.c.b16 %v5786, %v5784
      %v5957 = vpack.c.b16 %v5787, %v5785
      %v5958 = vpack.c.b16 %v5790, %v5788
      %v5959 = vpack.c.b16 %v5791, %v5789
      %v5960 = vpack.c.b16 %v5794, %v5792
      %v5961 = vpack.c.b16 %v5795, %v5793
      %v5962 = vpack.c.b16 %v5798, %v5796
      %v5963 = vpack.c.b16 %v5799, %v5797
      %v5964 = vpack.c.b16 %v5802, %v5800
      %v5965 = vpack.c.b16 %v5803, %v5801
      %v5966 = vpack.c.b16 %v5806, %v5804
      %v5967 = vpack.c.b16 %v5807, %v5805
      %v5968 = vpack.c.b16 %v5810, %v5808
      %v5969 = vpack.c.b16 %v5811, %v5809
      %v5970 = vpack.c.b16 %v5814, %v5812
      %v5971 = vpack.c.b16 %v5815, %v5813
      %v5972 = vpack.c.b16 %v5818, %v5816
      %v5973 = vpack.c.b16 %v5819, %v5817
      %v5974 = vpack.c.b16 %v5820, %v5820
      %v5975 = vpack.c.b16 %v5821, %v5821
      %v6129 = vsel %vm737, %v5353, 0
      %v6132 = vsel %vm423, %v5974, 0
      %v6135 = vsel %vm423, %v5975, 0
      %6137 = vmatprep.subr.bf16.mxu0 %v5823
      %6138 = vmatpush1.bf16.msra.mxu0 %v5822
      %6139 = vmatprep.subr.bf16.mxu0 %v5825
      %6140 = vmatpush1.bf16.msra.mxu0 %v5824
      %6141 = vmatprep.subr.bf16.mxu0 %v5827
      %6142 = vmatpush1.bf16.msra.mxu0 %v5826
      %6143 = vmatprep.subr.bf16.mxu0 %v5829
      %6144 = vmatpush1.bf16.msra.mxu0 %v5828
      %6145 = vmatprep.subr.bf16.mxu0 %v5831
      %6146 = vmatpush1.bf16.msra.mxu0 %v5830
      %6147 = vmatprep.subr.bf16.mxu0 %v5833
      %6148 = vmatpush1.bf16.msra.mxu0 %v5832
      %6149 = vmatprep.subr.bf16.mxu0 %v5835
      %6150 = vmatpush1.bf16.msra.mxu0 %v5834
      %6151 = vmatprep.subr.bf16.mxu0 %v5837
      %6152 = vmatpush1.bf16.msra.mxu0 %v5836
      %6153 = vmatprep.subr.bf16.mxu0 %v5839
      %6154 = vmatpush1.bf16.msra.mxu0 %v5838
      %6155 = vmatprep.subr.bf16.mxu0 %v5841
      %6156 = vmatpush1.bf16.msra.mxu0 %v5840
      %6157 = vmatprep.subr.bf16.mxu0 %v5843
      %6158 = vmatpush1.bf16.msra.mxu0 %v5842
      %6159 = vmatprep.subr.bf16.mxu0 %v5845
      %6160 = vmatpush1.bf16.msra.mxu0 %v5844
      %6161 = vmatprep.subr.bf16.mxu0 %v5847
      %6162 = vmatpush1.bf16.msra.mxu0 %v5846
      %6163 = vmatprep.subr.bf16.mxu0 %v5849
      %6164 = vmatpush1.bf16.msra.mxu0 %v5848
      %6165 = vmatprep.subr.bf16.mxu0 %v5851
      %6166 = vmatpush1.bf16.msra.mxu0 %v5850
      %6167 = vmatprep.subr.bf16.mxu0 %v5853
      %6168 = vmatpush1.bf16.msra.mxu0 %v5852
      %6169 = vmatprep.mubr.bf16.mxu0 %v5327
      %6170 = vmatmul.mubr.bf16.gmra.mrb[0].mxu0 %v5319
      %v6171 = vpop.f32.mrb[0].mxu0
      %v6172 = vadd.f32 %v5307, %v6171
      %v6173 = vpop.f32.mrb[0].mxu0
      %v6174 = vadd.f32 %v5307, %v6173
      %v6175 = vpop.f32.mrb[0].mxu0
      %v6176 = vpop.f32.mrb[0].mxu0
      %6177 = vdwg.mxu0
      %6178 = vmatprep.subr.bf16.mxu0 %v5855
      %6179 = vmatpush1.bf16.msra.mxu0 %v5854
      %6180 = vmatprep.subr.bf16.mxu0 %v5857
      %6181 = vmatpush1.bf16.msra.mxu0 %v5856
      %6182 = vmatprep.subr.bf16.mxu0 %v5859
      %6183 = vmatpush1.bf16.msra.mxu0 %v5858
      %6184 = vmatprep.subr.bf16.mxu0 %v5861
      %6185 = vmatpush1.bf16.msra.mxu0 %v5860
      %6186 = vmatprep.subr.bf16.mxu0 %v5863
      %6187 = vmatpush1.bf16.msra.mxu0 %v5862
      %6188 = vmatprep.subr.bf16.mxu0 %v5865
      %6189 = vmatpush1.bf16.msra.mxu0 %v5864
      %6190 = vmatprep.subr.bf16.mxu0 %v5867
      %6191 = vmatpush1.bf16.msra.mxu0 %v5866
      %6192 = vmatprep.subr.bf16.mxu0 %v5869
      %6193 = vmatpush1.bf16.msra.mxu0 %v5868
      %6194 = vmatprep.subr.bf16.mxu0 %v5871
      %6195 = vmatpush1.bf16.msra.mxu0 %v5870
      %6196 = vmatprep.subr.bf16.mxu0 %v5873
      %6197 = vmatpush1.bf16.msra.mxu0 %v5872
      %6198 = vmatprep.subr.bf16.mxu0 %v5875
      %6199 = vmatpush1.bf16.msra.mxu0 %v5874
      %6200 = vmatprep.subr.bf16.mxu0 %v5877
      %6201 = vmatpush1.bf16.msra.mxu0 %v5876
      %6202 = vmatprep.subr.bf16.mxu0 %v5879
      %6203 = vmatpush1.bf16.msra.mxu0 %v5878
      %6204 = vmatprep.subr.bf16.mxu0 %v5881
      %6205 = vmatpush1.bf16.msra.mxu0 %v5880
      %6206 = vmatprep.subr.bf16.mxu0 %v5883
      %6207 = vmatpush1.bf16.msra.mxu0 %v5882
      %6208 = vmatprep.subr.bf16.mxu0 %v5885
      %6209 = vmatpush1.bf16.msra.mxu0 %v5884
      %6210 = vmatprep.mubr.bf16.mxu0 %v5328
      %6211 = vmatmul.mubr.bf16.gmra.mrb[0].mxu0 %v5326
      %v6212 = vpop.f32.mrb[0].mxu0
      %v6213 = vadd.f32 %v6172, %v6212
      %v6214 = vpop.f32.mrb[0].mxu0
      %v6215 = vadd.f32 %v6174, %v6214
      %v6216 = vpop.f32.mrb[0].mxu0
      %v6217 = vpop.f32.mrb[0].mxu0
      %6218 = vdwg.mxu0
      %6219 = vmatprep.subr.bf16.mxu0 %v5887
      %6220 = vmatpush1.bf16.msra.mxu0 %v5886
      %6221 = vmatprep.subr.bf16.mxu0 %v5889
      %6222 = vmatpush1.bf16.msra.mxu0 %v5888
      %6223 = vmatprep.subr.bf16.mxu0 %v5891
      %6224 = vmatpush1.bf16.msra.mxu0 %v5890
      %6225 = vmatprep.subr.bf16.mxu0 %v5893
      %6226 = vmatpush1.bf16.msra.mxu0 %v5892
      %6227 = vmatprep.subr.bf16.mxu0 %v5895
      %6228 = vmatpush1.bf16.msra.mxu0 %v5894
      %6229 = vmatprep.subr.bf16.mxu0 %v5897
      %6230 = vmatpush1.bf16.msra.mxu0 %v5896
      %6231 = vmatprep.subr.bf16.mxu0 %v5899
      %6232 = vmatpush1.bf16.msra.mxu0 %v5898
      %6233 = vmatprep.subr.bf16.mxu0 %v5901
      %6234 = vmatpush1.bf16.msra.mxu0 %v5900
      %6235 = vmatprep.subr.bf16.mxu0 %v5903
      %6236 = vmatpush1.bf16.msra.mxu0 %v5902
      %6237 = vmatprep.subr.bf16.mxu0 %v5905
      %6238 = vmatpush1.bf16.msra.mxu0 %v5904
      %6239 = vmatprep.subr.bf16.mxu0 %v5907
      %6240 = vmatpush1.bf16.msra.mxu0 %v5906
      %6241 = vmatprep.subr.bf16.mxu0 %v5909
      %6242 = vmatpush1.bf16.msra.mxu0 %v5908
      %6243 = vmatprep.subr.bf16.mxu0 %v5911
      %6244 = vmatpush1.bf16.msra.mxu0 %v5910
      %6245 = vmatprep.subr.bf16.mxu0 %v5913
      %6246 = vmatpush1.bf16.msra.mxu0 %v5912
      %6247 = vmatprep.subr.bf16.mxu0 %v5915
      %6248 = vmatpush1.bf16.msra.mxu0 %v5914
      %6249 = vmatprep.subr.bf16.mxu0 %v5917
      %6250 = vmatpush1.bf16.msra.mxu0 %v5916
      %6251 = vmatprep.mubr.bf16.mxu0 %v5344
      %6252 = vmatmul.mubr.bf16.gmra.mrb[0].mxu0 %v5336
      %v6253 = vpop.f32.mrb[0].mxu0
      %v6254 = vadd.f32 %v6213, %v6253
      %v6255 = vpop.f32.mrb[0].mxu0
      %v6256 = vadd.f32 %v6215, %v6255
      %v6257 = vpop.f32.mrb[0].mxu0
      %v6258 = vpop.f32.mrb[0].mxu0
      %6259 = vdwg.mxu0
      %6260 = vmatprep.subr.bf16.mxu0 %v5919
      %6261 = vmatpush1.bf16.msra.mxu0 %v5918
      %6262 = vmatprep.subr.bf16.mxu0 %v5921
      %6263 = vmatpush1.bf16.msra.mxu0 %v5920
      %6264 = vmatprep.subr.bf16.mxu0 %v5923
      %6265 = vmatpush1.bf16.msra.mxu0 %v5922
      %6266 = vmatprep.subr.bf16.mxu0 %v5925
      %6267 = vmatpush1.bf16.msra.mxu0 %v5924
      %6268 = vmatprep.subr.bf16.mxu0 %v5927
      %6269 = vmatpush1.bf16.msra.mxu0 %v5926
      %6270 = vmatprep.subr.bf16.mxu0 %v5929
      %6271 = vmatpush1.bf16.msra.mxu0 %v5928
      %6272 = vmatprep.subr.bf16.mxu0 %v5931
      %6273 = vmatpush1.bf16.msra.mxu0 %v5930
      %6274 = vmatprep.subr.bf16.mxu0 %v5933
      %6275 = vmatpush1.bf16.msra.mxu0 %v5932
      %6276 = vmatprep.subr.bf16.mxu0 %v5935
      %6277 = vmatpush1.bf16.msra.mxu0 %v5934
      %6278 = vmatprep.subr.bf16.mxu0 %v5937
      %6279 = vmatpush1.bf16.msra.mxu0 %v5936
      %6280 = vmatprep.subr.bf16.mxu0 %v5939
      %6281 = vmatpush1.bf16.msra.mxu0 %v5938
      %6282 = vmatprep.subr.bf16.mxu0 %v5941
      %6283 = vmatpush1.bf16.msra.mxu0 %v5940
      %6284 = vmatprep.subr.bf16.mxu0 %v5943
      %6285 = vmatpush1.bf16.msra.mxu0 %v5942
      %6286 = vmatprep.subr.bf16.mxu0 %v5945
      %6287 = vmatpush1.bf16.msra.mxu0 %v5944
      %6288 = vmatprep.subr.bf16.mxu0 %v5947
      %6289 = vmatpush1.bf16.msra.mxu0 %v5946
      %6290 = vmatprep.subr.bf16.mxu0 %v5949
      %6291 = vmatpush1.bf16.msra.mxu0 %v5948
      %6292 = vmatprep.mubr.bf16.mxu0 %v5345
      %6293 = vmatmul.mubr.bf16.gmra.mrb[0].mxu0 %v5343
      %v6294 = vpop.f32.mrb[0].mxu0
      %v6295 = vadd.f32 %v6254, %v6294
      %v6296 = vpop.f32.mrb[0].mxu0
      %v6297 = vadd.f32 %v6256, %v6296
      %v6298 = vpop.f32.mrb[0].mxu0
      %v6299 = vpop.f32.mrb[0].mxu0
      %6300 = vdwg.mxu0
      %6301 = vmatprep.subr.bf16.mxu0 %v5951
      %6302 = vmatpush1.bf16.msra.mxu0 %v5950
      %6303 = vmatprep.subr.bf16.mxu0 %v5953
      %6304 = vmatpush1.bf16.msra.mxu0 %v5952
      %6305 = vmatprep.subr.bf16.mxu0 %v5955
      %6306 = vmatpush1.bf16.msra.mxu0 %v5954
      %6307 = vmatprep.subr.bf16.mxu0 %v5957
      %6308 = vmatpush1.bf16.msra.mxu0 %v5956
      %6309 = vmatprep.subr.bf16.mxu0 %v5959
      %6310 = vmatpush1.bf16.msra.mxu0 %v5958
      %6311 = vmatprep.subr.bf16.mxu0 %v5961
      %6312 = vmatpush1.bf16.msra.mxu0 %v5960
      %6313 = vmatprep.subr.bf16.mxu0 %v5963
      %6314 = vmatpush1.bf16.msra.mxu0 %v5962
      %6315 = vmatprep.subr.bf16.mxu0 %v5965
      %6316 = vmatpush1.bf16.msra.mxu0 %v5964
      %6317 = vmatprep.subr.bf16.mxu0 %v5967
      %6318 = vmatpush1.bf16.msra.mxu0 %v5966
      %6319 = vmatprep.subr.bf16.mxu0 %v5969
      %6320 = vmatpush1.bf16.msra.mxu0 %v5968
      %6321 = vmatprep.subr.bf16.mxu0 %v5971
      %6322 = vmatpush1.bf16.msra.mxu0 %v5970
      %6323 = vmatprep.subr.bf16.mxu0 %v5973
      %6324 = vmatpush1.bf16.msra.mxu0 %v5972
      %6325 = vmatprep.subr.bf16.mxu0 %v6135
      %6326 = vmatpush1.bf16.msra.mxu0 %v6132
      %6327 = vmatprep.subr.bf16.mxu0 0
      %6328 = vmatpush1.bf16.msra.mxu0 0
      %6329 = vmatprep.subr.bf16.mxu0 0
      %6330 = vmatpush1.bf16.msra.mxu0 0
      %6331 = vmatprep.subr.bf16.mxu0 0
      %6332 = vmatpush1.bf16.msra.mxu0 0
      %6333 = vmatprep.mubr.bf16.mxu0 %v6129
      %6334 = vmatmul.mubr.bf16.gmra.mrb[0].mxu0 %v5352
      %v6335 = vpop.f32.mrb[0].mxu0
      %v6336 = vadd.f32 %v6295, %v6335
      %v6337 = vpop.f32.mrb[0].mxu0
      %v6338 = vadd.f32 %v6297, %v6337
      %v6339 = vpop.f32.mrb[0].mxu0
      %v6340 = vpop.f32.mrb[0].mxu0
      %6341 = vdwg.mxu0
      %v6342 = vadd.f32 %v6336, %v419
      %v6343 = vadd.f32 %v6338, %v421
      %v6346 = vcombine.low %v6342, %v6343
      %6348 = vst [vmem:[%s413] sm:$0xff] %v6346
      %p6349 = scmp.lt.s32.totalorder %s23, 1
      %s6350 = scalar_select %p6349, %s23, 1
      %s6351 = smul.addr %s6350, 2
      %s6352 = smul.addr %s6351, 4
      %s6353 = scalar_lea.vmem %s12, %s6352
      // Predicated region
      $region69: #{residual_dense_block.1} parent=67 // pred_check
        %p6354 = pneg %p298
      $region70: #{residual_dense_block.1} parent=67 // pred_check_branch
        %6356 = sbr.rel (%p6354) target = $region72
      $region71: #{residual_dense_block.1} parent=67 // pred_region
        _
      $region72: #{residual_dense_block.1} parent=67 // pred_fallthru
        _
    $region68: #{residual_dense_block.1} parent=5 // pred_fallthru
      _
    %p6357 = scmp.le.s32.totalorder 2, %s18
    // Predicated region
    $region73: #{residual_dense_block.1} parent=5 // pred_check
      %p6358 = pneg %p6357
    $region74: #{residual_dense_block.1} parent=5 // pred_check_branch
      %6360 = sbr.rel (%p6358) target = $region76
    $region75: #{residual_dense_block.1} parent=5 // pred_region
      %s6361 = ssub.s32 %s18, 2
      // Predicated region
      $region77: #{residual_dense_block.1} parent=75 // pred_check
        %p6362 = pneg %p304
      $region78: #{residual_dense_block.1} parent=75 // pred_check_branch
        %6364 = sbr.rel (%p6362) target = $region80
      $region79: #{residual_dense_block.1} parent=75 // pred_region
        %p6365 = scmp.lt.s32.totalorder %s24, 1
        %s6366 = scalar_select %p6365, %s24, 1
        %s6367 = smul.addr %s6366, 2
        %s6368 = smul.addr %s6367, 4
        %s6369 = scalar_lea.vmem %s12, %s6368
      $region80: #{residual_dense_block.1} parent=75 // pred_fallthru
        _
    $region76: #{residual_dense_block.1} parent=5 // pred_fallthru
      _
  $region6: #{residual_dense_block.1} parent=0 // loop_footer
    %s22 = sadd.s32 1, %s18
  $region7: #{residual_dense_block.1} parent=0 // loop_footer_branch
    %17 = sbr.rel target = $region3
  $region8: #{residual_dense_block.1} parent=0 // loop_exit
    _

</llo_original>
